<compile_context>
chip_gen: v7x
topology: tpu7x:2x2x1
jax: 0.10.0
libtpu: 0.0.40
codegen_flags: <defaults>
</compile_context>

<pallas_src>
import functools

import jax
import jax.numpy as jnp
from jax import lax
from jax.experimental import pallas as pl
from jax.experimental.pallas import tpu as pltpu

LANE = 128


def _round_up(x, m):
    return (x + m - 1) // m * m


# ----------------------------- Pallas kernels ------------------------------

def _conv_relu_pool_kernel(p_ref, w_ref, b_ref, o_ref, y_scr, *, Ho, Wo):
    """Fused im2col-matmul conv + bias + ReLU + 2x2/2 max-pool for ONE image.

    p_ref: (1, Ho*Wo, Kpad)   im2col patches, row r = conv position (r//Wo, r%Wo)
    w_ref: (Kpad, 128)        weights, Cout zero-padded to 128 lanes
    b_ref: (1, 128)           bias, zero-padded
    o_ref: (1, (Ho//2)*(Wo//2), 128)  pooled output, channels-last, padded
    y_scr: VMEM (2*Wo, 128) f32  scratch holding one pooling row-pair
    """
    Hp, Wp = Ho // 2, Wo // 2
    w = w_ref[...]
    b = b_ref[...]
    for p in range(Hp):  # static unroll over pooling row-pairs
        a = p_ref[0, 2 * p * Wo:2 * (p + 1) * Wo, :]            # (2*Wo, Kpad)
        y = jnp.dot(a, w, preferred_element_type=jnp.float32)   # (2*Wo, 128)
        y_scr[...] = jnp.maximum(y + b, 0.0)
        # 2x2 max-pool: strided sublane reads pick the j-even / j-odd columns
        # of the two adjacent conv rows held in the scratch.
        r00 = y_scr[pl.ds(0, Wp, 2)]
        r01 = y_scr[pl.ds(1, Wp, 2)]
        r10 = y_scr[pl.ds(Wo, Wp, 2)]
        r11 = y_scr[pl.ds(Wo + 1, Wp, 2)]
        o_ref[0, p * Wp:(p + 1) * Wp, :] = jnp.maximum(
            jnp.maximum(r00, r01), jnp.maximum(r10, r11))


def _mlp_kernel(x_ref, w1_ref, b1_ref, w2_ref, b2_ref, w3_ref, b3_ref, o_ref):
    """Fused fc1 -> relu -> fc2 -> relu -> fc3, all dims lane-padded to 128."""
    h = jnp.dot(x_ref[...], w1_ref[...], preferred_element_type=jnp.float32)
    h = jnp.maximum(h + b1_ref[...], 0.0)
    h = jnp.dot(h.astype(w2_ref.dtype), w2_ref[...],
                preferred_element_type=jnp.float32)
    h = jnp.maximum(h + b2_ref[...], 0.0)
    h = jnp.dot(h.astype(w3_ref.dtype), w3_ref[...],
                preferred_element_type=jnp.float32)
    o_ref[...] = h + b3_ref[...]


# ------------------------------ layer wrappers ------------------------------

def _im2col_nhwc(x, K):
    """x: (B,H,W,C) -> (B, Ho*Wo, K*K*C); feature order = (ki, kj, c)."""
    B, H, W, C = x.shape
    Ho, Wo = H - K + 1, W - K + 1
    cols = [x[:, ki:ki + Ho, kj:kj + Wo, :]
            for ki in range(K) for kj in range(K)]
    patches = jnp.concatenate(cols, axis=-1)
    return patches.reshape(B, Ho * Wo, K * K * C), Ho, Wo


def conv_relu_pool_pallas(x_nhwc, w, b, *, compute_dtype=jnp.float32):
    """VALID KxK conv (stride 1) + ReLU + 2x2/2 max-pool.

    x_nhwc: (B,H,W,Cin) real channels only.  w: (Cout,Cin,K,K), b: (Cout,).
    Returns (B, Ho//2, Wo//2, 128) channels-last with Cout zero-padded to 128.
    """
    B, H, W, Cin = x_nhwc.shape
    Cout, _, K, _ = w.shape
    patches, Ho, Wo = _im2col_nhwc(x_nhwc, K)
    assert Ho % 2 == 0 and Wo % 2 == 0, (Ho, Wo)
    Hp, Wp = Ho // 2, Wo // 2

    Kdim = K * K * Cin
    Kpad = _round_up(Kdim, LANE)
    patches = jnp.pad(patches, ((0, 0), (0, 0), (0, Kpad - Kdim)))
    patches = patches.astype(compute_dtype)

    # (Cout,Cin,K,K) -> (K,K,Cin,Cout) to match patch feature order; pad to
    # (Kpad, 128) so the matmul output is lane-dense (unmasked 128-wide store).
    w_mat = jnp.transpose(w, (2, 3, 1, 0)).reshape(Kdim, Cout)
    w_mat = jnp.pad(w_mat, ((0, Kpad - Kdim), (0, LANE - Cout)))
    w_mat = w_mat.astype(compute_dtype)
    b_row = jnp.pad(b.reshape(1, Cout), ((0, 0), (0, LANE - Cout)))
    b_row = b_row.astype(jnp.float32)

    kernel = functools.partial(_conv_relu_pool_kernel, Ho=Ho, Wo=Wo)
    out = pl.pallas_call(
        kernel,
        out_shape=jax.ShapeDtypeStruct((B, Hp * Wp, LANE), jnp.float32),
        grid_spec=pltpu.PrefetchScalarGridSpec(
            num_scalar_prefetch=0,
            grid=(B,),
            in_specs=[
                pl.BlockSpec((1, Ho * Wo, Kpad), lambda i: (i, 0, 0)),
                pl.BlockSpec((Kpad, LANE), lambda i: (0, 0)),
                pl.BlockSpec((1, LANE), lambda i: (0, 0)),
            ],
            out_specs=pl.BlockSpec((1, Hp * Wp, LANE), lambda i: (i, 0, 0)),
            scratch_shapes=[pltpu.VMEM((2 * Wo, LANE), jnp.float32)],
        ),
        compiler_params=pltpu.CompilerParams(
            dimension_semantics=("parallel",)),
    )(patches, w_mat, b_row)
    return out.reshape(B, Hp, Wp, LANE)


def _prep_mlp_weights(p, Hp, Wp, c_real, compute_dtype):
    """Pad/permute fc weights once: fold the channels-last (s,c) -> torch (c,s)
    flatten permutation and the 128-lane channel padding into fc1's matrix;
    pad every in/out dim to multiples of 128 for lane-dense matmuls."""
    n1 = p["fc1_w"].shape[0]                 # 120
    S = Hp * Wp
    w1 = p["fc1_w"].reshape(n1, c_real, S)   # (o, c, s)
    w1 = jnp.transpose(w1, (2, 1, 0))        # (s, c, o)
    w1 = jnp.pad(w1, ((0, 0), (0, LANE - c_real), (0, 0)))   # (s, 128, o)
    n1p = _round_up(n1, LANE)
    w1 = jnp.pad(w1.reshape(S * LANE, n1), ((0, 0), (0, n1p - n1)))
    b1 = jnp.pad(p["fc1_b"].reshape(1, n1), ((0, 0), (0, n1p - n1)))

    n2, k2 = p["fc2_w"].shape                # (84, 120)
    n2p = _round_up(n2, LANE)
    w2 = jnp.pad(p["fc2_w"].T, ((0, n1p - k2), (0, n2p - n2)))
    b2 = jnp.pad(p["fc2_b"].reshape(1, n2), ((0, 0), (0, n2p - n2)))

    n3, k3 = p["fc3_w"].shape                # (num_classes, 84)
    n3p = _round_up(n3, LANE)
    w3 = jnp.pad(p["fc3_w"].T, ((0, n2p - k3), (0, n3p - n3)))
    b3 = jnp.pad(p["fc3_b"].reshape(1, n3), ((0, 0), (0, n3p - n3)))

    return (w1.astype(compute_dtype), b1.astype(jnp.float32),
            w2.astype(compute_dtype), b2.astype(jnp.float32),
            w3.astype(compute_dtype), b3.astype(jnp.float32), n3)


def mlp_head_pallas(x_flat, w1, b1, w2, b2, w3, b3, *,
                    compute_dtype=jnp.float32):
    """x_flat: (B, Kin) with Kin a multiple of 128.  Returns (B, 128)."""
    B, Kin = x_flat.shape
    tb = min(_round_up(B, 8), 128)
    B_pad = _round_up(B, tb)
    x_pad = jnp.pad(x_flat, ((0, B_pad - B), (0, 0))).astype(compute_dtype)

    out = pl.pallas_call(
        _mlp_kernel,
        out_shape=jax.ShapeDtypeStruct((B_pad, LANE), jnp.float32),
        grid_spec=pltpu.PrefetchScalarGridSpec(
            num_scalar_prefetch=0,
            grid=(B_pad // tb,),
            in_specs=[
                pl.BlockSpec((tb, Kin), lambda i: (i, 0)),
                pl.BlockSpec(w1.shape, lambda i: (0, 0)),
                pl.BlockSpec(b1.shape, lambda i: (0, 0)),
                pl.BlockSpec(w2.shape, lambda i: (0, 0)),
                pl.BlockSpec(b2.shape, lambda i: (0, 0)),
                pl.BlockSpec(w3.shape, lambda i: (0, 0)),
                pl.BlockSpec(b3.shape, lambda i: (0, 0)),
            ],
            out_specs=pl.BlockSpec((tb, LANE), lambda i: (i, 0)),
        ),
        compiler_params=pltpu.CompilerParams(
            dimension_semantics=("parallel",)),
    )(x_pad, w1, b1, w2, b2, w3, b3)
    return out[:B]


def cnn_old_forward(x_nchw, p, *, compute_dtype=jnp.float32):
    """Forward pass matching PyTorch CNN_old.  x_nchw: (B, 3, 32, 32)."""
    # NCHW -> NHWC once; all stages keep channels-last, 128-lane-padded
    # activations so every Pallas store is lane-dense.
    x = jnp.transpose(x_nchw, (0, 2, 3, 1)).astype(jnp.float32)

    a1 = conv_relu_pool_pallas(x, p["conv1_w"], p["conv1_b"],
                               compute_dtype=compute_dtype)   # (B,14,14,128)
    a1 = a1[..., :p["conv1_w"].shape[0]]                       # (B,14,14,6)

    a2 = conv_relu_pool_pallas(a1, p["conv2_w"], p["conv2_b"],
                               compute_dtype=compute_dtype)   # (B,5,5,128)
    B, Hp, Wp, _ = a2.shape
    c2 = p["conv2_w"].shape[0]

    w1, b1, w2, b2, w3, b3, ncls = _prep_mlp_weights(p, Hp, Wp, c2,
                                                     compute_dtype)
    # Padded channels feed zero rows of w1, so no unpad/transpose glue needed.
    x_flat = a2.reshape(B, Hp * Wp * LANE)
    logits = mlp_head_pallas(x_flat, w1, b1, w2, b2, w3, b3,
                             compute_dtype=compute_dtype)      # (B, 128)
    return logits[:, :ncls]


# ------------------------------ reference (pure JAX) ------------------------

def reference_forward(x, p):
    def conv(x, w, b):
        y = lax.conv_general_dilated(x, w, (1, 1), "VALID",
                                     dimension_numbers=("NCHW", "OIHW", "NCHW"))
        return jax.nn.relu(y + b.reshape(1, -1, 1, 1))

    def pool(x):
        B, C, H, W = x.shape
        return x.reshape(B, C, H // 2, 2, W // 2, 2).max(axis=(3, 5))

    x = pool(conv(x, p["conv1_w"], p["conv1_b"]))
    x = pool(conv(x, p["conv2_w"], p["conv2_b"]))
    x = x.reshape(x.shape[0], -1)
    x = jax.nn.relu(x @ p["fc1_w"].T + p["fc1_b"])
    x = jax.nn.relu(x @ p["fc2_w"].T + p["fc2_b"])
    return x @ p["fc3_w"].T + p["fc3_b"]


# ------------------------------------ main -----------------------------------

def init_params(key, num_classes=10):
    def uni(key, shape, fan_in):
        bound = 1.0 / jnp.sqrt(float(fan_in))
        return jax.random.uniform(key, shape, jnp.float32, -bound, bound)

    ks = jax.random.split(key, 10)
    return {
        "conv1_w": uni(ks[0], (6, 3, 5, 5), 3 * 5 * 5),
        "conv1_b": uni(ks[1], (6,), 3 * 5 * 5),
        "conv2_w": uni(ks[2], (16, 6, 5, 5), 6 * 5 * 5),
        "conv2_b": uni(ks[3], (16,), 6 * 5 * 5),
        "fc1_w":   uni(ks[4], (120, 400), 400),
        "fc1_b":   uni(ks[5], (120,), 400),
        "fc2_w":   uni(ks[6], (84, 120), 120),
        "fc2_b":   uni(ks[7], (84,), 120),
        "fc3_w":   uni(ks[8], (num_classes, 84), 84),
        "fc3_b":   uni(ks[9], (num_classes,), 84),
    }


if __name__ == "__main__":
    key = jax.random.PRNGKey(0)
    k_x, k_p = jax.random.split(key)
    # Input must be (B, 3, 32, 32) so that flatten gives 16*5*5 = 400 features.
    x = jax.random.normal(k_x, (2, 3, 32, 32), jnp.float32)
    params = init_params(k_p, num_classes=10)

    fwd = jax.jit(cnn_old_forward)
    out = jax.block_until_ready(fwd(x, params))
    ref = jax.block_until_ready(reference_forward(x, params))

    assert out.shape == (2, 10), out.shape
    err = jnp.max(jnp.abs(out - ref))
    assert jnp.allclose(out, ref, rtol=1e-4, atol=1e-4), f"max abs err {err}"
    print("KERNEL_OK")
</pallas_src>

<mosaic_0001>
module attributes {stable_mosaic.version = 11 : i64} {
  func.func @_conv_relu_pool_kernel(%arg0: i32, %arg1: memref<1x784x128xf32, #tpu.memory_space<vmem>>, %arg2: memref<128x128xf32, #tpu.memory_space<vmem>>, %arg3: memref<1x128xf32, #tpu.memory_space<vmem>>, %arg4: memref<1x196x128xf32, #tpu.memory_space<vmem>>, %arg5: memref<56x128xf32, #tpu.memory_space<vmem>>) attributes {dimension_semantics = [#tpu.dimension_semantics<parallel>], iteration_bounds = array<i64: 2>, scalar_prefetch = 0 : i64, scratch_operands = 1 : i64, tpu.core_type = #tpu.core_type<tc>, window_params = [{transform_indices = @transform_0, window_bounds = array<i64: 1, 784, 128>}, {pipeline_mode = #tpu.pipeline_mode<synchronous>, transform_indices = @transform_1, window_bounds = array<i64: 128, 128>}, {pipeline_mode = #tpu.pipeline_mode<synchronous>, transform_indices = @transform_2, window_bounds = array<i64: 1, 128>}, {transform_indices = @transform_3, window_bounds = array<i64: 1, 196, 128>}]} {
    %c0 = arith.constant 0 : index
    %c0_0 = arith.constant 0 : index
    %0 = vector.load %arg2[%c0, %c0_0] : memref<128x128xf32, #tpu.memory_space<vmem>>, vector<128x128xf32>
    %c0_1 = arith.constant 0 : index
    %c0_2 = arith.constant 0 : index
    %1 = vector.load %arg3[%c0_1, %c0_2] : memref<1x128xf32, #tpu.memory_space<vmem>>, vector<1x128xf32>
    %c0_3 = arith.constant 0 : index
    %c0_4 = arith.constant 0 : index
    %c0_5 = arith.constant 0 : index
    %2 = vector.load %arg1[%c0_3, %c0_4, %c0_5] : memref<1x784x128xf32, #tpu.memory_space<vmem>>, vector<1x56x128xf32>
    %3 = vector.shape_cast %2 : vector<1x56x128xf32> to vector<56x128xf32>
    %cst = arith.constant dense<0.000000e+00> : vector<56x128xf32>
    %4 = tpu.matmul %3, %0, %cst {dimension_numbers = #tpu.dot_dimension_numbers<[1], [0], [0], [1], [0, 0, 1, 1], [], []>} : vector<56x128xf32>, vector<128x128xf32>, vector<56x128xf32> -> vector<56x128xf32>
    %5 = vector.broadcast %1 : vector<1x128xf32> to vector<56x128xf32>
    %6 = arith.addf %4, %5 : vector<56x128xf32>
    %cst_6 = arith.constant 0.000000e+00 : f32
    %7 = vector.broadcast %cst_6 : f32 to vector<56x128xf32>
    %8 = arith.maximumf %6, %7 : vector<56x128xf32>
    %c0_7 = arith.constant 0 : index
    %c0_8 = arith.constant 0 : index
    %9 = vector.load %arg5[%c0_7, %c0_8] : memref<56x128xf32, #tpu.memory_space<vmem>>, vector<56x128xf32>
    tpu.vector_store %arg5[%c0_7, %c0_8], %8 {strides = array<i32>} : memref<56x128xf32, #tpu.memory_space<vmem>>, vector<56x128xf32>,
    %c0_9 = arith.constant 0 : index
    %c0_10 = arith.constant 0 : index
    %10 = tpu.strided_load %arg5[%c0_9, %c0_10] {strides = array<i32: 2, 1>} : memref<56x128xf32, #tpu.memory_space<vmem>>, vector<14x128xf32>
    %c1 = arith.constant 1 : index
    %c0_11 = arith.constant 0 : index
    %11 = tpu.strided_load %arg5[%c1, %c0_11] {strides = array<i32: 2, 1>} : memref<56x128xf32, #tpu.memory_space<vmem>>, vector<14x128xf32>
    %c28 = arith.constant 28 : index
    %c0_12 = arith.constant 0 : index
    %12 = tpu.strided_load %arg5[%c28, %c0_12] {strides = array<i32: 2, 1>} : memref<56x128xf32, #tpu.memory_space<vmem>>, vector<14x128xf32>
    %c29 = arith.constant 29 : index
    %c0_13 = arith.constant 0 : index
    %13 = tpu.strided_load %arg5[%c29, %c0_13] {strides = array<i32: 2, 1>} : memref<56x128xf32, #tpu.memory_space<vmem>>, vector<14x128xf32>
    %14 = arith.maximumf %10, %11 : vector<14x128xf32>
    %15 = arith.maximumf %12, %13 : vector<14x128xf32>
    %16 = arith.maximumf %14, %15 : vector<14x128xf32>
    %c0_14 = arith.constant 0 : index
    %c0_15 = arith.constant 0 : index
    %c0_16 = arith.constant 0 : index
    %17 = vector.load %arg4[%c0_14, %c0_15, %c0_16] : memref<1x196x128xf32, #tpu.memory_space<vmem>>, vector<1x14x128xf32>
    %18 = vector.shape_cast %17 : vector<1x14x128xf32> to vector<14x128xf32>
    %19 = vector.shape_cast %16 : vector<14x128xf32> to vector<1x14x128xf32>
    tpu.vector_store %arg4[%c0_14, %c0_15, %c0_16], %19 {strides = array<i32>} : memref<1x196x128xf32, #tpu.memory_space<vmem>>, vector<1x14x128xf32>,
    %c0_17 = arith.constant 0 : index
    %c56 = arith.constant 56 : index
    %c0_18 = arith.constant 0 : index
    %20 = vector.load %arg1[%c0_17, %c56, %c0_18] : memref<1x784x128xf32, #tpu.memory_space<vmem>>, vector<1x56x128xf32>
    %21 = vector.shape_cast %20 : vector<1x56x128xf32> to vector<56x128xf32>
    %cst_19 = arith.constant dense<0.000000e+00> : vector<56x128xf32>
    %22 = tpu.matmul %21, %0, %cst_19 {dimension_numbers = #tpu.dot_dimension_numbers<[1], [0], [0], [1], [0, 0, 1, 1], [], []>} : vector<56x128xf32>, vector<128x128xf32>, vector<56x128xf32> -> vector<56x128xf32>
    %23 = vector.broadcast %1 : vector<1x128xf32> to vector<56x128xf32>
    %24 = arith.addf %22, %23 : vector<56x128xf32>
    %cst_20 = arith.constant 0.000000e+00 : f32
    %25 = vector.broadcast %cst_20 : f32 to vector<56x128xf32>
    %26 = arith.maximumf %24, %25 : vector<56x128xf32>
    %c0_21 = arith.constant 0 : index
    %c0_22 = arith.constant 0 : index
    %27 = vector.load %arg5[%c0_21, %c0_22] : memref<56x128xf32, #tpu.memory_space<vmem>>, vector<56x128xf32>
    tpu.vector_store %arg5[%c0_21, %c0_22], %26 {strides = array<i32>} : memref<56x128xf32, #tpu.memory_space<vmem>>, vector<56x128xf32>,
    %c0_23 = arith.constant 0 : index
    %c0_24 = arith.constant 0 : index
    %28 = tpu.strided_load %arg5[%c0_23, %c0_24] {strides = array<i32: 2, 1>} : memref<56x128xf32, #tpu.memory_space<vmem>>, vector<14x128xf32>
    %c1_25 = arith.constant 1 : index
    %c0_26 = arith.constant 0 : index
    %29 = tpu.strided_load %arg5[%c1_25, %c0_26] {strides = array<i32: 2, 1>} : memref<56x128xf32, #tpu.memory_space<vmem>>, vector<14x128xf32>
    %c28_27 = arith.constant 28 : index
    %c0_28 = arith.constant 0 : index
    %30 = tpu.strided_load %arg5[%c28_27, %c0_28] {strides = array<i32: 2, 1>} : memref<56x128xf32, #tpu.memory_space<vmem>>, vector<14x128xf32>
    %c29_29 = arith.constant 29 : index
    %c0_30 = arith.constant 0 : index
    %31 = tpu.strided_load %arg5[%c29_29, %c0_30] {strides = array<i32: 2, 1>} : memref<56x128xf32, #tpu.memory_space<vmem>>, vector<14x128xf32>
    %32 = arith.maximumf %28, %29 : vector<14x128xf32>
    %33 = arith.maximumf %30, %31 : vector<14x128xf32>
    %34 = arith.maximumf %32, %33 : vector<14x128xf32>
    %c0_31 = arith.constant 0 : index
    %c14 = arith.constant 14 : index
    %c0_32 = arith.constant 0 : index
    %35 = vector.load %arg4[%c0_31, %c14, %c0_32] : memref<1x196x128xf32, #tpu.memory_space<vmem>>, vector<1x14x128xf32>
    %36 = vector.shape_cast %35 : vector<1x14x128xf32> to vector<14x128xf32>
    %37 = vector.shape_cast %34 : vector<14x128xf32> to vector<1x14x128xf32>
    tpu.vector_store %arg4[%c0_31, %c14, %c0_32], %37 {strides = array<i32>} : memref<1x196x128xf32, #tpu.memory_space<vmem>>, vector<1x14x128xf32>,
    %c0_33 = arith.constant 0 : index
    %c112 = arith.constant 112 : index
    %c0_34 = arith.constant 0 : index
    %38 = vector.load %arg1[%c0_33, %c112, %c0_34] : memref<1x784x128xf32, #tpu.memory_space<vmem>>, vector<1x56x128xf32>
    %39 = vector.shape_cast %38 : vector<1x56x128xf32> to vector<56x128xf32>
    %cst_35 = arith.constant dense<0.000000e+00> : vector<56x128xf32>
    %40 = tpu.matmul %39, %0, %cst_35 {dimension_numbers = #tpu.dot_dimension_numbers<[1], [0], [0], [1], [0, 0, 1, 1], [], []>} : vector<56x128xf32>, vector<128x128xf32>, vector<56x128xf32> -> vector<56x128xf32>
    %41 = vector.broadcast %1 : vector<1x128xf32> to vector<56x128xf32>
    %42 = arith.addf %40, %41 : vector<56x128xf32>
    %cst_36 = arith.constant 0.000000e+00 : f32
    %43 = vector.broadcast %cst_36 : f32 to vector<56x128xf32>
    %44 = arith.maximumf %42, %43 : vector<56x128xf32>
    %c0_37 = arith.constant 0 : index
    %c0_38 = arith.constant 0 : index
    %45 = vector.load %arg5[%c0_37, %c0_38] : memref<56x128xf32, #tpu.memory_space<vmem>>, vector<56x128xf32>
    tpu.vector_store %arg5[%c0_37, %c0_38], %44 {strides = array<i32>} : memref<56x128xf32, #tpu.memory_space<vmem>>, vector<56x128xf32>,
    %c0_39 = arith.constant 0 : index
    %c0_40 = arith.constant 0 : index
    %46 = tpu.strided_load %arg5[%c0_39, %c0_40] {strides = array<i32: 2, 1>} : memref<56x128xf32, #tpu.memory_space<vmem>>, vector<14x128xf32>
    %c1_41 = arith.constant 1 : index
    %c0_42 = arith.constant 0 : index
    %47 = tpu.strided_load %arg5[%c1_41, %c0_42] {strides = array<i32: 2, 1>} : memref<56x128xf32, #tpu.memory_space<vmem>>, vector<14x128xf32>
    %c28_43 = arith.constant 28 : index
    %c0_44 = arith.constant 0 : index
    %48 = tpu.strided_load %arg5[%c28_43, %c0_44] {strides = array<i32: 2, 1>} : memref<56x128xf32, #tpu.memory_space<vmem>>, vector<14x128xf32>
    %c29_45 = arith.constant 29 : index
    %c0_46 = arith.constant 0 : index
    %49 = tpu.strided_load %arg5[%c29_45, %c0_46] {strides = array<i32: 2, 1>} : memref<56x128xf32, #tpu.memory_space<vmem>>, vector<14x128xf32>
    %50 = arith.maximumf %46, %47 : vector<14x128xf32>
    %51 = arith.maximumf %48, %49 : vector<14x128xf32>
    %52 = arith.maximumf %50, %51 : vector<14x128xf32>
    %c0_47 = arith.constant 0 : index
    %c28_48 = arith.constant 28 : index
    %c0_49 = arith.constant 0 : index
    %53 = vector.load %arg4[%c0_47, %c28_48, %c0_49] : memref<1x196x128xf32, #tpu.memory_space<vmem>>, vector<1x14x128xf32>
    %54 = vector.shape_cast %53 : vector<1x14x128xf32> to vector<14x128xf32>
    %55 = vector.shape_cast %52 : vector<14x128xf32> to vector<1x14x128xf32>
    tpu.vector_store %arg4[%c0_47, %c28_48, %c0_49], %55 {strides = array<i32>} : memref<1x196x128xf32, #tpu.memory_space<vmem>>, vector<1x14x128xf32>,
    %c0_50 = arith.constant 0 : index
    %c168 = arith.constant 168 : index
    %c0_51 = arith.constant 0 : index
    %56 = vector.load %arg1[%c0_50, %c168, %c0_51] : memref<1x784x128xf32, #tpu.memory_space<vmem>>, vector<1x56x128xf32>
    %57 = vector.shape_cast %56 : vector<1x56x128xf32> to vector<56x128xf32>
    %cst_52 = arith.constant dense<0.000000e+00> : vector<56x128xf32>
    %58 = tpu.matmul %57, %0, %cst_52 {dimension_numbers = #tpu.dot_dimension_numbers<[1], [0], [0], [1], [0, 0, 1, 1], [], []>} : vector<56x128xf32>, vector<128x128xf32>, vector<56x128xf32> -> vector<56x128xf32>
    %59 = vector.broadcast %1 : vector<1x128xf32> to vector<56x128xf32>
    %60 = arith.addf %58, %59 : vector<56x128xf32>
    %cst_53 = arith.constant 0.000000e+00 : f32
    %61 = vector.broadcast %cst_53 : f32 to vector<56x128xf32>
    %62 = arith.maximumf %60, %61 : vector<56x128xf32>
    %c0_54 = arith.constant 0 : index
    %c0_55 = arith.constant 0 : index
    %63 = vector.load %arg5[%c0_54, %c0_55] : memref<56x128xf32, #tpu.memory_space<vmem>>, vector<56x128xf32>
    tpu.vector_store %arg5[%c0_54, %c0_55], %62 {strides = array<i32>} : memref<56x128xf32, #tpu.memory_space<vmem>>, vector<56x128xf32>,
    %c0_56 = arith.constant 0 : index
    %c0_57 = arith.constant 0 : index
    %64 = tpu.strided_load %arg5[%c0_56, %c0_57] {strides = array<i32: 2, 1>} : memref<56x128xf32, #tpu.memory_space<vmem>>, vector<14x128xf32>
    %c1_58 = arith.constant 1 : index
    %c0_59 = arith.constant 0 : index
    %65 = tpu.strided_load %arg5[%c1_58, %c0_59] {strides = array<i32: 2, 1>} : memref<56x128xf32, #tpu.memory_space<vmem>>, vector<14x128xf32>
    %c28_60 = arith.constant 28 : index
    %c0_61 = arith.constant 0 : index
    %66 = tpu.strided_load %arg5[%c28_60, %c0_61] {strides = array<i32: 2, 1>} : memref<56x128xf32, #tpu.memory_space<vmem>>, vector<14x128xf32>
    %c29_62 = arith.constant 29 : index
    %c0_63 = arith.constant 0 : index
    %67 = tpu.strided_load %arg5[%c29_62, %c0_63] {strides = array<i32: 2, 1>} : memref<56x128xf32, #tpu.memory_space<vmem>>, vector<14x128xf32>
    %68 = arith.maximumf %64, %65 : vector<14x128xf32>
    %69 = arith.maximumf %66, %67 : vector<14x128xf32>
    %70 = arith.maximumf %68, %69 : vector<14x128xf32>
    %c0_64 = arith.constant 0 : index
    %c42 = arith.constant 42 : index
    %c0_65 = arith.constant 0 : index
    %71 = vector.load %arg4[%c0_64, %c42, %c0_65] : memref<1x196x128xf32, #tpu.memory_space<vmem>>, vector<1x14x128xf32>
    %72 = vector.shape_cast %71 : vector<1x14x128xf32> to vector<14x128xf32>
    %73 = vector.shape_cast %70 : vector<14x128xf32> to vector<1x14x128xf32>
    tpu.vector_store %arg4[%c0_64, %c42, %c0_65], %73 {strides = array<i32>} : memref<1x196x128xf32, #tpu.memory_space<vmem>>, vector<1x14x128xf32>,
    %c0_66 = arith.constant 0 : index
    %c224 = arith.constant 224 : index
    %c0_67 = arith.constant 0 : index
    %74 = vector.load %arg1[%c0_66, %c224, %c0_67] : memref<1x784x128xf32, #tpu.memory_space<vmem>>, vector<1x56x128xf32>
    %75 = vector.shape_cast %74 : vector<1x56x128xf32> to vector<56x128xf32>
    %cst_68 = arith.constant dense<0.000000e+00> : vector<56x128xf32>
    %76 = tpu.matmul %75, %0, %cst_68 {dimension_numbers = #tpu.dot_dimension_numbers<[1], [0], [0], [1], [0, 0, 1, 1], [], []>} : vector<56x128xf32>, vector<128x128xf32>, vector<56x128xf32> -> vector<56x128xf32>
    %77 = vector.broadcast %1 : vector<1x128xf32> to vector<56x128xf32>
    %78 = arith.addf %76, %77 : vector<56x128xf32>
    %cst_69 = arith.constant 0.000000e+00 : f32
    %79 = vector.broadcast %cst_69 : f32 to vector<56x128xf32>
    %80 = arith.maximumf %78, %79 : vector<56x128xf32>
    %c0_70 = arith.constant 0 : index
    %c0_71 = arith.constant 0 : index
    %81 = vector.load %arg5[%c0_70, %c0_71] : memref<56x128xf32, #tpu.memory_space<vmem>>, vector<56x128xf32>
    tpu.vector_store %arg5[%c0_70, %c0_71], %80 {strides = array<i32>} : memref<56x128xf32, #tpu.memory_space<vmem>>, vector<56x128xf32>,
    %c0_72 = arith.constant 0 : index
    %c0_73 = arith.constant 0 : index
    %82 = tpu.strided_load %arg5[%c0_72, %c0_73] {strides = array<i32: 2, 1>} : memref<56x128xf32, #tpu.memory_space<vmem>>, vector<14x128xf32>
    %c1_74 = arith.constant 1 : index
    %c0_75 = arith.constant 0 : index
    %83 = tpu.strided_load %arg5[%c1_74, %c0_75] {strides = array<i32: 2, 1>} : memref<56x128xf32, #tpu.memory_space<vmem>>, vector<14x128xf32>
    %c28_76 = arith.constant 28 : index
    %c0_77 = arith.constant 0 : index
    %84 = tpu.strided_load %arg5[%c28_76, %c0_77] {strides = array<i32: 2, 1>} : memref<56x128xf32, #tpu.memory_space<vmem>>, vector<14x128xf32>
    %c29_78 = arith.constant 29 : index
    %c0_79 = arith.constant 0 : index
    %85 = tpu.strided_load %arg5[%c29_78, %c0_79] {strides = array<i32: 2, 1>} : memref<56x128xf32, #tpu.memory_space<vmem>>, vector<14x128xf32>
    %86 = arith.maximumf %82, %83 : vector<14x128xf32>
    %87 = arith.maximumf %84, %85 : vector<14x128xf32>
    %88 = arith.maximumf %86, %87 : vector<14x128xf32>
    %c0_80 = arith.constant 0 : index
    %c56_81 = arith.constant 56 : index
    %c0_82 = arith.constant 0 : index
    %89 = vector.load %arg4[%c0_80, %c56_81, %c0_82] : memref<1x196x128xf32, #tpu.memory_space<vmem>>, vector<1x14x128xf32>
    %90 = vector.shape_cast %89 : vector<1x14x128xf32> to vector<14x128xf32>
    %91 = vector.shape_cast %88 : vector<14x128xf32> to vector<1x14x128xf32>
    tpu.vector_store %arg4[%c0_80, %c56_81, %c0_82], %91 {strides = array<i32>} : memref<1x196x128xf32, #tpu.memory_space<vmem>>, vector<1x14x128xf32>,
    %c0_83 = arith.constant 0 : index
    %c280 = arith.constant 280 : index
    %c0_84 = arith.constant 0 : index
    %92 = vector.load %arg1[%c0_83, %c280, %c0_84] : memref<1x784x128xf32, #tpu.memory_space<vmem>>, vector<1x56x128xf32>
    %93 = vector.shape_cast %92 : vector<1x56x128xf32> to vector<56x128xf32>
    %cst_85 = arith.constant dense<0.000000e+00> : vector<56x128xf32>
    %94 = tpu.matmul %93, %0, %cst_85 {dimension_numbers = #tpu.dot_dimension_numbers<[1], [0], [0], [1], [0, 0, 1, 1], [], []>} : vector<56x128xf32>, vector<128x128xf32>, vector<56x128xf32> -> vector<56x128xf32>
    %95 = vector.broadcast %1 : vector<1x128xf32> to vector<56x128xf32>
    %96 = arith.addf %94, %95 : vector<56x128xf32>
    %cst_86 = arith.constant 0.000000e+00 : f32
    %97 = vector.broadcast %cst_86 : f32 to vector<56x128xf32>
    %98 = arith.maximumf %96, %97 : vector<56x128xf32>
    %c0_87 = arith.constant 0 : index
    %c0_88 = arith.constant 0 : index
    %99 = vector.load %arg5[%c0_87, %c0_88] : memref<56x128xf32, #tpu.memory_space<vmem>>, vector<56x128xf32>
    tpu.vector_store %arg5[%c0_87, %c0_88], %98 {strides = array<i32>} : memref<56x128xf32, #tpu.memory_space<vmem>>, vector<56x128xf32>,
    %c0_89 = arith.constant 0 : index
    %c0_90 = arith.constant 0 : index
    %100 = tpu.strided_load %arg5[%c0_89, %c0_90] {strides = array<i32: 2, 1>} : memref<56x128xf32, #tpu.memory_space<vmem>>, vector<14x128xf32>
    %c1_91 = arith.constant 1 : index
    %c0_92 = arith.constant 0 : index
    %101 = tpu.strided_load %arg5[%c1_91, %c0_92] {strides = array<i32: 2, 1>} : memref<56x128xf32, #tpu.memory_space<vmem>>, vector<14x128xf32>
    %c28_93 = arith.constant 28 : index
    %c0_94 = arith.constant 0 : index
    %102 = tpu.strided_load %arg5[%c28_93, %c0_94] {strides = array<i32: 2, 1>} : memref<56x128xf32, #tpu.memory_space<vmem>>, vector<14x128xf32>
    %c29_95 = arith.constant 29 : index
    %c0_96 = arith.constant 0 : index
    %103 = tpu.strided_load %arg5[%c29_95, %c0_96] {strides = array<i32: 2, 1>} : memref<56x128xf32, #tpu.memory_space<vmem>>, vector<14x128xf32>
    %104 = arith.maximumf %100, %101 : vector<14x128xf32>
    %105 = arith.maximumf %102, %103 : vector<14x128xf32>
    %106 = arith.maximumf %104, %105 : vector<14x128xf32>
    %c0_97 = arith.constant 0 : index
    %c70 = arith.constant 70 : index
    %c0_98 = arith.constant 0 : index
    %107 = vector.load %arg4[%c0_97, %c70, %c0_98] : memref<1x196x128xf32, #tpu.memory_space<vmem>>, vector<1x14x128xf32>
    %108 = vector.shape_cast %107 : vector<1x14x128xf32> to vector<14x128xf32>
    %109 = vector.shape_cast %106 : vector<14x128xf32> to vector<1x14x128xf32>
    tpu.vector_store %arg4[%c0_97, %c70, %c0_98], %109 {strides = array<i32>} : memref<1x196x128xf32, #tpu.memory_space<vmem>>, vector<1x14x128xf32>,
    %c0_99 = arith.constant 0 : index
    %c336 = arith.constant 336 : index
    %c0_100 = arith.constant 0 : index
    %110 = vector.load %arg1[%c0_99, %c336, %c0_100] : memref<1x784x128xf32, #tpu.memory_space<vmem>>, vector<1x56x128xf32>
    %111 = vector.shape_cast %110 : vector<1x56x128xf32> to vector<56x128xf32>
    %cst_101 = arith.constant dense<0.000000e+00> : vector<56x128xf32>
    %112 = tpu.matmul %111, %0, %cst_101 {dimension_numbers = #tpu.dot_dimension_numbers<[1], [0], [0], [1], [0, 0, 1, 1], [], []>} : vector<56x128xf32>, vector<128x128xf32>, vector<56x128xf32> -> vector<56x128xf32>
    %113 = vector.broadcast %1 : vector<1x128xf32> to vector<56x128xf32>
    %114 = arith.addf %112, %113 : vector<56x128xf32>
    %cst_102 = arith.constant 0.000000e+00 : f32
    %115 = vector.broadcast %cst_102 : f32 to vector<56x128xf32>
    %116 = arith.maximumf %114, %115 : vector<56x128xf32>
    %c0_103 = arith.constant 0 : index
    %c0_104 = arith.constant 0 : index
    %117 = vector.load %arg5[%c0_103, %c0_104] : memref<56x128xf32, #tpu.memory_space<vmem>>, vector<56x128xf32>
    tpu.vector_store %arg5[%c0_103, %c0_104], %116 {strides = array<i32>} : memref<56x128xf32, #tpu.memory_space<vmem>>, vector<56x128xf32>,
    %c0_105 = arith.constant 0 : index
    %c0_106 = arith.constant 0 : index
    %118 = tpu.strided_load %arg5[%c0_105, %c0_106] {strides = array<i32: 2, 1>} : memref<56x128xf32, #tpu.memory_space<vmem>>, vector<14x128xf32>
    %c1_107 = arith.constant 1 : index
    %c0_108 = arith.constant 0 : index
    %119 = tpu.strided_load %arg5[%c1_107, %c0_108] {strides = array<i32: 2, 1>} : memref<56x128xf32, #tpu.memory_space<vmem>>, vector<14x128xf32>
    %c28_109 = arith.constant 28 : index
    %c0_110 = arith.constant 0 : index
    %120 = tpu.strided_load %arg5[%c28_109, %c0_110] {strides = array<i32: 2, 1>} : memref<56x128xf32, #tpu.memory_space<vmem>>, vector<14x128xf32>
    %c29_111 = arith.constant 29 : index
    %c0_112 = arith.constant 0 : index
    %121 = tpu.strided_load %arg5[%c29_111, %c0_112] {strides = array<i32: 2, 1>} : memref<56x128xf32, #tpu.memory_space<vmem>>, vector<14x128xf32>
    %122 = arith.maximumf %118, %119 : vector<14x128xf32>
    %123 = arith.maximumf %120, %121 : vector<14x128xf32>
    %124 = arith.maximumf %122, %123 : vector<14x128xf32>
    %c0_113 = arith.constant 0 : index
    %c84 = arith.constant 84 : index
    %c0_114 = arith.constant 0 : index
    %125 = vector.load %arg4[%c0_113, %c84, %c0_114] : memref<1x196x128xf32, #tpu.memory_space<vmem>>, vector<1x14x128xf32>
    %126 = vector.shape_cast %125 : vector<1x14x128xf32> to vector<14x128xf32>
    %127 = vector.shape_cast %124 : vector<14x128xf32> to vector<1x14x128xf32>
    tpu.vector_store %arg4[%c0_113, %c84, %c0_114], %127 {strides = array<i32>} : memref<1x196x128xf32, #tpu.memory_space<vmem>>, vector<1x14x128xf32>,
    %c0_115 = arith.constant 0 : index
    %c392 = arith.constant 392 : index
    %c0_116 = arith.constant 0 : index
    %128 = vector.load %arg1[%c0_115, %c392, %c0_116] : memref<1x784x128xf32, #tpu.memory_space<vmem>>, vector<1x56x128xf32>
    %129 = vector.shape_cast %128 : vector<1x56x128xf32> to vector<56x128xf32>
    %cst_117 = arith.constant dense<0.000000e+00> : vector<56x128xf32>
    %130 = tpu.matmul %129, %0, %cst_117 {dimension_numbers = #tpu.dot_dimension_numbers<[1], [0], [0], [1], [0, 0, 1, 1], [], []>} : vector<56x128xf32>, vector<128x128xf32>, vector<56x128xf32> -> vector<56x128xf32>
    %131 = vector.broadcast %1 : vector<1x128xf32> to vector<56x128xf32>
    %132 = arith.addf %130, %131 : vector<56x128xf32>
    %cst_118 = arith.constant 0.000000e+00 : f32
    %133 = vector.broadcast %cst_118 : f32 to vector<56x128xf32>
    %134 = arith.maximumf %132, %133 : vector<56x128xf32>
    %c0_119 = arith.constant 0 : index
    %c0_120 = arith.constant 0 : index
    %135 = vector.load %arg5[%c0_119, %c0_120] : memref<56x128xf32, #tpu.memory_space<vmem>>, vector<56x128xf32>
    tpu.vector_store %arg5[%c0_119, %c0_120], %134 {strides = array<i32>} : memref<56x128xf32, #tpu.memory_space<vmem>>, vector<56x128xf32>,
    %c0_121 = arith.constant 0 : index
    %c0_122 = arith.constant 0 : index
    %136 = tpu.strided_load %arg5[%c0_121, %c0_122] {strides = array<i32: 2, 1>} : memref<56x128xf32, #tpu.memory_space<vmem>>, vector<14x128xf32>
    %c1_123 = arith.constant 1 : index
    %c0_124 = arith.constant 0 : index
    %137 = tpu.strided_load %arg5[%c1_123, %c0_124] {strides = array<i32: 2, 1>} : memref<56x128xf32, #tpu.memory_space<vmem>>, vector<14x128xf32>
    %c28_125 = arith.constant 28 : index
    %c0_126 = arith.constant 0 : index
    %138 = tpu.strided_load %arg5[%c28_125, %c0_126] {strides = array<i32: 2, 1>} : memref<56x128xf32, #tpu.memory_space<vmem>>, vector<14x128xf32>
    %c29_127 = arith.constant 29 : index
    %c0_128 = arith.constant 0 : index
    %139 = tpu.strided_load %arg5[%c29_127, %c0_128] {strides = array<i32: 2, 1>} : memref<56x128xf32, #tpu.memory_space<vmem>>, vector<14x128xf32>
    %140 = arith.maximumf %136, %137 : vector<14x128xf32>
    %141 = arith.maximumf %138, %139 : vector<14x128xf32>
    %142 = arith.maximumf %140, %141 : vector<14x128xf32>
    %c0_129 = arith.constant 0 : index
    %c98 = arith.constant 98 : index
    %c0_130 = arith.constant 0 : index
    %143 = vector.load %arg4[%c0_129, %c98, %c0_130] : memref<1x196x128xf32, #tpu.memory_space<vmem>>, vector<1x14x128xf32>
    %144 = vector.shape_cast %143 : vector<1x14x128xf32> to vector<14x128xf32>
    %145 = vector.shape_cast %142 : vector<14x128xf32> to vector<1x14x128xf32>
    tpu.vector_store %arg4[%c0_129, %c98, %c0_130], %145 {strides = array<i32>} : memref<1x196x128xf32, #tpu.memory_space<vmem>>, vector<1x14x128xf32>,
    %c0_131 = arith.constant 0 : index
    %c448 = arith.constant 448 : index
    %c0_132 = arith.constant 0 : index
    %146 = vector.load %arg1[%c0_131, %c448, %c0_132] : memref<1x784x128xf32, #tpu.memory_space<vmem>>, vector<1x56x128xf32>
    %147 = vector.shape_cast %146 : vector<1x56x128xf32> to vector<56x128xf32>
    %cst_133 = arith.constant dense<0.000000e+00> : vector<56x128xf32>
    %148 = tpu.matmul %147, %0, %cst_133 {dimension_numbers = #tpu.dot_dimension_numbers<[1], [0], [0], [1], [0, 0, 1, 1], [], []>} : vector<56x128xf32>, vector<128x128xf32>, vector<56x128xf32> -> vector<56x128xf32>
    %149 = vector.broadcast %1 : vector<1x128xf32> to vector<56x128xf32>
    %150 = arith.addf %148, %149 : vector<56x128xf32>
    %cst_134 = arith.constant 0.000000e+00 : f32
    %151 = vector.broadcast %cst_134 : f32 to vector<56x128xf32>
    %152 = arith.maximumf %150, %151 : vector<56x128xf32>
    %c0_135 = arith.constant 0 : index
    %c0_136 = arith.constant 0 : index
    %153 = vector.load %arg5[%c0_135, %c0_136] : memref<56x128xf32, #tpu.memory_space<vmem>>, vector<56x128xf32>
    tpu.vector_store %arg5[%c0_135, %c0_136], %152 {strides = array<i32>} : memref<56x128xf32, #tpu.memory_space<vmem>>, vector<56x128xf32>,
    %c0_137 = arith.constant 0 : index
    %c0_138 = arith.constant 0 : index
    %154 = tpu.strided_load %arg5[%c0_137, %c0_138] {strides = array<i32: 2, 1>} : memref<56x128xf32, #tpu.memory_space<vmem>>, vector<14x128xf32>
    %c1_139 = arith.constant 1 : index
    %c0_140 = arith.constant 0 : index
    %155 = tpu.strided_load %arg5[%c1_139, %c0_140] {strides = array<i32: 2, 1>} : memref<56x128xf32, #tpu.memory_space<vmem>>, vector<14x128xf32>
    %c28_141 = arith.constant 28 : index
    %c0_142 = arith.constant 0 : index
    %156 = tpu.strided_load %arg5[%c28_141, %c0_142] {strides = array<i32: 2, 1>} : memref<56x128xf32, #tpu.memory_space<vmem>>, vector<14x128xf32>
    %c29_143 = arith.constant 29 : index
    %c0_144 = arith.constant 0 : index
    %157 = tpu.strided_load %arg5[%c29_143, %c0_144] {strides = array<i32: 2, 1>} : memref<56x128xf32, #tpu.memory_space<vmem>>, vector<14x128xf32>
    %158 = arith.maximumf %154, %155 : vector<14x128xf32>
    %159 = arith.maximumf %156, %157 : vector<14x128xf32>
    %160 = arith.maximumf %158, %159 : vector<14x128xf32>
    %c0_145 = arith.constant 0 : index
    %c112_146 = arith.constant 112 : index
    %c0_147 = arith.constant 0 : index
    %161 = vector.load %arg4[%c0_145, %c112_146, %c0_147] : memref<1x196x128xf32, #tpu.memory_space<vmem>>, vector<1x14x128xf32>
    %162 = vector.shape_cast %161 : vector<1x14x128xf32> to vector<14x128xf32>
    %163 = vector.shape_cast %160 : vector<14x128xf32> to vector<1x14x128xf32>
    tpu.vector_store %arg4[%c0_145, %c112_146, %c0_147], %163 {strides = array<i32>} : memref<1x196x128xf32, #tpu.memory_space<vmem>>, vector<1x14x128xf32>,
    %c0_148 = arith.constant 0 : index
    %c504 = arith.constant 504 : index
    %c0_149 = arith.constant 0 : index
    %164 = vector.load %arg1[%c0_148, %c504, %c0_149] : memref<1x784x128xf32, #tpu.memory_space<vmem>>, vector<1x56x128xf32>
    %165 = vector.shape_cast %164 : vector<1x56x128xf32> to vector<56x128xf32>
    %cst_150 = arith.constant dense<0.000000e+00> : vector<56x128xf32>
    %166 = tpu.matmul %165, %0, %cst_150 {dimension_numbers = #tpu.dot_dimension_numbers<[1], [0], [0], [1], [0, 0, 1, 1], [], []>} : vector<56x128xf32>, vector<128x128xf32>, vector<56x128xf32> -> vector<56x128xf32>
    %167 = vector.broadcast %1 : vector<1x128xf32> to vector<56x128xf32>
    %168 = arith.addf %166, %167 : vector<56x128xf32>
    %cst_151 = arith.constant 0.000000e+00 : f32
    %169 = vector.broadcast %cst_151 : f32 to vector<56x128xf32>
    %170 = arith.maximumf %168, %169 : vector<56x128xf32>
    %c0_152 = arith.constant 0 : index
    %c0_153 = arith.constant 0 : index
    %171 = vector.load %arg5[%c0_152, %c0_153] : memref<56x128xf32, #tpu.memory_space<vmem>>, vector<56x128xf32>
    tpu.vector_store %arg5[%c0_152, %c0_153], %170 {strides = array<i32>} : memref<56x128xf32, #tpu.memory_space<vmem>>, vector<56x128xf32>,
    %c0_154 = arith.constant 0 : index
    %c0_155 = arith.constant 0 : index
    %172 = tpu.strided_load %arg5[%c0_154, %c0_155] {strides = array<i32: 2, 1>} : memref<56x128xf32, #tpu.memory_space<vmem>>, vector<14x128xf32>
    %c1_156 = arith.constant 1 : index
    %c0_157 = arith.constant 0 : index
    %173 = tpu.strided_load %arg5[%c1_156, %c0_157] {strides = array<i32: 2, 1>} : memref<56x128xf32, #tpu.memory_space<vmem>>, vector<14x128xf32>
    %c28_158 = arith.constant 28 : index
    %c0_159 = arith.constant 0 : index
    %174 = tpu.strided_load %arg5[%c28_158, %c0_159] {strides = array<i32: 2, 1>} : memref<56x128xf32, #tpu.memory_space<vmem>>, vector<14x128xf32>
    %c29_160 = arith.constant 29 : index
    %c0_161 = arith.constant 0 : index
    %175 = tpu.strided_load %arg5[%c29_160, %c0_161] {strides = array<i32: 2, 1>} : memref<56x128xf32, #tpu.memory_space<vmem>>, vector<14x128xf32>
    %176 = arith.maximumf %172, %173 : vector<14x128xf32>
    %177 = arith.maximumf %174, %175 : vector<14x128xf32>
    %178 = arith.maximumf %176, %177 : vector<14x128xf32>
    %c0_162 = arith.constant 0 : index
    %c126 = arith.constant 126 : index
    %c0_163 = arith.constant 0 : index
    %179 = vector.load %arg4[%c0_162, %c126, %c0_163] : memref<1x196x128xf32, #tpu.memory_space<vmem>>, vector<1x14x128xf32>
    %180 = vector.shape_cast %179 : vector<1x14x128xf32> to vector<14x128xf32>
    %181 = vector.shape_cast %178 : vector<14x128xf32> to vector<1x14x128xf32>
    tpu.vector_store %arg4[%c0_162, %c126, %c0_163], %181 {strides = array<i32>} : memref<1x196x128xf32, #tpu.memory_space<vmem>>, vector<1x14x128xf32>,
    %c0_164 = arith.constant 0 : index
    %c560 = arith.constant 560 : index
    %c0_165 = arith.constant 0 : index
    %182 = vector.load %arg1[%c0_164, %c560, %c0_165] : memref<1x784x128xf32, #tpu.memory_space<vmem>>, vector<1x56x128xf32>
    %183 = vector.shape_cast %182 : vector<1x56x128xf32> to vector<56x128xf32>
    %cst_166 = arith.constant dense<0.000000e+00> : vector<56x128xf32>
    %184 = tpu.matmul %183, %0, %cst_166 {dimension_numbers = #tpu.dot_dimension_numbers<[1], [0], [0], [1], [0, 0, 1, 1], [], []>} : vector<56x128xf32>, vector<128x128xf32>, vector<56x128xf32> -> vector<56x128xf32>
    %185 = vector.broadcast %1 : vector<1x128xf32> to vector<56x128xf32>
    %186 = arith.addf %184, %185 : vector<56x128xf32>
    %cst_167 = arith.constant 0.000000e+00 : f32
    %187 = vector.broadcast %cst_167 : f32 to vector<56x128xf32>
    %188 = arith.maximumf %186, %187 : vector<56x128xf32>
    %c0_168 = arith.constant 0 : index
    %c0_169 = arith.constant 0 : index
    %189 = vector.load %arg5[%c0_168, %c0_169] : memref<56x128xf32, #tpu.memory_space<vmem>>, vector<56x128xf32>
    tpu.vector_store %arg5[%c0_168, %c0_169], %188 {strides = array<i32>} : memref<56x128xf32, #tpu.memory_space<vmem>>, vector<56x128xf32>,
    %c0_170 = arith.constant 0 : index
    %c0_171 = arith.constant 0 : index
    %190 = tpu.strided_load %arg5[%c0_170, %c0_171] {strides = array<i32: 2, 1>} : memref<56x128xf32, #tpu.memory_space<vmem>>, vector<14x128xf32>
    %c1_172 = arith.constant 1 : index
    %c0_173 = arith.constant 0 : index
    %191 = tpu.strided_load %arg5[%c1_172, %c0_173] {strides = array<i32: 2, 1>} : memref<56x128xf32, #tpu.memory_space<vmem>>, vector<14x128xf32>
    %c28_174 = arith.constant 28 : index
    %c0_175 = arith.constant 0 : index
    %192 = tpu.strided_load %arg5[%c28_174, %c0_175] {strides = array<i32: 2, 1>} : memref<56x128xf32, #tpu.memory_space<vmem>>, vector<14x128xf32>
    %c29_176 = arith.constant 29 : index
    %c0_177 = arith.constant 0 : index
    %193 = tpu.strided_load %arg5[%c29_176, %c0_177] {strides = array<i32: 2, 1>} : memref<56x128xf32, #tpu.memory_space<vmem>>, vector<14x128xf32>
    %194 = arith.maximumf %190, %191 : vector<14x128xf32>
    %195 = arith.maximumf %192, %193 : vector<14x128xf32>
    %196 = arith.maximumf %194, %195 : vector<14x128xf32>
    %c0_178 = arith.constant 0 : index
    %c140 = arith.constant 140 : index
    %c0_179 = arith.constant 0 : index
    %197 = vector.load %arg4[%c0_178, %c140, %c0_179] : memref<1x196x128xf32, #tpu.memory_space<vmem>>, vector<1x14x128xf32>
    %198 = vector.shape_cast %197 : vector<1x14x128xf32> to vector<14x128xf32>
    %199 = vector.shape_cast %196 : vector<14x128xf32> to vector<1x14x128xf32>
    tpu.vector_store %arg4[%c0_178, %c140, %c0_179], %199 {strides = array<i32>} : memref<1x196x128xf32, #tpu.memory_space<vmem>>, vector<1x14x128xf32>,
    %c0_180 = arith.constant 0 : index
    %c616 = arith.constant 616 : index
    %c0_181 = arith.constant 0 : index
    %200 = vector.load %arg1[%c0_180, %c616, %c0_181] : memref<1x784x128xf32, #tpu.memory_space<vmem>>, vector<1x56x128xf32>
    %201 = vector.shape_cast %200 : vector<1x56x128xf32> to vector<56x128xf32>
    %cst_182 = arith.constant dense<0.000000e+00> : vector<56x128xf32>
    %202 = tpu.matmul %201, %0, %cst_182 {dimension_numbers = #tpu.dot_dimension_numbers<[1], [0], [0], [1], [0, 0, 1, 1], [], []>} : vector<56x128xf32>, vector<128x128xf32>, vector<56x128xf32> -> vector<56x128xf32>
    %203 = vector.broadcast %1 : vector<1x128xf32> to vector<56x128xf32>
    %204 = arith.addf %202, %203 : vector<56x128xf32>
    %cst_183 = arith.constant 0.000000e+00 : f32
    %205 = vector.broadcast %cst_183 : f32 to vector<56x128xf32>
    %206 = arith.maximumf %204, %205 : vector<56x128xf32>
    %c0_184 = arith.constant 0 : index
    %c0_185 = arith.constant 0 : index
    %207 = vector.load %arg5[%c0_184, %c0_185] : memref<56x128xf32, #tpu.memory_space<vmem>>, vector<56x128xf32>
    tpu.vector_store %arg5[%c0_184, %c0_185], %206 {strides = array<i32>} : memref<56x128xf32, #tpu.memory_space<vmem>>, vector<56x128xf32>,
    %c0_186 = arith.constant 0 : index
    %c0_187 = arith.constant 0 : index
    %208 = tpu.strided_load %arg5[%c0_186, %c0_187] {strides = array<i32: 2, 1>} : memref<56x128xf32, #tpu.memory_space<vmem>>, vector<14x128xf32>
    %c1_188 = arith.constant 1 : index
    %c0_189 = arith.constant 0 : index
    %209 = tpu.strided_load %arg5[%c1_188, %c0_189] {strides = array<i32: 2, 1>} : memref<56x128xf32, #tpu.memory_space<vmem>>, vector<14x128xf32>
    %c28_190 = arith.constant 28 : index
    %c0_191 = arith.constant 0 : index
    %210 = tpu.strided_load %arg5[%c28_190, %c0_191] {strides = array<i32: 2, 1>} : memref<56x128xf32, #tpu.memory_space<vmem>>, vector<14x128xf32>
    %c29_192 = arith.constant 29 : index
    %c0_193 = arith.constant 0 : index
    %211 = tpu.strided_load %arg5[%c29_192, %c0_193] {strides = array<i32: 2, 1>} : memref<56x128xf32, #tpu.memory_space<vmem>>, vector<14x128xf32>
    %212 = arith.maximumf %208, %209 : vector<14x128xf32>
    %213 = arith.maximumf %210, %211 : vector<14x128xf32>
    %214 = arith.maximumf %212, %213 : vector<14x128xf32>
    %c0_194 = arith.constant 0 : index
    %c154 = arith.constant 154 : index
    %c0_195 = arith.constant 0 : index
    %215 = vector.load %arg4[%c0_194, %c154, %c0_195] : memref<1x196x128xf32, #tpu.memory_space<vmem>>, vector<1x14x128xf32>
    %216 = vector.shape_cast %215 : vector<1x14x128xf32> to vector<14x128xf32>
    %217 = vector.shape_cast %214 : vector<14x128xf32> to vector<1x14x128xf32>
    tpu.vector_store %arg4[%c0_194, %c154, %c0_195], %217 {strides = array<i32>} : memref<1x196x128xf32, #tpu.memory_space<vmem>>, vector<1x14x128xf32>,
    %c0_196 = arith.constant 0 : index
    %c672 = arith.constant 672 : index
    %c0_197 = arith.constant 0 : index
    %218 = vector.load %arg1[%c0_196, %c672, %c0_197] : memref<1x784x128xf32, #tpu.memory_space<vmem>>, vector<1x56x128xf32>
    %219 = vector.shape_cast %218 : vector<1x56x128xf32> to vector<56x128xf32>
    %cst_198 = arith.constant dense<0.000000e+00> : vector<56x128xf32>
    %220 = tpu.matmul %219, %0, %cst_198 {dimension_numbers = #tpu.dot_dimension_numbers<[1], [0], [0], [1], [0, 0, 1, 1], [], []>} : vector<56x128xf32>, vector<128x128xf32>, vector<56x128xf32> -> vector<56x128xf32>
    %221 = vector.broadcast %1 : vector<1x128xf32> to vector<56x128xf32>
    %222 = arith.addf %220, %221 : vector<56x128xf32>
    %cst_199 = arith.constant 0.000000e+00 : f32
    %223 = vector.broadcast %cst_199 : f32 to vector<56x128xf32>
    %224 = arith.maximumf %222, %223 : vector<56x128xf32>
    %c0_200 = arith.constant 0 : index
    %c0_201 = arith.constant 0 : index
    %225 = vector.load %arg5[%c0_200, %c0_201] : memref<56x128xf32, #tpu.memory_space<vmem>>, vector<56x128xf32>
    tpu.vector_store %arg5[%c0_200, %c0_201], %224 {strides = array<i32>} : memref<56x128xf32, #tpu.memory_space<vmem>>, vector<56x128xf32>,
    %c0_202 = arith.constant 0 : index
    %c0_203 = arith.constant 0 : index
    %226 = tpu.strided_load %arg5[%c0_202, %c0_203] {strides = array<i32: 2, 1>} : memref<56x128xf32, #tpu.memory_space<vmem>>, vector<14x128xf32>
    %c1_204 = arith.constant 1 : index
    %c0_205 = arith.constant 0 : index
    %227 = tpu.strided_load %arg5[%c1_204, %c0_205] {strides = array<i32: 2, 1>} : memref<56x128xf32, #tpu.memory_space<vmem>>, vector<14x128xf32>
    %c28_206 = arith.constant 28 : index
    %c0_207 = arith.constant 0 : index
    %228 = tpu.strided_load %arg5[%c28_206, %c0_207] {strides = array<i32: 2, 1>} : memref<56x128xf32, #tpu.memory_space<vmem>>, vector<14x128xf32>
    %c29_208 = arith.constant 29 : index
    %c0_209 = arith.constant 0 : index
    %229 = tpu.strided_load %arg5[%c29_208, %c0_209] {strides = array<i32: 2, 1>} : memref<56x128xf32, #tpu.memory_space<vmem>>, vector<14x128xf32>
    %230 = arith.maximumf %226, %227 : vector<14x128xf32>
    %231 = arith.maximumf %228, %229 : vector<14x128xf32>
    %232 = arith.maximumf %230, %231 : vector<14x128xf32>
    %c0_210 = arith.constant 0 : index
    %c168_211 = arith.constant 168 : index
    %c0_212 = arith.constant 0 : index
    %233 = vector.load %arg4[%c0_210, %c168_211, %c0_212] : memref<1x196x128xf32, #tpu.memory_space<vmem>>, vector<1x14x128xf32>
    %234 = vector.shape_cast %233 : vector<1x14x128xf32> to vector<14x128xf32>
    %235 = vector.shape_cast %232 : vector<14x128xf32> to vector<1x14x128xf32>
    tpu.vector_store %arg4[%c0_210, %c168_211, %c0_212], %235 {strides = array<i32>} : memref<1x196x128xf32, #tpu.memory_space<vmem>>, vector<1x14x128xf32>,
    %c0_213 = arith.constant 0 : index
    %c728 = arith.constant 728 : index
    %c0_214 = arith.constant 0 : index
    %236 = vector.load %arg1[%c0_213, %c728, %c0_214] : memref<1x784x128xf32, #tpu.memory_space<vmem>>, vector<1x56x128xf32>
    %237 = vector.shape_cast %236 : vector<1x56x128xf32> to vector<56x128xf32>
    %cst_215 = arith.constant dense<0.000000e+00> : vector<56x128xf32>
    %238 = tpu.matmul %237, %0, %cst_215 {dimension_numbers = #tpu.dot_dimension_numbers<[1], [0], [0], [1], [0, 0, 1, 1], [], []>} : vector<56x128xf32>, vector<128x128xf32>, vector<56x128xf32> -> vector<56x128xf32>
    %239 = vector.broadcast %1 : vector<1x128xf32> to vector<56x128xf32>
    %240 = arith.addf %238, %239 : vector<56x128xf32>
    %cst_216 = arith.constant 0.000000e+00 : f32
    %241 = vector.broadcast %cst_216 : f32 to vector<56x128xf32>
    %242 = arith.maximumf %240, %241 : vector<56x128xf32>
    %c0_217 = arith.constant 0 : index
    %c0_218 = arith.constant 0 : index
    %243 = vector.load %arg5[%c0_217, %c0_218] : memref<56x128xf32, #tpu.memory_space<vmem>>, vector<56x128xf32>
    tpu.vector_store %arg5[%c0_217, %c0_218], %242 {strides = array<i32>} : memref<56x128xf32, #tpu.memory_space<vmem>>, vector<56x128xf32>,
    %c0_219 = arith.constant 0 : index
    %c0_220 = arith.constant 0 : index
    %244 = tpu.strided_load %arg5[%c0_219, %c0_220] {strides = array<i32: 2, 1>} : memref<56x128xf32, #tpu.memory_space<vmem>>, vector<14x128xf32>
    %c1_221 = arith.constant 1 : index
    %c0_222 = arith.constant 0 : index
    %245 = tpu.strided_load %arg5[%c1_221, %c0_222] {strides = array<i32: 2, 1>} : memref<56x128xf32, #tpu.memory_space<vmem>>, vector<14x128xf32>
    %c28_223 = arith.constant 28 : index
    %c0_224 = arith.constant 0 : index
    %246 = tpu.strided_load %arg5[%c28_223, %c0_224] {strides = array<i32: 2, 1>} : memref<56x128xf32, #tpu.memory_space<vmem>>, vector<14x128xf32>
    %c29_225 = arith.constant 29 : index
    %c0_226 = arith.constant 0 : index
    %247 = tpu.strided_load %arg5[%c29_225, %c0_226] {strides = array<i32: 2, 1>} : memref<56x128xf32, #tpu.memory_space<vmem>>, vector<14x128xf32>
    %248 = arith.maximumf %244, %245 : vector<14x128xf32>
    %249 = arith.maximumf %246, %247 : vector<14x128xf32>
    %250 = arith.maximumf %248, %249 : vector<14x128xf32>
    %c0_227 = arith.constant 0 : index
    %c182 = arith.constant 182 : index
    %c0_228 = arith.constant 0 : index
    %251 = vector.load %arg4[%c0_227, %c182, %c0_228] : memref<1x196x128xf32, #tpu.memory_space<vmem>>, vector<1x14x128xf32>
    %252 = vector.shape_cast %251 : vector<1x14x128xf32> to vector<14x128xf32>
    %253 = vector.shape_cast %250 : vector<14x128xf32> to vector<1x14x128xf32>
    tpu.vector_store %arg4[%c0_227, %c182, %c0_228], %253 {strides = array<i32>} : memref<1x196x128xf32, #tpu.memory_space<vmem>>, vector<1x14x128xf32>,
    return
  }
  func.func @transform_0(%arg0: i32) -> (i32, i32, i32) {
    %c0_i32 = arith.constant 0 : i32
    %c0_i32_0 = arith.constant 0 : i32
    %c0_i32_1 = arith.constant 0 : i32
    return %arg0, %c0_i32, %c0_i32_0 : i32, i32, i32
  }
  func.func @transform_1(%arg0: i32) -> (i32, i32) {
    %c0_i32 = arith.constant 0 : i32
    %c0_i32_0 = arith.constant 0 : i32
    %c0_i32_1 = arith.constant 0 : i32
    return %c0_i32, %c0_i32_0 : i32, i32
  }
  func.func @transform_2(%arg0: i32) -> (i32, i32) {
    %c0_i32 = arith.constant 0 : i32
    %c0_i32_0 = arith.constant 0 : i32
    %c0_i32_1 = arith.constant 0 : i32
    return %c0_i32, %c0_i32_0 : i32, i32
  }
  func.func @transform_3(%arg0: i32) -> (i32, i32, i32) {
    %c0_i32 = arith.constant 0 : i32
    %c0_i32_0 = arith.constant 0 : i32
    %c0_i32_1 = arith.constant 0 : i32
    return %arg0, %c0_i32, %c0_i32_0 : i32, i32, i32
  }
}

module attributes {stable_mosaic.version = 11 : i64} {
  func.func @_conv_relu_pool_kernel(%arg0: i32, %arg1: memref<1x100x256xf32, #tpu.memory_space<vmem>>, %arg2: memref<256x128xf32, #tpu.memory_space<vmem>>, %arg3: memref<1x128xf32, #tpu.memory_space<vmem>>, %arg4: memref<1x25x128xf32, #tpu.memory_space<vmem>>, %arg5: memref<20x128xf32, #tpu.memory_space<vmem>>) attributes {dimension_semantics = [#tpu.dimension_semantics<parallel>], iteration_bounds = array<i64: 2>, scalar_prefetch = 0 : i64, scratch_operands = 1 : i64, tpu.core_type = #tpu.core_type<tc>, window_params = [{transform_indices = @transform_0, window_bounds = array<i64: 1, 100, 256>}, {pipeline_mode = #tpu.pipeline_mode<synchronous>, transform_indices = @transform_1, window_bounds = array<i64: 256, 128>}, {pipeline_mode = #tpu.pipeline_mode<synchronous>, transform_indices = @transform_2, window_bounds = array<i64: 1, 128>}, {transform_indices = @transform_3, window_bounds = array<i64: 1, 25, 128>}]} {
    %c0 = arith.constant 0 : index
    %c0_0 = arith.constant 0 : index
    %0 = vector.load %arg2[%c0, %c0_0] : memref<256x128xf32, #tpu.memory_space<vmem>>, vector<256x128xf32>
    %c0_1 = arith.constant 0 : index
    %c0_2 = arith.constant 0 : index
    %1 = vector.load %arg3[%c0_1, %c0_2] : memref<1x128xf32, #tpu.memory_space<vmem>>, vector<1x128xf32>
    %c0_3 = arith.constant 0 : index
    %c0_4 = arith.constant 0 : index
    %c0_5 = arith.constant 0 : index
    %2 = vector.load %arg1[%c0_3, %c0_4, %c0_5] : memref<1x100x256xf32, #tpu.memory_space<vmem>>, vector<1x20x256xf32>
    %3 = vector.shape_cast %2 : vector<1x20x256xf32> to vector<20x256xf32>
    %cst = arith.constant dense<0.000000e+00> : vector<20x128xf32>
    %4 = tpu.matmul %3, %0, %cst {dimension_numbers = #tpu.dot_dimension_numbers<[1], [0], [0], [1], [0, 0, 1, 1], [], []>} : vector<20x256xf32>, vector<256x128xf32>, vector<20x128xf32> -> vector<20x128xf32>
    %5 = vector.broadcast %1 : vector<1x128xf32> to vector<20x128xf32>
    %6 = arith.addf %4, %5 : vector<20x128xf32>
    %cst_6 = arith.constant 0.000000e+00 : f32
    %7 = vector.broadcast %cst_6 : f32 to vector<20x128xf32>
    %8 = arith.maximumf %6, %7 : vector<20x128xf32>
    %c0_7 = arith.constant 0 : index
    %c0_8 = arith.constant 0 : index
    %9 = vector.load %arg5[%c0_7, %c0_8] : memref<20x128xf32, #tpu.memory_space<vmem>>, vector<20x128xf32>
    tpu.vector_store %arg5[%c0_7, %c0_8], %8 {strides = array<i32>} : memref<20x128xf32, #tpu.memory_space<vmem>>, vector<20x128xf32>,
    %c0_9 = arith.constant 0 : index
    %c0_10 = arith.constant 0 : index
    %10 = tpu.strided_load %arg5[%c0_9, %c0_10] {strides = array<i32: 2, 1>} : memref<20x128xf32, #tpu.memory_space<vmem>>, vector<5x128xf32>
    %c1 = arith.constant 1 : index
    %c0_11 = arith.constant 0 : index
    %11 = tpu.strided_load %arg5[%c1, %c0_11] {strides = array<i32: 2, 1>} : memref<20x128xf32, #tpu.memory_space<vmem>>, vector<5x128xf32>
    %c10 = arith.constant 10 : index
    %c0_12 = arith.constant 0 : index
    %12 = tpu.strided_load %arg5[%c10, %c0_12] {strides = array<i32: 2, 1>} : memref<20x128xf32, #tpu.memory_space<vmem>>, vector<5x128xf32>
    %c11 = arith.constant 11 : index
    %c0_13 = arith.constant 0 : index
    %13 = tpu.strided_load %arg5[%c11, %c0_13] {strides = array<i32: 2, 1>} : memref<20x128xf32, #tpu.memory_space<vmem>>, vector<5x128xf32>
    %14 = arith.maximumf %10, %11 : vector<5x128xf32>
    %15 = arith.maximumf %12, %13 : vector<5x128xf32>
    %16 = arith.maximumf %14, %15 : vector<5x128xf32>
    %c0_14 = arith.constant 0 : index
    %c0_15 = arith.constant 0 : index
    %c0_16 = arith.constant 0 : index
    %17 = vector.load %arg4[%c0_14, %c0_15, %c0_16] : memref<1x25x128xf32, #tpu.memory_space<vmem>>, vector<1x5x128xf32>
    %18 = vector.shape_cast %17 : vector<1x5x128xf32> to vector<5x128xf32>
    %19 = vector.shape_cast %16 : vector<5x128xf32> to vector<1x5x128xf32>
    tpu.vector_store %arg4[%c0_14, %c0_15, %c0_16], %19 {strides = array<i32>} : memref<1x25x128xf32, #tpu.memory_space<vmem>>, vector<1x5x128xf32>,
    %c0_17 = arith.constant 0 : index
    %c20 = arith.constant 20 : index
    %c0_18 = arith.constant 0 : index
    %20 = vector.load %arg1[%c0_17, %c20, %c0_18] : memref<1x100x256xf32, #tpu.memory_space<vmem>>, vector<1x20x256xf32>
    %21 = vector.shape_cast %20 : vector<1x20x256xf32> to vector<20x256xf32>
    %cst_19 = arith.constant dense<0.000000e+00> : vector<20x128xf32>
    %22 = tpu.matmul %21, %0, %cst_19 {dimension_numbers = #tpu.dot_dimension_numbers<[1], [0], [0], [1], [0, 0, 1, 1], [], []>} : vector<20x256xf32>, vector<256x128xf32>, vector<20x128xf32> -> vector<20x128xf32>
    %23 = vector.broadcast %1 : vector<1x128xf32> to vector<20x128xf32>
    %24 = arith.addf %22, %23 : vector<20x128xf32>
    %cst_20 = arith.constant 0.000000e+00 : f32
    %25 = vector.broadcast %cst_20 : f32 to vector<20x128xf32>
    %26 = arith.maximumf %24, %25 : vector<20x128xf32>
    %c0_21 = arith.constant 0 : index
    %c0_22 = arith.constant 0 : index
    %27 = vector.load %arg5[%c0_21, %c0_22] : memref<20x128xf32, #tpu.memory_space<vmem>>, vector<20x128xf32>
    tpu.vector_store %arg5[%c0_21, %c0_22], %26 {strides = array<i32>} : memref<20x128xf32, #tpu.memory_space<vmem>>, vector<20x128xf32>,
    %c0_23 = arith.constant 0 : index
    %c0_24 = arith.constant 0 : index
    %28 = tpu.strided_load %arg5[%c0_23, %c0_24] {strides = array<i32: 2, 1>} : memref<20x128xf32, #tpu.memory_space<vmem>>, vector<5x128xf32>
    %c1_25 = arith.constant 1 : index
    %c0_26 = arith.constant 0 : index
    %29 = tpu.strided_load %arg5[%c1_25, %c0_26] {strides = array<i32: 2, 1>} : memref<20x128xf32, #tpu.memory_space<vmem>>, vector<5x128xf32>
    %c10_27 = arith.constant 10 : index
    %c0_28 = arith.constant 0 : index
    %30 = tpu.strided_load %arg5[%c10_27, %c0_28] {strides = array<i32: 2, 1>} : memref<20x128xf32, #tpu.memory_space<vmem>>, vector<5x128xf32>
    %c11_29 = arith.constant 11 : index
    %c0_30 = arith.constant 0 : index
    %31 = tpu.strided_load %arg5[%c11_29, %c0_30] {strides = array<i32: 2, 1>} : memref<20x128xf32, #tpu.memory_space<vmem>>, vector<5x128xf32>
    %32 = arith.maximumf %28, %29 : vector<5x128xf32>
    %33 = arith.maximumf %30, %31 : vector<5x128xf32>
    %34 = arith.maximumf %32, %33 : vector<5x128xf32>
    %c0_31 = arith.constant 0 : index
    %c5 = arith.constant 5 : index
    %c0_32 = arith.constant 0 : index
    %35 = vector.load %arg4[%c0_31, %c5, %c0_32] : memref<1x25x128xf32, #tpu.memory_space<vmem>>, vector<1x5x128xf32>
    %36 = vector.shape_cast %35 : vector<1x5x128xf32> to vector<5x128xf32>
    %37 = vector.shape_cast %34 : vector<5x128xf32> to vector<1x5x128xf32>
    tpu.vector_store %arg4[%c0_31, %c5, %c0_32], %37 {strides = array<i32>} : memref<1x25x128xf32, #tpu.memory_space<vmem>>, vector<1x5x128xf32>,
    %c0_33 = arith.constant 0 : index
    %c40 = arith.constant 40 : index
    %c0_34 = arith.constant 0 : index
    %38 = vector.load %arg1[%c0_33, %c40, %c0_34] : memref<1x100x256xf32, #tpu.memory_space<vmem>>, vector<1x20x256xf32>
    %39 = vector.shape_cast %38 : vector<1x20x256xf32> to vector<20x256xf32>
    %cst_35 = arith.constant dense<0.000000e+00> : vector<20x128xf32>
    %40 = tpu.matmul %39, %0, %cst_35 {dimension_numbers = #tpu.dot_dimension_numbers<[1], [0], [0], [1], [0, 0, 1, 1], [], []>} : vector<20x256xf32>, vector<256x128xf32>, vector<20x128xf32> -> vector<20x128xf32>
    %41 = vector.broadcast %1 : vector<1x128xf32> to vector<20x128xf32>
    %42 = arith.addf %40, %41 : vector<20x128xf32>
    %cst_36 = arith.constant 0.000000e+00 : f32
    %43 = vector.broadcast %cst_36 : f32 to vector<20x128xf32>
    %44 = arith.maximumf %42, %43 : vector<20x128xf32>
    %c0_37 = arith.constant 0 : index
    %c0_38 = arith.constant 0 : index
    %45 = vector.load %arg5[%c0_37, %c0_38] : memref<20x128xf32, #tpu.memory_space<vmem>>, vector<20x128xf32>
    tpu.vector_store %arg5[%c0_37, %c0_38], %44 {strides = array<i32>} : memref<20x128xf32, #tpu.memory_space<vmem>>, vector<20x128xf32>,
    %c0_39 = arith.constant 0 : index
    %c0_40 = arith.constant 0 : index
    %46 = tpu.strided_load %arg5[%c0_39, %c0_40] {strides = array<i32: 2, 1>} : memref<20x128xf32, #tpu.memory_space<vmem>>, vector<5x128xf32>
    %c1_41 = arith.constant 1 : index
    %c0_42 = arith.constant 0 : index
    %47 = tpu.strided_load %arg5[%c1_41, %c0_42] {strides = array<i32: 2, 1>} : memref<20x128xf32, #tpu.memory_space<vmem>>, vector<5x128xf32>
    %c10_43 = arith.constant 10 : index
    %c0_44 = arith.constant 0 : index
    %48 = tpu.strided_load %arg5[%c10_43, %c0_44] {strides = array<i32: 2, 1>} : memref<20x128xf32, #tpu.memory_space<vmem>>, vector<5x128xf32>
    %c11_45 = arith.constant 11 : index
    %c0_46 = arith.constant 0 : index
    %49 = tpu.strided_load %arg5[%c11_45, %c0_46] {strides = array<i32: 2, 1>} : memref<20x128xf32, #tpu.memory_space<vmem>>, vector<5x128xf32>
    %50 = arith.maximumf %46, %47 : vector<5x128xf32>
    %51 = arith.maximumf %48, %49 : vector<5x128xf32>
    %52 = arith.maximumf %50, %51 : vector<5x128xf32>
    %c0_47 = arith.constant 0 : index
    %c10_48 = arith.constant 10 : index
    %c0_49 = arith.constant 0 : index
    %53 = vector.load %arg4[%c0_47, %c10_48, %c0_49] : memref<1x25x128xf32, #tpu.memory_space<vmem>>, vector<1x5x128xf32>
    %54 = vector.shape_cast %53 : vector<1x5x128xf32> to vector<5x128xf32>
    %55 = vector.shape_cast %52 : vector<5x128xf32> to vector<1x5x128xf32>
    tpu.vector_store %arg4[%c0_47, %c10_48, %c0_49], %55 {strides = array<i32>} : memref<1x25x128xf32, #tpu.memory_space<vmem>>, vector<1x5x128xf32>,
    %c0_50 = arith.constant 0 : index
    %c60 = arith.constant 60 : index
    %c0_51 = arith.constant 0 : index
    %56 = vector.load %arg1[%c0_50, %c60, %c0_51] : memref<1x100x256xf32, #tpu.memory_space<vmem>>, vector<1x20x256xf32>
    %57 = vector.shape_cast %56 : vector<1x20x256xf32> to vector<20x256xf32>
    %cst_52 = arith.constant dense<0.000000e+00> : vector<20x128xf32>
    %58 = tpu.matmul %57, %0, %cst_52 {dimension_numbers = #tpu.dot_dimension_numbers<[1], [0], [0], [1], [0, 0, 1, 1], [], []>} : vector<20x256xf32>, vector<256x128xf32>, vector<20x128xf32> -> vector<20x128xf32>
    %59 = vector.broadcast %1 : vector<1x128xf32> to vector<20x128xf32>
    %60 = arith.addf %58, %59 : vector<20x128xf32>
    %cst_53 = arith.constant 0.000000e+00 : f32
    %61 = vector.broadcast %cst_53 : f32 to vector<20x128xf32>
    %62 = arith.maximumf %60, %61 : vector<20x128xf32>
    %c0_54 = arith.constant 0 : index
    %c0_55 = arith.constant 0 : index
    %63 = vector.load %arg5[%c0_54, %c0_55] : memref<20x128xf32, #tpu.memory_space<vmem>>, vector<20x128xf32>
    tpu.vector_store %arg5[%c0_54, %c0_55], %62 {strides = array<i32>} : memref<20x128xf32, #tpu.memory_space<vmem>>, vector<20x128xf32>,
    %c0_56 = arith.constant 0 : index
    %c0_57 = arith.constant 0 : index
    %64 = tpu.strided_load %arg5[%c0_56, %c0_57] {strides = array<i32: 2, 1>} : memref<20x128xf32, #tpu.memory_space<vmem>>, vector<5x128xf32>
    %c1_58 = arith.constant 1 : index
    %c0_59 = arith.constant 0 : index
    %65 = tpu.strided_load %arg5[%c1_58, %c0_59] {strides = array<i32: 2, 1>} : memref<20x128xf32, #tpu.memory_space<vmem>>, vector<5x128xf32>
    %c10_60 = arith.constant 10 : index
    %c0_61 = arith.constant 0 : index
    %66 = tpu.strided_load %arg5[%c10_60, %c0_61] {strides = array<i32: 2, 1>} : memref<20x128xf32, #tpu.memory_space<vmem>>, vector<5x128xf32>
    %c11_62 = arith.constant 11 : index
    %c0_63 = arith.constant 0 : index
    %67 = tpu.strided_load %arg5[%c11_62, %c0_63] {strides = array<i32: 2, 1>} : memref<20x128xf32, #tpu.memory_space<vmem>>, vector<5x128xf32>
    %68 = arith.maximumf %64, %65 : vector<5x128xf32>
    %69 = arith.maximumf %66, %67 : vector<5x128xf32>
    %70 = arith.maximumf %68, %69 : vector<5x128xf32>
    %c0_64 = arith.constant 0 : index
    %c15 = arith.constant 15 : index
    %c0_65 = arith.constant 0 : index
    %71 = vector.load %arg4[%c0_64, %c15, %c0_65] : memref<1x25x128xf32, #tpu.memory_space<vmem>>, vector<1x5x128xf32>
    %72 = vector.shape_cast %71 : vector<1x5x128xf32> to vector<5x128xf32>
    %73 = vector.shape_cast %70 : vector<5x128xf32> to vector<1x5x128xf32>
    tpu.vector_store %arg4[%c0_64, %c15, %c0_65], %73 {strides = array<i32>} : memref<1x25x128xf32, #tpu.memory_space<vmem>>, vector<1x5x128xf32>,
    %c0_66 = arith.constant 0 : index
    %c80 = arith.constant 80 : index
    %c0_67 = arith.constant 0 : index
    %74 = vector.load %arg1[%c0_66, %c80, %c0_67] : memref<1x100x256xf32, #tpu.memory_space<vmem>>, vector<1x20x256xf32>
    %75 = vector.shape_cast %74 : vector<1x20x256xf32> to vector<20x256xf32>
    %cst_68 = arith.constant dense<0.000000e+00> : vector<20x128xf32>
    %76 = tpu.matmul %75, %0, %cst_68 {dimension_numbers = #tpu.dot_dimension_numbers<[1], [0], [0], [1], [0, 0, 1, 1], [], []>} : vector<20x256xf32>, vector<256x128xf32>, vector<20x128xf32> -> vector<20x128xf32>
    %77 = vector.broadcast %1 : vector<1x128xf32> to vector<20x128xf32>
    %78 = arith.addf %76, %77 : vector<20x128xf32>
    %cst_69 = arith.constant 0.000000e+00 : f32
    %79 = vector.broadcast %cst_69 : f32 to vector<20x128xf32>
    %80 = arith.maximumf %78, %79 : vector<20x128xf32>
    %c0_70 = arith.constant 0 : index
    %c0_71 = arith.constant 0 : index
    %81 = vector.load %arg5[%c0_70, %c0_71] : memref<20x128xf32, #tpu.memory_space<vmem>>, vector<20x128xf32>
    tpu.vector_store %arg5[%c0_70, %c0_71], %80 {strides = array<i32>} : memref<20x128xf32, #tpu.memory_space<vmem>>, vector<20x128xf32>,
    %c0_72 = arith.constant 0 : index
    %c0_73 = arith.constant 0 : index
    %82 = tpu.strided_load %arg5[%c0_72, %c0_73] {strides = array<i32: 2, 1>} : memref<20x128xf32, #tpu.memory_space<vmem>>, vector<5x128xf32>
    %c1_74 = arith.constant 1 : index
    %c0_75 = arith.constant 0 : index
    %83 = tpu.strided_load %arg5[%c1_74, %c0_75] {strides = array<i32: 2, 1>} : memref<20x128xf32, #tpu.memory_space<vmem>>, vector<5x128xf32>
    %c10_76 = arith.constant 10 : index
    %c0_77 = arith.constant 0 : index
    %84 = tpu.strided_load %arg5[%c10_76, %c0_77] {strides = array<i32: 2, 1>} : memref<20x128xf32, #tpu.memory_space<vmem>>, vector<5x128xf32>
    %c11_78 = arith.constant 11 : index
    %c0_79 = arith.constant 0 : index
    %85 = tpu.strided_load %arg5[%c11_78, %c0_79] {strides = array<i32: 2, 1>} : memref<20x128xf32, #tpu.memory_space<vmem>>, vector<5x128xf32>
    %86 = arith.maximumf %82, %83 : vector<5x128xf32>
    %87 = arith.maximumf %84, %85 : vector<5x128xf32>
    %88 = arith.maximumf %86, %87 : vector<5x128xf32>
    %c0_80 = arith.constant 0 : index
    %c20_81 = arith.constant 20 : index
    %c0_82 = arith.constant 0 : index
    %89 = vector.load %arg4[%c0_80, %c20_81, %c0_82] : memref<1x25x128xf32, #tpu.memory_space<vmem>>, vector<1x5x128xf32>
    %90 = vector.shape_cast %89 : vector<1x5x128xf32> to vector<5x128xf32>
    %91 = vector.shape_cast %88 : vector<5x128xf32> to vector<1x5x128xf32>
    tpu.vector_store %arg4[%c0_80, %c20_81, %c0_82], %91 {strides = array<i32>} : memref<1x25x128xf32, #tpu.memory_space<vmem>>, vector<1x5x128xf32>,
    return
  }
  func.func @transform_0(%arg0: i32) -> (i32, i32, i32) {
    %c0_i32 = arith.constant 0 : i32
    %c0_i32_0 = arith.constant 0 : i32
    %c0_i32_1 = arith.constant 0 : i32
    return %arg0, %c0_i32, %c0_i32_0 : i32, i32, i32
  }
  func.func @transform_1(%arg0: i32) -> (i32, i32) {
    %c0_i32 = arith.constant 0 : i32
    %c0_i32_0 = arith.constant 0 : i32
    %c0_i32_1 = arith.constant 0 : i32
    return %c0_i32, %c0_i32_0 : i32, i32
  }
  func.func @transform_2(%arg0: i32) -> (i32, i32) {
    %c0_i32 = arith.constant 0 : i32
    %c0_i32_0 = arith.constant 0 : i32
    %c0_i32_1 = arith.constant 0 : i32
    return %c0_i32, %c0_i32_0 : i32, i32
  }
  func.func @transform_3(%arg0: i32) -> (i32, i32, i32) {
    %c0_i32 = arith.constant 0 : i32
    %c0_i32_0 = arith.constant 0 : i32
    %c0_i32_1 = arith.constant 0 : i32
    return %arg0, %c0_i32, %c0_i32_0 : i32, i32, i32
  }
}

module attributes {stable_mosaic.version = 11 : i64} {
  func.func @_mlp_kernel(%arg0: i32, %arg1: memref<8x3200xf32, #tpu.memory_space<vmem>>, %arg2: memref<3200x128xf32, #tpu.memory_space<vmem>>, %arg3: memref<1x128xf32, #tpu.memory_space<vmem>>, %arg4: memref<128x128xf32, #tpu.memory_space<vmem>>, %arg5: memref<1x128xf32, #tpu.memory_space<vmem>>, %arg6: memref<128x128xf32, #tpu.memory_space<vmem>>, %arg7: memref<1x128xf32, #tpu.memory_space<vmem>>, %arg8: memref<8x128xf32, #tpu.memory_space<vmem>>) attributes {dimension_semantics = [#tpu.dimension_semantics<parallel>], iteration_bounds = array<i64: 1>, scalar_prefetch = 0 : i64, scratch_operands = 0 : i64, tpu.core_type = #tpu.core_type<tc>, window_params = [{transform_indices = @transform_0, window_bounds = array<i64: 8, 3200>}, {pipeline_mode = #tpu.pipeline_mode<synchronous>, transform_indices = @transform_1, window_bounds = array<i64: 3200, 128>}, {pipeline_mode = #tpu.pipeline_mode<synchronous>, transform_indices = @transform_2, window_bounds = array<i64: 1, 128>}, {pipeline_mode = #tpu.pipeline_mode<synchronous>, transform_indices = @transform_3, window_bounds = array<i64: 128, 128>}, {pipeline_mode = #tpu.pipeline_mode<synchronous>, transform_indices = @transform_4, window_bounds = array<i64: 1, 128>}, {pipeline_mode = #tpu.pipeline_mode<synchronous>, transform_indices = @transform_5, window_bounds = array<i64: 128, 128>}, {pipeline_mode = #tpu.pipeline_mode<synchronous>, transform_indices = @transform_6, window_bounds = array<i64: 1, 128>}, {transform_indices = @transform_7, window_bounds = array<i64: 8, 128>}]} {
    %c0 = arith.constant 0 : index
    %c0_0 = arith.constant 0 : index
    %0 = vector.load %arg1[%c0, %c0_0] : memref<8x3200xf32, #tpu.memory_space<vmem>>, vector<8x3200xf32>
    %c0_1 = arith.constant 0 : index
    %c0_2 = arith.constant 0 : index
    %1 = vector.load %arg2[%c0_1, %c0_2] : memref<3200x128xf32, #tpu.memory_space<vmem>>, vector<3200x128xf32>
    %cst = arith.constant dense<0.000000e+00> : vector<8x128xf32>
    %2 = tpu.matmul %0, %1, %cst {dimension_numbers = #tpu.dot_dimension_numbers<[1], [0], [0], [1], [0, 0, 1, 1], [], []>} : vector<8x3200xf32>, vector<3200x128xf32>, vector<8x128xf32> -> vector<8x128xf32>
    %c0_3 = arith.constant 0 : index
    %c0_4 = arith.constant 0 : index
    %3 = vector.load %arg3[%c0_3, %c0_4] : memref<1x128xf32, #tpu.memory_space<vmem>>, vector<1x128xf32>
    %4 = vector.broadcast %3 : vector<1x128xf32> to vector<8x128xf32>
    %5 = arith.addf %2, %4 : vector<8x128xf32>
    %cst_5 = arith.constant 0.000000e+00 : f32
    %6 = vector.broadcast %cst_5 : f32 to vector<8x128xf32>
    %7 = arith.maximumf %5, %6 : vector<8x128xf32>
    %c0_6 = arith.constant 0 : index
    %c0_7 = arith.constant 0 : index
    %8 = vector.load %arg4[%c0_6, %c0_7] : memref<128x128xf32, #tpu.memory_space<vmem>>, vector<128x128xf32>
    %cst_8 = arith.constant dense<0.000000e+00> : vector<8x128xf32>
    %9 = tpu.matmul %7, %8, %cst_8 {dimension_numbers = #tpu.dot_dimension_numbers<[1], [0], [0], [1], [0, 0, 1, 1], [], []>} : vector<8x128xf32>, vector<128x128xf32>, vector<8x128xf32> -> vector<8x128xf32>
    %c0_9 = arith.constant 0 : index
    %c0_10 = arith.constant 0 : index
    %10 = vector.load %arg5[%c0_9, %c0_10] : memref<1x128xf32, #tpu.memory_space<vmem>>, vector<1x128xf32>
    %11 = vector.broadcast %10 : vector<1x128xf32> to vector<8x128xf32>
    %12 = arith.addf %9, %11 : vector<8x128xf32>
    %cst_11 = arith.constant 0.000000e+00 : f32
    %13 = vector.broadcast %cst_11 : f32 to vector<8x128xf32>
    %14 = arith.maximumf %12, %13 : vector<8x128xf32>
    %c0_12 = arith.constant 0 : index
    %c0_13 = arith.constant 0 : index
    %15 = vector.load %arg6[%c0_12, %c0_13] : memref<128x128xf32, #tpu.memory_space<vmem>>, vector<128x128xf32>
    %cst_14 = arith.constant dense<0.000000e+00> : vector<8x128xf32>
    %16 = tpu.matmul %14, %15, %cst_14 {dimension_numbers = #tpu.dot_dimension_numbers<[1], [0], [0], [1], [0, 0, 1, 1], [], []>} : vector<8x128xf32>, vector<128x128xf32>, vector<8x128xf32> -> vector<8x128xf32>
    %c0_15 = arith.constant 0 : index
    %c0_16 = arith.constant 0 : index
    %17 = vector.load %arg7[%c0_15, %c0_16] : memref<1x128xf32, #tpu.memory_space<vmem>>, vector<1x128xf32>
    %18 = vector.broadcast %17 : vector<1x128xf32> to vector<8x128xf32>
    %19 = arith.addf %16, %18 : vector<8x128xf32>
    %c0_17 = arith.constant 0 : index
    %c0_18 = arith.constant 0 : index
    %20 = vector.load %arg8[%c0_17, %c0_18] : memref<8x128xf32, #tpu.memory_space<vmem>>, vector<8x128xf32>
    tpu.vector_store %arg8[%c0_17, %c0_18], %19 {strides = array<i32>} : memref<8x128xf32, #tpu.memory_space<vmem>>, vector<8x128xf32>,
    return
  }
  func.func @transform_0(%arg0: i32) -> (i32, i32) {
    %c0_i32 = arith.constant 0 : i32
    %c0_i32_0 = arith.constant 0 : i32
    return %arg0, %c0_i32 : i32, i32
  }
  func.func @transform_1(%arg0: i32) -> (i32, i32) {
    %c0_i32 = arith.constant 0 : i32
    %c0_i32_0 = arith.constant 0 : i32
    %c0_i32_1 = arith.constant 0 : i32
    return %c0_i32, %c0_i32_0 : i32, i32
  }
  func.func @transform_2(%arg0: i32) -> (i32, i32) {
    %c0_i32 = arith.constant 0 : i32
    %c0_i32_0 = arith.constant 0 : i32
    %c0_i32_1 = arith.constant 0 : i32
    return %c0_i32, %c0_i32_0 : i32, i32
  }
  func.func @transform_3(%arg0: i32) -> (i32, i32) {
    %c0_i32 = arith.constant 0 : i32
    %c0_i32_0 = arith.constant 0 : i32
    %c0_i32_1 = arith.constant 0 : i32
    return %c0_i32, %c0_i32_0 : i32, i32
  }
  func.func @transform_4(%arg0: i32) -> (i32, i32) {
    %c0_i32 = arith.constant 0 : i32
    %c0_i32_0 = arith.constant 0 : i32
    %c0_i32_1 = arith.constant 0 : i32
    return %c0_i32, %c0_i32_0 : i32, i32
  }
  func.func @transform_5(%arg0: i32) -> (i32, i32) {
    %c0_i32 = arith.constant 0 : i32
    %c0_i32_0 = arith.constant 0 : i32
    %c0_i32_1 = arith.constant 0 : i32
    return %c0_i32, %c0_i32_0 : i32, i32
  }
  func.func @transform_6(%arg0: i32) -> (i32, i32) {
    %c0_i32 = arith.constant 0 : i32
    %c0_i32_0 = arith.constant 0 : i32
    %c0_i32_1 = arith.constant 0 : i32
    return %c0_i32, %c0_i32_0 : i32, i32
  }
  func.func @transform_7(%arg0: i32) -> (i32, i32) {
    %c0_i32 = arith.constant 0 : i32
    %c0_i32_0 = arith.constant 0 : i32
    return %arg0, %c0_i32 : i32, i32
  }
}

</mosaic_0001>

<llo_original>
// kernel: cnn_old_forward.3
$region0: #{cnn_old_forward.3}
  #allocation0 [shape = 'u32[]', space=smem, size = 0x4, offset = 0x4, fixed_abs, tag = 'smem constant byte address 0x4 - core index']
  #allocation1 [shape = 'u32[144,128]{1,0:T(1,128)}', space=vmem, size = 0x12000, scoped, tag = 'internal scratch']
  #allocation2 [shape = 'f32[56,128]{1,0:T(8,128)}', space=vmem, size = 0x7000, scoped, tag = 'scratch operand']
  %s0 = inlined_call_operand.vmem [shape: f32[2,784,128], index: 0, kind: input, shape index: {}]
  %s1 = inlined_call_operand.vmem [shape: f32[128,128], index: 1, kind: input, shape index: {}]
  %s2 = inlined_call_operand.vmem [shape: f32[1,128], index: 2, kind: input, shape index: {}]
  %s3 = inlined_call_operand.vmem [shape: f32[2,196,128], index: 3, kind: output, shape index: {}]
  %s4 = sld [smem:[#allocation0]]
  $region45: #{cnn_old_forward.3} parent=0
    _
  %s6 = ssub.s32 1, %s4
  %s7 = scalar_select 0, %s6, %s4
  loop: start=0, step=1, limit=4
  $region2: #{cnn_old_forward.3} parent=0 // loop_pre_header
    _
  $region3: #{cnn_old_forward.3} parent=0 // loop_header
    %s9 = sphi 0, %s13
    %p10 = scmp.ge.s32.totalorder %s9, 4
    %s19 = sphi 0, %s21
    %s22 = sphi 0, %s19
    %s23 = sphi 0, %s22
    %s39 = sphi 0, %s23
    %s43 = sphi 0, %s43
    %s45 = sphi 0, %s43
    %s46 = sphi 0, %s45
    %s60 = sphi 0, %s46
    %s64 = sphi 0, %s64
    %s66 = sphi 0, %s64
    %s67 = sphi 0, %s66
    %s81 = sphi 0, %s67
    %s87 = sphi 0, %s89
    %s90 = sphi 0, %s87
    %s91 = sphi 0, %s90
    %s107 = sphi 0, %s91
  $region4: #{cnn_old_forward.3} parent=0 // loop_header_branch
    %12 = sbr.rel (%p10) target = $region8
  $region5: #{cnn_old_forward.3} parent=0 // loop_body
    %s14 = ssub.s32 %s9, 1
    %s15 = ssub.s32 %s9, 2
    %s16 = sadd.s32 %s9, 1
    %s17 = ssub.s32 %s9, %s16
    %p18 = scmp.eq.s32.totalorder %s17, 0
    %s20 = sadd.s32 %s19, 1
    %s21 = scalar_select %p18, %s19, %s20
    %p24 = pneg %p18
    %p25 = scmp.eq.s32.totalorder %s9, 1
    %p26 = por %p24, %p25
    %p27 = scmp.ne.s32.totalorder %s19, %s22
    %p28 = scmp.eq.s32.totalorder %s9, 0
    %p29 = por %p27, %p28
    %p30 = scmp.ne.s32.totalorder %s19, %s22
    %p31 = scmp.eq.s32.totalorder %s14, 1
    %p32 = por %p30, %p31
    %p33 = scmp.ne.s32.totalorder %s22, %s23
    %p34 = scmp.eq.s32.totalorder %s14, 0
    %p35 = por %p33, %p34
    %p36 = scmp.ne.s32.totalorder %s22, %s23
    %p37 = scmp.eq.s32.totalorder %s15, 1
    %p38 = por %p36, %p37
    %p40 = scmp.ne.s32.totalorder %s23, %s39
    %p41 = scmp.eq.s32.totalorder %s15, 0
    %p42 = por %p40, %p41
    %s44 = sadd.s32 %s43, 1
    %p47 = scmp.eq.s32.totalorder %s9, 1
    %p48 = scmp.ne.s32.totalorder %s43, %s45
    %p49 = scmp.eq.s32.totalorder %s9, 0
    %p50 = por %p48, %p49
    %p51 = scmp.ne.s32.totalorder %s43, %s45
    %p52 = scmp.eq.s32.totalorder %s14, 1
    %p53 = por %p51, %p52
    %p54 = scmp.ne.s32.totalorder %s45, %s46
    %p55 = scmp.eq.s32.totalorder %s14, 0
    %p56 = por %p54, %p55
    %p57 = scmp.ne.s32.totalorder %s45, %s46
    %p58 = scmp.eq.s32.totalorder %s15, 1
    %p59 = por %p57, %p58
    %p61 = scmp.ne.s32.totalorder %s46, %s60
    %p62 = scmp.eq.s32.totalorder %s15, 0
    %p63 = por %p61, %p62
    %s65 = sadd.s32 %s64, 1
    %p68 = scmp.eq.s32.totalorder %s9, 1
    %p69 = scmp.ne.s32.totalorder %s64, %s66
    %p70 = scmp.eq.s32.totalorder %s9, 0
    %p71 = por %p69, %p70
    %p72 = scmp.ne.s32.totalorder %s64, %s66
    %p73 = scmp.eq.s32.totalorder %s14, 1
    %p74 = por %p72, %p73
    %p75 = scmp.ne.s32.totalorder %s66, %s67
    %p76 = scmp.eq.s32.totalorder %s14, 0
    %p77 = por %p75, %p76
    %p78 = scmp.ne.s32.totalorder %s66, %s67
    %p79 = scmp.eq.s32.totalorder %s15, 1
    %p80 = por %p78, %p79
    %p82 = scmp.ne.s32.totalorder %s67, %s81
    %p83 = scmp.eq.s32.totalorder %s15, 0
    %p84 = por %p82, %p83
    %s85 = ssub.s32 %s9, %s16
    %p86 = scmp.eq.s32.totalorder %s85, 0
    %s88 = sadd.s32 %s87, 1
    %s89 = scalar_select %p86, %s87, %s88
    %p92 = pneg %p86
    %p93 = scmp.eq.s32.totalorder %s9, 1
    %p94 = por %p92, %p93
    %p95 = scmp.ne.s32.totalorder %s87, %s90
    %p96 = scmp.eq.s32.totalorder %s9, 0
    %p97 = por %p95, %p96
    %p98 = scmp.ne.s32.totalorder %s87, %s90
    %p99 = scmp.eq.s32.totalorder %s14, 1
    %p100 = por %p98, %p99
    %p101 = scmp.ne.s32.totalorder %s90, %s91
    %p102 = scmp.eq.s32.totalorder %s14, 0
    %p103 = por %p101, %p102
    %p104 = scmp.ne.s32.totalorder %s90, %s91
    %p105 = scmp.eq.s32.totalorder %s15, 1
    %p106 = por %p104, %p105
    %p108 = scmp.ne.s32.totalorder %s91, %s107
    %p109 = scmp.eq.s32.totalorder %s15, 0
    %p110 = por %p108, %p109
    %p111 = scmp.le.s32.totalorder 1, %s9
    %p112 = scmp.lt.s32.totalorder %s9, 3
    %p113 = pnand %p111, %p112
    %p114 = pneg %p113
    // Predicated region
    $region9: #{cnn_old_forward.3} parent=5 // pred_check
      _
    $region10: #{cnn_old_forward.3} parent=5 // pred_check_branch
      %116 = sbr.rel (%p113) target = $region12
    $region11: #{cnn_old_forward.3} parent=5 // pred_region
      %s117 = ssub.s32 %s9, 1
      // Predicated region
      $region13: #{cnn_old_forward.3} parent=11 // pred_check
        %p118 = pneg %p56
      $region14: #{cnn_old_forward.3} parent=11 // pred_check_branch
        %120 = sbr.rel (%p118) target = $region16
      $region15: #{cnn_old_forward.3} parent=11 // pred_region
        _
      $region16: #{cnn_old_forward.3} parent=11 // pred_fallthru
        _
      // Predicated region
      $region17: #{cnn_old_forward.3} parent=11 // pred_check
        %p121 = pneg %p77
      $region18: #{cnn_old_forward.3} parent=11 // pred_check_branch
        %123 = sbr.rel (%p121) target = $region20
      $region19: #{cnn_old_forward.3} parent=11 // pred_region
        _
      $region20: #{cnn_old_forward.3} parent=11 // pred_fallthru
        _
    $region12: #{cnn_old_forward.3} parent=5 // pred_fallthru
      _
    %p124 = scmp.lt.s32.totalorder %s9, 2
    // Predicated region
    $region21: #{cnn_old_forward.3} parent=5 // pred_check
      %p125 = pneg %p124
    $region22: #{cnn_old_forward.3} parent=5 // pred_check_branch
      %127 = sbr.rel (%p125) target = $region24
    $region23: #{cnn_old_forward.3} parent=5 // pred_region
      // Predicated region
      $region25: #{cnn_old_forward.3} parent=23 // pred_check
        %p128 = pneg %p29
      $region26: #{cnn_old_forward.3} parent=23 // pred_check_branch
        %130 = sbr.rel (%p128) target = $region28
      $region27: #{cnn_old_forward.3} parent=23 // pred_region
        %p131 = scmp.lt.s32.totalorder %s9, 1
        %s132 = scalar_select %p131, %s9, 1
        %s133 = smul.addr %s132, 98
        %s134 = smul.addr %s133, 8
        %s135 = scalar_lea.vmem %s0, %s134
      $region28: #{cnn_old_forward.3} parent=23 // pred_fallthru
        _
    $region24: #{cnn_old_forward.3} parent=5 // pred_fallthru
      _
    %p136 = scmp.le.s32.totalorder 1, %s9
    %p137 = scmp.lt.s32.totalorder %s9, 3
    %p138 = pnand %p136, %p137
    %p139 = pneg %p138
    // Predicated region
    $region29: #{cnn_old_forward.3} parent=5 // pred_check
      _
    $region30: #{cnn_old_forward.3} parent=5 // pred_check_branch
      %141 = sbr.rel (%p138) target = $region32
    $region31: #{cnn_old_forward.3} parent=5 // pred_region
      %s142 = ssub.s32 %s9, 1
      %p143 = scmp.lt.s32.totalorder %s14, 1
      %s144 = scalar_select %p143, %s14, 1
      %s145 = smul.addr %s144, 98
      %s146 = smul.addr %s145, 8
      %s147 = scalar_lea.vmem %s0, %s146
      %p148 = pneg %p35
      %p149 = pneg %p32
      %p150 = pneg %p56
      %p151 = pneg %p53
      %p152 = pneg %p77
      %p153 = pneg %p74
      %p154 = pneg %p103
      %p155 = pneg %p100
      %p156 = scmp.lt.s32.totalorder %s14, 1
      %s157 = scalar_select %p156, %s14, 1
      %s158 = smul.addr %s157, 25
      %s159 = smul.addr %s158, 8
      %s160 = scalar_lea.vmem %s3, %s159
      %p161 = scmp.lt.s32.totalorder %s14, 1
      %s162 = scalar_select %p161, %s14, 1
      %s163 = smul.addr %s162, 98
      %s164 = smul.addr %s163, 8
      %s165 = scalar_lea.vmem %s0, %s164
      %p166 = scmp.lt.s32.totalorder %s14, 1
      %s167 = scalar_select %p166, %s14, 1
      %s168 = smul.addr %s167, 25
      %s169 = smul.addr %s168, 8
      %s170 = scalar_lea.vmem %s3, %s169
      %v171 = vld [vmem:[%s1] sm:$0xff]
      %v172 = vld [vmem:[%s1 + $0x8] sm:$0xff]
      %v173 = vld [vmem:[%s1 + $0x10] sm:$0xff]
      %v174 = vld [vmem:[%s1 + $0x18] sm:$0xff]
      %v175 = vld [vmem:[%s1 + $0x20] sm:$0xff]
      %v176 = vld [vmem:[%s1 + $0x28] sm:$0xff]
      %v177 = vld [vmem:[%s1 + $0x30] sm:$0xff]
      %v178 = vld [vmem:[%s1 + $0x38] sm:$0xff]
      %v179 = vld [vmem:[%s1 + $0x40] sm:$0xff]
      %v180 = vld [vmem:[%s1 + $0x48] sm:$0xff]
      %v181 = vld [vmem:[%s1 + $0x50] sm:$0xff]
      %v182 = vld [vmem:[%s1 + $0x58] sm:$0xff]
      %v183 = vld [vmem:[%s1 + $0x60] sm:$0xff]
      %v184 = vld [vmem:[%s1 + $0x68] sm:$0xff]
      %v185 = vld [vmem:[%s1 + $0x70] sm:$0xff]
      %v186 = vld [vmem:[%s1 + $0x78] sm:$0xff]
      %v187 = vld [vmem:[%s2] sm:$0x1]
      %v188 = vld [vmem:[%s165] sm:$0xff]
      %v189 = vld [vmem:[%s165 + $0x8] sm:$0xff]
      %v190 = vld [vmem:[%s165 + $0x10] sm:$0xff]
      %v191 = vld [vmem:[%s165 + $0x18] sm:$0xff]
      %v192 = vld [vmem:[%s165 + $0x20] sm:$0xff]
      %v193 = vld [vmem:[%s165 + $0x28] sm:$0xff]
      %v194 = vld [vmem:[%s165 + $0x30] sm:$0xff]
      %v196 = vlaneseq
      %v197 = vshrl.u32 %v196, 7
      %v198 = vsub.s32 0, %v197
      %v199 = vrot.slane %v187, %v198
      %201 = vmatprep.subr.mxu0 0.0
      %202 = vmatpush1.msra.mxu0 %v171
      %203 = vmatprep.subr.mxu0 0.0
      %204 = vmatpush1.msra.mxu0 %v172
      %205 = vmatprep.subr.mxu0 0.0
      %206 = vmatpush1.msra.mxu0 %v173
      %207 = vmatprep.subr.mxu0 0.0
      %208 = vmatpush1.msra.mxu0 %v174
      %209 = vmatprep.subr.mxu0 0.0
      %210 = vmatpush1.msra.mxu0 %v175
      %211 = vmatprep.subr.mxu0 0.0
      %212 = vmatpush1.msra.mxu0 %v176
      %213 = vmatprep.subr.mxu0 0.0
      %214 = vmatpush1.msra.mxu0 %v177
      %215 = vmatprep.subr.mxu0 0.0
      %216 = vmatpush1.msra.mxu0 %v178
      %217 = vmatprep.subr.mxu0 0.0
      %218 = vmatpush1.msra.mxu0 %v179
      %219 = vmatprep.subr.mxu0 0.0
      %220 = vmatpush1.msra.mxu0 %v180
      %221 = vmatprep.subr.mxu0 0.0
      %222 = vmatpush1.msra.mxu0 %v181
      %223 = vmatprep.subr.mxu0 0.0
      %224 = vmatpush1.msra.mxu0 %v182
      %225 = vmatprep.subr.mxu0 0.0
      %226 = vmatpush1.msra.mxu0 %v183
      %227 = vmatprep.subr.mxu0 0.0
      %228 = vmatpush1.msra.mxu0 %v184
      %229 = vmatprep.subr.mxu0 0.0
      %230 = vmatpush1.msra.mxu0 %v185
      %231 = vmatprep.subr.mxu0 0.0
      %232 = vmatpush1.msra.mxu0 %v186
      %233 = vmatprep.subr.mxu0 0.0
      %234 = vmatpush1.msra.mxu0 0.0
      %235 = vmatprep.subr.mxu0 0.0
      %236 = vmatpush1.msra.mxu0 0.0
      %237 = vmatprep.subr.mxu0 0.0
      %238 = vmatpush1.msra.mxu0 0.0
      %239 = vmatprep.subr.mxu0 0.0
      %240 = vmatpush1.msra.mxu0 0.0
      %241 = vmatprep.subr.mxu0 0.0
      %242 = vmatpush1.msra.mxu0 0.0
      %243 = vmatprep.subr.mxu0 0.0
      %244 = vmatpush1.msra.mxu0 0.0
      %245 = vmatprep.subr.mxu0 0.0
      %246 = vmatpush1.msra.mxu0 0.0
      %247 = vmatprep.subr.mxu0 0.0
      %248 = vmatpush1.msra.mxu0 0.0
      %249 = vmatprep.subr.mxu0 0.0
      %250 = vmatpush1.msra.mxu0 0.0
      %251 = vmatprep.subr.mxu0 0.0
      %252 = vmatpush1.msra.mxu0 0.0
      %253 = vmatprep.subr.mxu0 0.0
      %254 = vmatpush1.msra.mxu0 0.0
      %255 = vmatprep.subr.mxu0 0.0
      %256 = vmatpush1.msra.mxu0 0.0
      %257 = vmatprep.subr.mxu0 0.0
      %258 = vmatpush1.msra.mxu0 0.0
      %259 = vmatprep.subr.mxu0 0.0
      %260 = vmatpush1.msra.mxu0 0.0
      %261 = vmatprep.subr.mxu0 0.0
      %262 = vmatpush1.msra.mxu0 0.0
      %263 = vmatprep.subr.mxu0 0.0
      %264 = vmatpush1.msra.mxu0 0.0
      %265 = vmatprep.mubr.f32.mxu0 0.0
      %266 = vmatmul.mubr.f32.gmra.mrb[0].mxu0 %v188
      %v267 = vpop.f32.mrb[0].mxu0
      %v268 = vadd.f32 %v199, %v267
      %v269 = vpop.f32.mrb[0].mxu0
      %270 = vmatprep.mubr.f32.mxu0 0.0
      %271 = vmatmul.mubr.f32.gmra.mrb[0].mxu0 %v189
      %v272 = vpop.f32.mrb[0].mxu0
      %v273 = vadd.f32 %v199, %v272
      %v274 = vpop.f32.mrb[0].mxu0
      %275 = vmatprep.mubr.f32.mxu0 0.0
      %276 = vmatmul.mubr.f32.gmra.mrb[0].mxu0 %v190
      %v277 = vpop.f32.mrb[0].mxu0
      %v278 = vadd.f32 %v199, %v277
      %v279 = vpop.f32.mrb[0].mxu0
      %280 = vmatprep.mubr.f32.mxu0 0.0
      %281 = vmatmul.mubr.f32.gmra.mrb[0].mxu0 %v191
      %v282 = vpop.f32.mrb[0].mxu0
      %v283 = vadd.f32 %v199, %v282
      %v284 = vpop.f32.mrb[0].mxu0
      %285 = vmatprep.mubr.f32.mxu0 0.0
      %286 = vmatmul.mubr.f32.gmra.mrb[0].mxu0 %v192
      %v287 = vpop.f32.mrb[0].mxu0
      %v288 = vadd.f32 %v199, %v287
      %v289 = vpop.f32.mrb[0].mxu0
      %290 = vmatprep.mubr.f32.mxu0 0.0
      %291 = vmatmul.mubr.f32.gmra.mrb[0].mxu0 %v193
      %v292 = vpop.f32.mrb[0].mxu0
      %v293 = vadd.f32 %v199, %v292
      %v294 = vpop.f32.mrb[0].mxu0
      %295 = vmatprep.mubr.f32.mxu0 0.0
      %296 = vmatmul.mubr.f32.gmra.mrb[0].mxu0 %v194
      %v297 = vpop.f32.mrb[0].mxu0
      %v298 = vadd.f32 %v199, %v297
      %v299 = vpop.f32.mrb[0].mxu0
      %300 = vdwg.mxu0
      %v301 = vmax.f32 %v268, 0.0
      %v302 = vmax.f32 %v273, 0.0
      %v303 = vmax.f32 %v278, 0.0
      %v304 = vmax.f32 %v283, 0.0
      %v305 = vmax.f32 %v288, 0.0
      %v306 = vmax.f32 %v293, 0.0
      %v307 = vmax.f32 %v298, 0.0
      %308 = vst [vmem:[#allocation2] sm:$0xff] %v301
      %309 = vst [vmem:[#allocation2 + $0x8] sm:$0xff] %v302
      %310 = vst [vmem:[#allocation2 + $0x10] sm:$0xff] %v303
      %311 = vst [vmem:[#allocation2 + $0x18] sm:$0xff] %v304
      %312 = vst [vmem:[#allocation2 + $0x20] sm:$0xff] %v305
      %313 = vst [vmem:[#allocation2 + $0x28] sm:$0xff] %v306
      %314 = vst [vmem:[#allocation2 + $0x30] sm:$0xff] %v307
      %v315 = vld [vmem:[#allocation2] ss:$2 sm:$0xff]
      %s316 = scalar_lea.vmem [#allocation2], 16
      %v317 = vld [vmem:[%s316] ss:$2 sm:$0x3f]
      %s318 = scalar_lea.vmem [#allocation2], 1
      %v319 = vld [vmem:[%s318] ss:$2 sm:$0xff]
      %s320 = scalar_lea.vmem [#allocation2], 17
      %v321 = vld [vmem:[%s320] ss:$2 sm:$0x3f]
      %s322 = scalar_lea.vmem [#allocation2], 28
      %v323 = vld [vmem:[%s322] ss:$2 sm:$0xff]
      %s324 = scalar_lea.vmem [#allocation2], 44
      %v325 = vld [vmem:[%s324] ss:$2 sm:$0x3f]
      %s326 = scalar_lea.vmem [#allocation2], 29
      %v327 = vld [vmem:[%s326] ss:$2 sm:$0xff]
      %s328 = scalar_lea.vmem [#allocation2], 45
      %v329 = vld [vmem:[%s328] ss:$2 sm:$0x3f]
      %v330 = vmax.f32 %v315, %v319
      %v331 = vmax.f32 %v317, %v321
      %v332 = vmax.f32 %v323, %v327
      %v333 = vmax.f32 %v325, %v329
      %v334 = vmax.f32 %v330, %v332
      %v335 = vmax.f32 %v331, %v333
      %336 = vst [vmem:[%s170] sm:$0xff] %v334
      %337 = vst [vmem:[%s170 + $0x8] sm:$0x3f] %v335
      %v338 = vld [vmem:[%s165 + $0x38] sm:$0xff]
      %v339 = vld [vmem:[%s165 + $0x40] sm:$0xff]
      %v340 = vld [vmem:[%s165 + $0x48] sm:$0xff]
      %v341 = vld [vmem:[%s165 + $0x50] sm:$0xff]
      %v342 = vld [vmem:[%s165 + $0x58] sm:$0xff]
      %v343 = vld [vmem:[%s165 + $0x60] sm:$0xff]
      %v344 = vld [vmem:[%s165 + $0x68] sm:$0xff]
      %345 = vmatprep.subr.mxu0 0.0
      %346 = vmatpush1.msra.mxu0 %v171
      %347 = vmatprep.subr.mxu0 0.0
      %348 = vmatpush1.msra.mxu0 %v172
      %349 = vmatprep.subr.mxu0 0.0
      %350 = vmatpush1.msra.mxu0 %v173
      %351 = vmatprep.subr.mxu0 0.0
      %352 = vmatpush1.msra.mxu0 %v174
      %353 = vmatprep.subr.mxu0 0.0
      %354 = vmatpush1.msra.mxu0 %v175
      %355 = vmatprep.subr.mxu0 0.0
      %356 = vmatpush1.msra.mxu0 %v176
      %357 = vmatprep.subr.mxu0 0.0
      %358 = vmatpush1.msra.mxu0 %v177
      %359 = vmatprep.subr.mxu0 0.0
      %360 = vmatpush1.msra.mxu0 %v178
      %361 = vmatprep.subr.mxu0 0.0
      %362 = vmatpush1.msra.mxu0 %v179
      %363 = vmatprep.subr.mxu0 0.0
      %364 = vmatpush1.msra.mxu0 %v180
      %365 = vmatprep.subr.mxu0 0.0
      %366 = vmatpush1.msra.mxu0 %v181
      %367 = vmatprep.subr.mxu0 0.0
      %368 = vmatpush1.msra.mxu0 %v182
      %369 = vmatprep.subr.mxu0 0.0
      %370 = vmatpush1.msra.mxu0 %v183
      %371 = vmatprep.subr.mxu0 0.0
      %372 = vmatpush1.msra.mxu0 %v184
      %373 = vmatprep.subr.mxu0 0.0
      %374 = vmatpush1.msra.mxu0 %v185
      %375 = vmatprep.subr.mxu0 0.0
      %376 = vmatpush1.msra.mxu0 %v186
      %377 = vmatprep.subr.mxu0 0.0
      %378 = vmatpush1.msra.mxu0 0.0
      %379 = vmatprep.subr.mxu0 0.0
      %380 = vmatpush1.msra.mxu0 0.0
      %381 = vmatprep.subr.mxu0 0.0
      %382 = vmatpush1.msra.mxu0 0.0
      %383 = vmatprep.subr.mxu0 0.0
      %384 = vmatpush1.msra.mxu0 0.0
      %385 = vmatprep.subr.mxu0 0.0
      %386 = vmatpush1.msra.mxu0 0.0
      %387 = vmatprep.subr.mxu0 0.0
      %388 = vmatpush1.msra.mxu0 0.0
      %389 = vmatprep.subr.mxu0 0.0
      %390 = vmatpush1.msra.mxu0 0.0
      %391 = vmatprep.subr.mxu0 0.0
      %392 = vmatpush1.msra.mxu0 0.0
      %393 = vmatprep.subr.mxu0 0.0
      %394 = vmatpush1.msra.mxu0 0.0
      %395 = vmatprep.subr.mxu0 0.0
      %396 = vmatpush1.msra.mxu0 0.0
      %397 = vmatprep.subr.mxu0 0.0
      %398 = vmatpush1.msra.mxu0 0.0
      %399 = vmatprep.subr.mxu0 0.0
      %400 = vmatpush1.msra.mxu0 0.0
      %401 = vmatprep.subr.mxu0 0.0
      %402 = vmatpush1.msra.mxu0 0.0
      %403 = vmatprep.subr.mxu0 0.0
      %404 = vmatpush1.msra.mxu0 0.0
      %405 = vmatprep.subr.mxu0 0.0
      %406 = vmatpush1.msra.mxu0 0.0
      %407 = vmatprep.subr.mxu0 0.0
      %408 = vmatpush1.msra.mxu0 0.0
      %409 = vmatprep.mubr.f32.mxu0 0.0
      %410 = vmatmul.mubr.f32.gmra.mrb[0].mxu0 %v338
      %v411 = vpop.f32.mrb[0].mxu0
      %v412 = vadd.f32 %v199, %v411
      %v413 = vpop.f32.mrb[0].mxu0
      %414 = vmatprep.mubr.f32.mxu0 0.0
      %415 = vmatmul.mubr.f32.gmra.mrb[0].mxu0 %v339
      %v416 = vpop.f32.mrb[0].mxu0
      %v417 = vadd.f32 %v199, %v416
      %v418 = vpop.f32.mrb[0].mxu0
      %419 = vmatprep.mubr.f32.mxu0 0.0
      %420 = vmatmul.mubr.f32.gmra.mrb[0].mxu0 %v340
      %v421 = vpop.f32.mrb[0].mxu0
      %v422 = vadd.f32 %v199, %v421
      %v423 = vpop.f32.mrb[0].mxu0
      %424 = vmatprep.mubr.f32.mxu0 0.0
      %425 = vmatmul.mubr.f32.gmra.mrb[0].mxu0 %v341
      %v426 = vpop.f32.mrb[0].mxu0
      %v427 = vadd.f32 %v199, %v426
      %v428 = vpop.f32.mrb[0].mxu0
      %429 = vmatprep.mubr.f32.mxu0 0.0
      %430 = vmatmul.mubr.f32.gmra.mrb[0].mxu0 %v342
      %v431 = vpop.f32.mrb[0].mxu0
      %v432 = vadd.f32 %v199, %v431
      %v433 = vpop.f32.mrb[0].mxu0
      %434 = vmatprep.mubr.f32.mxu0 0.0
      %435 = vmatmul.mubr.f32.gmra.mrb[0].mxu0 %v343
      %v436 = vpop.f32.mrb[0].mxu0
      %v437 = vadd.f32 %v199, %v436
      %v438 = vpop.f32.mrb[0].mxu0
      %439 = vmatprep.mubr.f32.mxu0 0.0
      %440 = vmatmul.mubr.f32.gmra.mrb[0].mxu0 %v344
      %v441 = vpop.f32.mrb[0].mxu0
      %v442 = vadd.f32 %v199, %v441
      %v443 = vpop.f32.mrb[0].mxu0
      %444 = vdwg.mxu0
      %v445 = vmax.f32 %v412, 0.0
      %v446 = vmax.f32 %v417, 0.0
      %v447 = vmax.f32 %v422, 0.0
      %v448 = vmax.f32 %v427, 0.0
      %v449 = vmax.f32 %v432, 0.0
      %v450 = vmax.f32 %v437, 0.0
      %v451 = vmax.f32 %v442, 0.0
      %452 = vst [vmem:[#allocation2] sm:$0xff] %v445
      %453 = vst [vmem:[#allocation2 + $0x8] sm:$0xff] %v446
      %454 = vst [vmem:[#allocation2 + $0x10] sm:$0xff] %v447
      %455 = vst [vmem:[#allocation2 + $0x18] sm:$0xff] %v448
      %456 = vst [vmem:[#allocation2 + $0x20] sm:$0xff] %v449
      %457 = vst [vmem:[#allocation2 + $0x28] sm:$0xff] %v450
      %458 = vst [vmem:[#allocation2 + $0x30] sm:$0xff] %v451
      %v459 = vld [vmem:[#allocation2] ss:$2 sm:$0xff]
      %v460 = vld [vmem:[%s316] ss:$2 sm:$0x3f]
      %v461 = vld [vmem:[%s318] ss:$2 sm:$0xff]
      %v462 = vld [vmem:[%s320] ss:$2 sm:$0x3f]
      %v463 = vld [vmem:[%s322] ss:$2 sm:$0xff]
      %v464 = vld [vmem:[%s324] ss:$2 sm:$0x3f]
      %v465 = vld [vmem:[%s326] ss:$2 sm:$0xff]
      %v466 = vld [vmem:[%s328] ss:$2 sm:$0x3f]
      %v467 = vmax.f32 %v459, %v461
      %v468 = vmax.f32 %v460, %v462
      %v469 = vmax.f32 %v463, %v465
      %v470 = vmax.f32 %v464, %v466
      %v471 = vmax.f32 %v467, %v469
      %v472 = vmax.f32 %v468, %v470
      %473 = vst [vmem:[%s170 + $0xe] sm:$0xff] %v471
      %474 = vst [vmem:[%s170 + $0x16] sm:$0x3f] %v472
      %v475 = vld [vmem:[%s165 + $0x70] sm:$0xff]
      %v476 = vld [vmem:[%s165 + $0x78] sm:$0xff]
      %v477 = vld [vmem:[%s165 + $0x80] sm:$0xff]
      %v478 = vld [vmem:[%s165 + $0x88] sm:$0xff]
      %v479 = vld [vmem:[%s165 + $0x90] sm:$0xff]
      %v480 = vld [vmem:[%s165 + $0x98] sm:$0xff]
      %v481 = vld [vmem:[%s165 + $0xa0] sm:$0xff]
      %482 = vmatprep.subr.mxu0 0.0
      %483 = vmatpush1.msra.mxu0 %v171
      %484 = vmatprep.subr.mxu0 0.0
      %485 = vmatpush1.msra.mxu0 %v172
      %486 = vmatprep.subr.mxu0 0.0
      %487 = vmatpush1.msra.mxu0 %v173
      %488 = vmatprep.subr.mxu0 0.0
      %489 = vmatpush1.msra.mxu0 %v174
      %490 = vmatprep.subr.mxu0 0.0
      %491 = vmatpush1.msra.mxu0 %v175
      %492 = vmatprep.subr.mxu0 0.0
      %493 = vmatpush1.msra.mxu0 %v176
      %494 = vmatprep.subr.mxu0 0.0
      %495 = vmatpush1.msra.mxu0 %v177
      %496 = vmatprep.subr.mxu0 0.0
      %497 = vmatpush1.msra.mxu0 %v178
      %498 = vmatprep.subr.mxu0 0.0
      %499 = vmatpush1.msra.mxu0 %v179
      %500 = vmatprep.subr.mxu0 0.0
      %501 = vmatpush1.msra.mxu0 %v180
      %502 = vmatprep.subr.mxu0 0.0
      %503 = vmatpush1.msra.mxu0 %v181
      %504 = vmatprep.subr.mxu0 0.0
      %505 = vmatpush1.msra.mxu0 %v182
      %506 = vmatprep.subr.mxu0 0.0
      %507 = vmatpush1.msra.mxu0 %v183
      %508 = vmatprep.subr.mxu0 0.0
      %509 = vmatpush1.msra.mxu0 %v184
      %510 = vmatprep.subr.mxu0 0.0
      %511 = vmatpush1.msra.mxu0 %v185
      %512 = vmatprep.subr.mxu0 0.0
      %513 = vmatpush1.msra.mxu0 %v186
      %514 = vmatprep.subr.mxu0 0.0
      %515 = vmatpush1.msra.mxu0 0.0
      %516 = vmatprep.subr.mxu0 0.0
      %517 = vmatpush1.msra.mxu0 0.0
      %518 = vmatprep.subr.mxu0 0.0
      %519 = vmatpush1.msra.mxu0 0.0
      %520 = vmatprep.subr.mxu0 0.0
      %521 = vmatpush1.msra.mxu0 0.0
      %522 = vmatprep.subr.mxu0 0.0
      %523 = vmatpush1.msra.mxu0 0.0
      %524 = vmatprep.subr.mxu0 0.0
      %525 = vmatpush1.msra.mxu0 0.0
      %526 = vmatprep.subr.mxu0 0.0
      %527 = vmatpush1.msra.mxu0 0.0
      %528 = vmatprep.subr.mxu0 0.0
      %529 = vmatpush1.msra.mxu0 0.0
      %530 = vmatprep.subr.mxu0 0.0
      %531 = vmatpush1.msra.mxu0 0.0
      %532 = vmatprep.subr.mxu0 0.0
      %533 = vmatpush1.msra.mxu0 0.0
      %534 = vmatprep.subr.mxu0 0.0
      %535 = vmatpush1.msra.mxu0 0.0
      %536 = vmatprep.subr.mxu0 0.0
      %537 = vmatpush1.msra.mxu0 0.0
      %538 = vmatprep.subr.mxu0 0.0
      %539 = vmatpush1.msra.mxu0 0.0
      %540 = vmatprep.subr.mxu0 0.0
      %541 = vmatpush1.msra.mxu0 0.0
      %542 = vmatprep.subr.mxu0 0.0
      %543 = vmatpush1.msra.mxu0 0.0
      %544 = vmatprep.subr.mxu0 0.0
      %545 = vmatpush1.msra.mxu0 0.0
      %546 = vmatprep.mubr.f32.mxu0 0.0
      %547 = vmatmul.mubr.f32.gmra.mrb[0].mxu0 %v475
      %v548 = vpop.f32.mrb[0].mxu0
      %v549 = vadd.f32 %v199, %v548
      %v550 = vpop.f32.mrb[0].mxu0
      %551 = vmatprep.mubr.f32.mxu0 0.0
      %552 = vmatmul.mubr.f32.gmra.mrb[0].mxu0 %v476
      %v553 = vpop.f32.mrb[0].mxu0
      %v554 = vadd.f32 %v199, %v553
      %v555 = vpop.f32.mrb[0].mxu0
      %556 = vmatprep.mubr.f32.mxu0 0.0
      %557 = vmatmul.mubr.f32.gmra.mrb[0].mxu0 %v477
      %v558 = vpop.f32.mrb[0].mxu0
      %v559 = vadd.f32 %v199, %v558
      %v560 = vpop.f32.mrb[0].mxu0
      %561 = vmatprep.mubr.f32.mxu0 0.0
      %562 = vmatmul.mubr.f32.gmra.mrb[0].mxu0 %v478
      %v563 = vpop.f32.mrb[0].mxu0
      %v564 = vadd.f32 %v199, %v563
      %v565 = vpop.f32.mrb[0].mxu0
      %566 = vmatprep.mubr.f32.mxu0 0.0
      %567 = vmatmul.mubr.f32.gmra.mrb[0].mxu0 %v479
      %v568 = vpop.f32.mrb[0].mxu0
      %v569 = vadd.f32 %v199, %v568
      %v570 = vpop.f32.mrb[0].mxu0
      %571 = vmatprep.mubr.f32.mxu0 0.0
      %572 = vmatmul.mubr.f32.gmra.mrb[0].mxu0 %v480
      %v573 = vpop.f32.mrb[0].mxu0
      %v574 = vadd.f32 %v199, %v573
      %v575 = vpop.f32.mrb[0].mxu0
      %576 = vmatprep.mubr.f32.mxu0 0.0
      %577 = vmatmul.mubr.f32.gmra.mrb[0].mxu0 %v481
      %v578 = vpop.f32.mrb[0].mxu0
      %v579 = vadd.f32 %v199, %v578
      %v580 = vpop.f32.mrb[0].mxu0
      %581 = vdwg.mxu0
      %v582 = vmax.f32 %v549, 0.0
      %v583 = vmax.f32 %v554, 0.0
      %v584 = vmax.f32 %v559, 0.0
      %v585 = vmax.f32 %v564, 0.0
      %v586 = vmax.f32 %v569, 0.0
      %v587 = vmax.f32 %v574, 0.0
      %v588 = vmax.f32 %v579, 0.0
      %589 = vst [vmem:[#allocation2] sm:$0xff] %v582
      %590 = vst [vmem:[#allocation2 + $0x8] sm:$0xff] %v583
      %591 = vst [vmem:[#allocation2 + $0x10] sm:$0xff] %v584
      %592 = vst [vmem:[#allocation2 + $0x18] sm:$0xff] %v585
      %593 = vst [vmem:[#allocation2 + $0x20] sm:$0xff] %v586
      %594 = vst [vmem:[#allocation2 + $0x28] sm:$0xff] %v587
      %595 = vst [vmem:[#allocation2 + $0x30] sm:$0xff] %v588
      %v596 = vld [vmem:[#allocation2] ss:$2 sm:$0xff]
      %v597 = vld [vmem:[%s316] ss:$2 sm:$0x3f]
      %v598 = vld [vmem:[%s318] ss:$2 sm:$0xff]
      %v599 = vld [vmem:[%s320] ss:$2 sm:$0x3f]
      %v600 = vld [vmem:[%s322] ss:$2 sm:$0xff]
      %v601 = vld [vmem:[%s324] ss:$2 sm:$0x3f]
      %v602 = vld [vmem:[%s326] ss:$2 sm:$0xff]
      %v603 = vld [vmem:[%s328] ss:$2 sm:$0x3f]
      %v604 = vmax.f32 %v596, %v598
      %v605 = vmax.f32 %v597, %v599
      %v606 = vmax.f32 %v600, %v602
      %v607 = vmax.f32 %v601, %v603
      %v608 = vmax.f32 %v604, %v606
      %v609 = vmax.f32 %v605, %v607
      %610 = vst [vmem:[%s170 + $0x1c] sm:$0xff] %v608
      %611 = vst [vmem:[%s170 + $0x24] sm:$0x3f] %v609
      %v612 = vld [vmem:[%s165 + $0xa8] sm:$0xff]
      %v613 = vld [vmem:[%s165 + $0xb0] sm:$0xff]
      %v614 = vld [vmem:[%s165 + $0xb8] sm:$0xff]
      %v615 = vld [vmem:[%s165 + $0xc0] sm:$0xff]
      %v616 = vld [vmem:[%s165 + $0xc8] sm:$0xff]
      %v617 = vld [vmem:[%s165 + $0xd0] sm:$0xff]
      %v618 = vld [vmem:[%s165 + $0xd8] sm:$0xff]
      %619 = vmatprep.subr.mxu0 0.0
      %620 = vmatpush1.msra.mxu0 %v171
      %621 = vmatprep.subr.mxu0 0.0
      %622 = vmatpush1.msra.mxu0 %v172
      %623 = vmatprep.subr.mxu0 0.0
      %624 = vmatpush1.msra.mxu0 %v173
      %625 = vmatprep.subr.mxu0 0.0
      %626 = vmatpush1.msra.mxu0 %v174
      %627 = vmatprep.subr.mxu0 0.0
      %628 = vmatpush1.msra.mxu0 %v175
      %629 = vmatprep.subr.mxu0 0.0
      %630 = vmatpush1.msra.mxu0 %v176
      %631 = vmatprep.subr.mxu0 0.0
      %632 = vmatpush1.msra.mxu0 %v177
      %633 = vmatprep.subr.mxu0 0.0
      %634 = vmatpush1.msra.mxu0 %v178
      %635 = vmatprep.subr.mxu0 0.0
      %636 = vmatpush1.msra.mxu0 %v179
      %637 = vmatprep.subr.mxu0 0.0
      %638 = vmatpush1.msra.mxu0 %v180
      %639 = vmatprep.subr.mxu0 0.0
      %640 = vmatpush1.msra.mxu0 %v181
      %641 = vmatprep.subr.mxu0 0.0
      %642 = vmatpush1.msra.mxu0 %v182
      %643 = vmatprep.subr.mxu0 0.0
      %644 = vmatpush1.msra.mxu0 %v183
      %645 = vmatprep.subr.mxu0 0.0
      %646 = vmatpush1.msra.mxu0 %v184
      %647 = vmatprep.subr.mxu0 0.0
      %648 = vmatpush1.msra.mxu0 %v185
      %649 = vmatprep.subr.mxu0 0.0
      %650 = vmatpush1.msra.mxu0 %v186
      %651 = vmatprep.subr.mxu0 0.0
      %652 = vmatpush1.msra.mxu0 0.0
      %653 = vmatprep.subr.mxu0 0.0
      %654 = vmatpush1.msra.mxu0 0.0
      %655 = vmatprep.subr.mxu0 0.0
      %656 = vmatpush1.msra.mxu0 0.0
      %657 = vmatprep.subr.mxu0 0.0
      %658 = vmatpush1.msra.mxu0 0.0
      %659 = vmatprep.subr.mxu0 0.0
      %660 = vmatpush1.msra.mxu0 0.0
      %661 = vmatprep.subr.mxu0 0.0
      %662 = vmatpush1.msra.mxu0 0.0
      %663 = vmatprep.subr.mxu0 0.0
      %664 = vmatpush1.msra.mxu0 0.0
      %665 = vmatprep.subr.mxu0 0.0
      %666 = vmatpush1.msra.mxu0 0.0
      %667 = vmatprep.subr.mxu0 0.0
      %668 = vmatpush1.msra.mxu0 0.0
      %669 = vmatprep.subr.mxu0 0.0
      %670 = vmatpush1.msra.mxu0 0.0
      %671 = vmatprep.subr.mxu0 0.0
      %672 = vmatpush1.msra.mxu0 0.0
      %673 = vmatprep.subr.mxu0 0.0
      %674 = vmatpush1.msra.mxu0 0.0
      %675 = vmatprep.subr.mxu0 0.0
      %676 = vmatpush1.msra.mxu0 0.0
      %677 = vmatprep.subr.mxu0 0.0
      %678 = vmatpush1.msra.mxu0 0.0
      %679 = vmatprep.subr.mxu0 0.0
      %680 = vmatpush1.msra.mxu0 0.0
      %681 = vmatprep.subr.mxu0 0.0
      %682 = vmatpush1.msra.mxu0 0.0
      %683 = vmatprep.mubr.f32.mxu0 0.0
      %684 = vmatmul.mubr.f32.gmra.mrb[0].mxu0 %v612
      %v685 = vpop.f32.mrb[0].mxu0
      %v686 = vadd.f32 %v199, %v685
      %v687 = vpop.f32.mrb[0].mxu0
      %688 = vmatprep.mubr.f32.mxu0 0.0
      %689 = vmatmul.mubr.f32.gmra.mrb[0].mxu0 %v613
      %v690 = vpop.f32.mrb[0].mxu0
      %v691 = vadd.f32 %v199, %v690
      %v692 = vpop.f32.mrb[0].mxu0
      %693 = vmatprep.mubr.f32.mxu0 0.0
      %694 = vmatmul.mubr.f32.gmra.mrb[0].mxu0 %v614
      %v695 = vpop.f32.mrb[0].mxu0
      %v696 = vadd.f32 %v199, %v695
      %v697 = vpop.f32.mrb[0].mxu0
      %698 = vmatprep.mubr.f32.mxu0 0.0
      %699 = vmatmul.mubr.f32.gmra.mrb[0].mxu0 %v615
      %v700 = vpop.f32.mrb[0].mxu0
      %v701 = vadd.f32 %v199, %v700
      %v702 = vpop.f32.mrb[0].mxu0
      %703 = vmatprep.mubr.f32.mxu0 0.0
      %704 = vmatmul.mubr.f32.gmra.mrb[0].mxu0 %v616
      %v705 = vpop.f32.mrb[0].mxu0
      %v706 = vadd.f32 %v199, %v705
      %v707 = vpop.f32.mrb[0].mxu0
      %708 = vmatprep.mubr.f32.mxu0 0.0
      %709 = vmatmul.mubr.f32.gmra.mrb[0].mxu0 %v617
      %v710 = vpop.f32.mrb[0].mxu0
      %v711 = vadd.f32 %v199, %v710
      %v712 = vpop.f32.mrb[0].mxu0
      %713 = vmatprep.mubr.f32.mxu0 0.0
      %714 = vmatmul.mubr.f32.gmra.mrb[0].mxu0 %v618
      %v715 = vpop.f32.mrb[0].mxu0
      %v716 = vadd.f32 %v199, %v715
      %v717 = vpop.f32.mrb[0].mxu0
      %718 = vdwg.mxu0
      %v719 = vmax.f32 %v686, 0.0
      %v720 = vmax.f32 %v691, 0.0
      %v721 = vmax.f32 %v696, 0.0
      %v722 = vmax.f32 %v701, 0.0
      %v723 = vmax.f32 %v706, 0.0
      %v724 = vmax.f32 %v711, 0.0
      %v725 = vmax.f32 %v716, 0.0
      %726 = vst [vmem:[#allocation2] sm:$0xff] %v719
      %727 = vst [vmem:[#allocation2 + $0x8] sm:$0xff] %v720
      %728 = vst [vmem:[#allocation2 + $0x10] sm:$0xff] %v721
      %729 = vst [vmem:[#allocation2 + $0x18] sm:$0xff] %v722
      %730 = vst [vmem:[#allocation2 + $0x20] sm:$0xff] %v723
      %731 = vst [vmem:[#allocation2 + $0x28] sm:$0xff] %v724
      %732 = vst [vmem:[#allocation2 + $0x30] sm:$0xff] %v725
      %v733 = vld [vmem:[#allocation2] ss:$2 sm:$0xff]
      %v734 = vld [vmem:[%s316] ss:$2 sm:$0x3f]
      %v735 = vld [vmem:[%s318] ss:$2 sm:$0xff]
      %v736 = vld [vmem:[%s320] ss:$2 sm:$0x3f]
      %v737 = vld [vmem:[%s322] ss:$2 sm:$0xff]
      %v738 = vld [vmem:[%s324] ss:$2 sm:$0x3f]
      %v739 = vld [vmem:[%s326] ss:$2 sm:$0xff]
      %v740 = vld [vmem:[%s328] ss:$2 sm:$0x3f]
      %v741 = vmax.f32 %v733, %v735
      %v742 = vmax.f32 %v734, %v736
      %v743 = vmax.f32 %v737, %v739
      %v744 = vmax.f32 %v738, %v740
      %v745 = vmax.f32 %v741, %v743
      %v746 = vmax.f32 %v742, %v744
      %747 = vst [vmem:[%s170 + $0x2a] sm:$0xff] %v745
      %748 = vst [vmem:[%s170 + $0x32] sm:$0x3f] %v746
      %v749 = vld [vmem:[%s165 + $0xe0] sm:$0xff]
      %v750 = vld [vmem:[%s165 + $0xe8] sm:$0xff]
      %v751 = vld [vmem:[%s165 + $0xf0] sm:$0xff]
      %v752 = vld [vmem:[%s165 + $0xf8] sm:$0xff]
      %v753 = vld [vmem:[%s165 + $0x100] sm:$0xff]
      %v754 = vld [vmem:[%s165 + $0x108] sm:$0xff]
      %v755 = vld [vmem:[%s165 + $0x110] sm:$0xff]
      %756 = vmatprep.subr.mxu0 0.0
      %757 = vmatpush1.msra.mxu0 %v171
      %758 = vmatprep.subr.mxu0 0.0
      %759 = vmatpush1.msra.mxu0 %v172
      %760 = vmatprep.subr.mxu0 0.0
      %761 = vmatpush1.msra.mxu0 %v173
      %762 = vmatprep.subr.mxu0 0.0
      %763 = vmatpush1.msra.mxu0 %v174
      %764 = vmatprep.subr.mxu0 0.0
      %765 = vmatpush1.msra.mxu0 %v175
      %766 = vmatprep.subr.mxu0 0.0
      %767 = vmatpush1.msra.mxu0 %v176
      %768 = vmatprep.subr.mxu0 0.0
      %769 = vmatpush1.msra.mxu0 %v177
      %770 = vmatprep.subr.mxu0 0.0
      %771 = vmatpush1.msra.mxu0 %v178
      %772 = vmatprep.subr.mxu0 0.0
      %773 = vmatpush1.msra.mxu0 %v179
      %774 = vmatprep.subr.mxu0 0.0
      %775 = vmatpush1.msra.mxu0 %v180
      %776 = vmatprep.subr.mxu0 0.0
      %777 = vmatpush1.msra.mxu0 %v181
      %778 = vmatprep.subr.mxu0 0.0
      %779 = vmatpush1.msra.mxu0 %v182
      %780 = vmatprep.subr.mxu0 0.0
      %781 = vmatpush1.msra.mxu0 %v183
      %782 = vmatprep.subr.mxu0 0.0
      %783 = vmatpush1.msra.mxu0 %v184
      %784 = vmatprep.subr.mxu0 0.0
      %785 = vmatpush1.msra.mxu0 %v185
      %786 = vmatprep.subr.mxu0 0.0
      %787 = vmatpush1.msra.mxu0 %v186
      %788 = vmatprep.subr.mxu0 0.0
      %789 = vmatpush1.msra.mxu0 0.0
      %790 = vmatprep.subr.mxu0 0.0
      %791 = vmatpush1.msra.mxu0 0.0
      %792 = vmatprep.subr.mxu0 0.0
      %793 = vmatpush1.msra.mxu0 0.0
      %794 = vmatprep.subr.mxu0 0.0
      %795 = vmatpush1.msra.mxu0 0.0
      %796 = vmatprep.subr.mxu0 0.0
      %797 = vmatpush1.msra.mxu0 0.0
      %798 = vmatprep.subr.mxu0 0.0
      %799 = vmatpush1.msra.mxu0 0.0
      %800 = vmatprep.subr.mxu0 0.0
      %801 = vmatpush1.msra.mxu0 0.0
      %802 = vmatprep.subr.mxu0 0.0
      %803 = vmatpush1.msra.mxu0 0.0
      %804 = vmatprep.subr.mxu0 0.0
      %805 = vmatpush1.msra.mxu0 0.0
      %806 = vmatprep.subr.mxu0 0.0
      %807 = vmatpush1.msra.mxu0 0.0
      %808 = vmatprep.subr.mxu0 0.0
      %809 = vmatpush1.msra.mxu0 0.0
      %810 = vmatprep.subr.mxu0 0.0
      %811 = vmatpush1.msra.mxu0 0.0
      %812 = vmatprep.subr.mxu0 0.0
      %813 = vmatpush1.msra.mxu0 0.0
      %814 = vmatprep.subr.mxu0 0.0
      %815 = vmatpush1.msra.mxu0 0.0
      %816 = vmatprep.subr.mxu0 0.0
      %817 = vmatpush1.msra.mxu0 0.0
      %818 = vmatprep.subr.mxu0 0.0
      %819 = vmatpush1.msra.mxu0 0.0
      %820 = vmatprep.mubr.f32.mxu0 0.0
      %821 = vmatmul.mubr.f32.gmra.mrb[0].mxu0 %v749
      %v822 = vpop.f32.mrb[0].mxu0
      %v823 = vadd.f32 %v199, %v822
      %v824 = vpop.f32.mrb[0].mxu0
      %825 = vmatprep.mubr.f32.mxu0 0.0
      %826 = vmatmul.mubr.f32.gmra.mrb[0].mxu0 %v750
      %v827 = vpop.f32.mrb[0].mxu0
      %v828 = vadd.f32 %v199, %v827
      %v829 = vpop.f32.mrb[0].mxu0
      %830 = vmatprep.mubr.f32.mxu0 0.0
      %831 = vmatmul.mubr.f32.gmra.mrb[0].mxu0 %v751
      %v832 = vpop.f32.mrb[0].mxu0
      %v833 = vadd.f32 %v199, %v832
      %v834 = vpop.f32.mrb[0].mxu0
      %835 = vmatprep.mubr.f32.mxu0 0.0
      %836 = vmatmul.mubr.f32.gmra.mrb[0].mxu0 %v752
      %v837 = vpop.f32.mrb[0].mxu0
      %v838 = vadd.f32 %v199, %v837
      %v839 = vpop.f32.mrb[0].mxu0
      %840 = vmatprep.mubr.f32.mxu0 0.0
      %841 = vmatmul.mubr.f32.gmra.mrb[0].mxu0 %v753
      %v842 = vpop.f32.mrb[0].mxu0
      %v843 = vadd.f32 %v199, %v842
      %v844 = vpop.f32.mrb[0].mxu0
      %845 = vmatprep.mubr.f32.mxu0 0.0
      %846 = vmatmul.mubr.f32.gmra.mrb[0].mxu0 %v754
      %v847 = vpop.f32.mrb[0].mxu0
      %v848 = vadd.f32 %v199, %v847
      %v849 = vpop.f32.mrb[0].mxu0
      %850 = vmatprep.mubr.f32.mxu0 0.0
      %851 = vmatmul.mubr.f32.gmra.mrb[0].mxu0 %v755
      %v852 = vpop.f32.mrb[0].mxu0
      %v853 = vadd.f32 %v199, %v852
      %v854 = vpop.f32.mrb[0].mxu0
      %855 = vdwg.mxu0
      %v856 = vmax.f32 %v823, 0.0
      %v857 = vmax.f32 %v828, 0.0
      %v858 = vmax.f32 %v833, 0.0
      %v859 = vmax.f32 %v838, 0.0
      %v860 = vmax.f32 %v843, 0.0
      %v861 = vmax.f32 %v848, 0.0
      %v862 = vmax.f32 %v853, 0.0
      %863 = vst [vmem:[#allocation2] sm:$0xff] %v856
      %864 = vst [vmem:[#allocation2 + $0x8] sm:$0xff] %v857
      %865 = vst [vmem:[#allocation2 + $0x10] sm:$0xff] %v858
      %866 = vst [vmem:[#allocation2 + $0x18] sm:$0xff] %v859
      %867 = vst [vmem:[#allocation2 + $0x20] sm:$0xff] %v860
      %868 = vst [vmem:[#allocation2 + $0x28] sm:$0xff] %v861
      %869 = vst [vmem:[#allocation2 + $0x30] sm:$0xff] %v862
      %v870 = vld [vmem:[#allocation2] ss:$2 sm:$0xff]
      %v871 = vld [vmem:[%s316] ss:$2 sm:$0x3f]
      %v872 = vld [vmem:[%s318] ss:$2 sm:$0xff]
      %v873 = vld [vmem:[%s320] ss:$2 sm:$0x3f]
      %v874 = vld [vmem:[%s322] ss:$2 sm:$0xff]
      %v875 = vld [vmem:[%s324] ss:$2 sm:$0x3f]
      %v876 = vld [vmem:[%s326] ss:$2 sm:$0xff]
      %v877 = vld [vmem:[%s328] ss:$2 sm:$0x3f]
      %v878 = vmax.f32 %v870, %v872
      %v879 = vmax.f32 %v871, %v873
      %v880 = vmax.f32 %v874, %v876
      %v881 = vmax.f32 %v875, %v877
      %v882 = vmax.f32 %v878, %v880
      %v883 = vmax.f32 %v879, %v881
      %884 = vst [vmem:[%s170 + $0x38] sm:$0xff] %v882
      %885 = vst [vmem:[%s170 + $0x40] sm:$0x3f] %v883
      %v886 = vld [vmem:[%s165 + $0x118] sm:$0xff]
      %v887 = vld [vmem:[%s165 + $0x120] sm:$0xff]
      %v888 = vld [vmem:[%s165 + $0x128] sm:$0xff]
      %v889 = vld [vmem:[%s165 + $0x130] sm:$0xff]
      %v890 = vld [vmem:[%s165 + $0x138] sm:$0xff]
      %v891 = vld [vmem:[%s165 + $0x140] sm:$0xff]
      %v892 = vld [vmem:[%s165 + $0x148] sm:$0xff]
      %893 = vmatprep.subr.mxu0 0.0
      %894 = vmatpush1.msra.mxu0 %v171
      %895 = vmatprep.subr.mxu0 0.0
      %896 = vmatpush1.msra.mxu0 %v172
      %897 = vmatprep.subr.mxu0 0.0
      %898 = vmatpush1.msra.mxu0 %v173
      %899 = vmatprep.subr.mxu0 0.0
      %900 = vmatpush1.msra.mxu0 %v174
      %901 = vmatprep.subr.mxu0 0.0
      %902 = vmatpush1.msra.mxu0 %v175
      %903 = vmatprep.subr.mxu0 0.0
      %904 = vmatpush1.msra.mxu0 %v176
      %905 = vmatprep.subr.mxu0 0.0
      %906 = vmatpush1.msra.mxu0 %v177
      %907 = vmatprep.subr.mxu0 0.0
      %908 = vmatpush1.msra.mxu0 %v178
      %909 = vmatprep.subr.mxu0 0.0
      %910 = vmatpush1.msra.mxu0 %v179
      %911 = vmatprep.subr.mxu0 0.0
      %912 = vmatpush1.msra.mxu0 %v180
      %913 = vmatprep.subr.mxu0 0.0
      %914 = vmatpush1.msra.mxu0 %v181
      %915 = vmatprep.subr.mxu0 0.0
      %916 = vmatpush1.msra.mxu0 %v182
      %917 = vmatprep.subr.mxu0 0.0
      %918 = vmatpush1.msra.mxu0 %v183
      %919 = vmatprep.subr.mxu0 0.0
      %920 = vmatpush1.msra.mxu0 %v184
      %921 = vmatprep.subr.mxu0 0.0
      %922 = vmatpush1.msra.mxu0 %v185
      %923 = vmatprep.subr.mxu0 0.0
      %924 = vmatpush1.msra.mxu0 %v186
      %925 = vmatprep.subr.mxu0 0.0
      %926 = vmatpush1.msra.mxu0 0.0
      %927 = vmatprep.subr.mxu0 0.0
      %928 = vmatpush1.msra.mxu0 0.0
      %929 = vmatprep.subr.mxu0 0.0
      %930 = vmatpush1.msra.mxu0 0.0
      %931 = vmatprep.subr.mxu0 0.0
      %932 = vmatpush1.msra.mxu0 0.0
      %933 = vmatprep.subr.mxu0 0.0
      %934 = vmatpush1.msra.mxu0 0.0
      %935 = vmatprep.subr.mxu0 0.0
      %936 = vmatpush1.msra.mxu0 0.0
      %937 = vmatprep.subr.mxu0 0.0
      %938 = vmatpush1.msra.mxu0 0.0
      %939 = vmatprep.subr.mxu0 0.0
      %940 = vmatpush1.msra.mxu0 0.0
      %941 = vmatprep.subr.mxu0 0.0
      %942 = vmatpush1.msra.mxu0 0.0
      %943 = vmatprep.subr.mxu0 0.0
      %944 = vmatpush1.msra.mxu0 0.0
      %945 = vmatprep.subr.mxu0 0.0
      %946 = vmatpush1.msra.mxu0 0.0
      %947 = vmatprep.subr.mxu0 0.0
      %948 = vmatpush1.msra.mxu0 0.0
      %949 = vmatprep.subr.mxu0 0.0
      %950 = vmatpush1.msra.mxu0 0.0
      %951 = vmatprep.subr.mxu0 0.0
      %952 = vmatpush1.msra.mxu0 0.0
      %953 = vmatprep.subr.mxu0 0.0
      %954 = vmatpush1.msra.mxu0 0.0
      %955 = vmatprep.subr.mxu0 0.0
      %956 = vmatpush1.msra.mxu0 0.0
      %957 = vmatprep.mubr.f32.mxu0 0.0
      %958 = vmatmul.mubr.f32.gmra.mrb[0].mxu0 %v886
      %v959 = vpop.f32.mrb[0].mxu0
      %v960 = vadd.f32 %v199, %v959
      %v961 = vpop.f32.mrb[0].mxu0
      %962 = vmatprep.mubr.f32.mxu0 0.0
      %963 = vmatmul.mubr.f32.gmra.mrb[0].mxu0 %v887
      %v964 = vpop.f32.mrb[0].mxu0
      %v965 = vadd.f32 %v199, %v964
      %v966 = vpop.f32.mrb[0].mxu0
      %967 = vmatprep.mubr.f32.mxu0 0.0
      %968 = vmatmul.mubr.f32.gmra.mrb[0].mxu0 %v888
      %v969 = vpop.f32.mrb[0].mxu0
      %v970 = vadd.f32 %v199, %v969
      %v971 = vpop.f32.mrb[0].mxu0
      %972 = vmatprep.mubr.f32.mxu0 0.0
      %973 = vmatmul.mubr.f32.gmra.mrb[0].mxu0 %v889
      %v974 = vpop.f32.mrb[0].mxu0
      %v975 = vadd.f32 %v199, %v974
      %v976 = vpop.f32.mrb[0].mxu0
      %977 = vmatprep.mubr.f32.mxu0 0.0
      %978 = vmatmul.mubr.f32.gmra.mrb[0].mxu0 %v890
      %v979 = vpop.f32.mrb[0].mxu0
      %v980 = vadd.f32 %v199, %v979
      %v981 = vpop.f32.mrb[0].mxu0
      %982 = vmatprep.mubr.f32.mxu0 0.0
      %983 = vmatmul.mubr.f32.gmra.mrb[0].mxu0 %v891
      %v984 = vpop.f32.mrb[0].mxu0
      %v985 = vadd.f32 %v199, %v984
      %v986 = vpop.f32.mrb[0].mxu0
      %987 = vmatprep.mubr.f32.mxu0 0.0
      %988 = vmatmul.mubr.f32.gmra.mrb[0].mxu0 %v892
      %v989 = vpop.f32.mrb[0].mxu0
      %v990 = vadd.f32 %v199, %v989
      %v991 = vpop.f32.mrb[0].mxu0
      %992 = vdwg.mxu0
      %v993 = vmax.f32 %v960, 0.0
      %v994 = vmax.f32 %v965, 0.0
      %v995 = vmax.f32 %v970, 0.0
      %v996 = vmax.f32 %v975, 0.0
      %v997 = vmax.f32 %v980, 0.0
      %v998 = vmax.f32 %v985, 0.0
      %v999 = vmax.f32 %v990, 0.0
      %1000 = vst [vmem:[#allocation2] sm:$0xff] %v993
      %1001 = vst [vmem:[#allocation2 + $0x8] sm:$0xff] %v994
      %1002 = vst [vmem:[#allocation2 + $0x10] sm:$0xff] %v995
      %1003 = vst [vmem:[#allocation2 + $0x18] sm:$0xff] %v996
      %1004 = vst [vmem:[#allocation2 + $0x20] sm:$0xff] %v997
      %1005 = vst [vmem:[#allocation2 + $0x28] sm:$0xff] %v998
      %1006 = vst [vmem:[#allocation2 + $0x30] sm:$0xff] %v999
      %v1007 = vld [vmem:[#allocation2] ss:$2 sm:$0xff]
      %v1008 = vld [vmem:[%s316] ss:$2 sm:$0x3f]
      %v1009 = vld [vmem:[%s318] ss:$2 sm:$0xff]
      %v1010 = vld [vmem:[%s320] ss:$2 sm:$0x3f]
      %v1011 = vld [vmem:[%s322] ss:$2 sm:$0xff]
      %v1012 = vld [vmem:[%s324] ss:$2 sm:$0x3f]
      %v1013 = vld [vmem:[%s326] ss:$2 sm:$0xff]
      %v1014 = vld [vmem:[%s328] ss:$2 sm:$0x3f]
      %v1015 = vmax.f32 %v1007, %v1009
      %v1016 = vmax.f32 %v1008, %v1010
      %v1017 = vmax.f32 %v1011, %v1013
      %v1018 = vmax.f32 %v1012, %v1014
      %v1019 = vmax.f32 %v1015, %v1017
      %v1020 = vmax.f32 %v1016, %v1018
      %1021 = vst [vmem:[%s170 + $0x46] sm:$0xff] %v1019
      %1022 = vst [vmem:[%s170 + $0x4e] sm:$0x3f] %v1020
      %v1023 = vld [vmem:[%s165 + $0x150] sm:$0xff]
      %v1024 = vld [vmem:[%s165 + $0x158] sm:$0xff]
      %v1025 = vld [vmem:[%s165 + $0x160] sm:$0xff]
      %v1026 = vld [vmem:[%s165 + $0x168] sm:$0xff]
      %v1027 = vld [vmem:[%s165 + $0x170] sm:$0xff]
      %v1028 = vld [vmem:[%s165 + $0x178] sm:$0xff]
      %v1029 = vld [vmem:[%s165 + $0x180] sm:$0xff]
      %1030 = vmatprep.subr.mxu0 0.0
      %1031 = vmatpush1.msra.mxu0 %v171
      %1032 = vmatprep.subr.mxu0 0.0
      %1033 = vmatpush1.msra.mxu0 %v172
      %1034 = vmatprep.subr.mxu0 0.0
      %1035 = vmatpush1.msra.mxu0 %v173
      %1036 = vmatprep.subr.mxu0 0.0
      %1037 = vmatpush1.msra.mxu0 %v174
      %1038 = vmatprep.subr.mxu0 0.0
      %1039 = vmatpush1.msra.mxu0 %v175
      %1040 = vmatprep.subr.mxu0 0.0
      %1041 = vmatpush1.msra.mxu0 %v176
      %1042 = vmatprep.subr.mxu0 0.0
      %1043 = vmatpush1.msra.mxu0 %v177
      %1044 = vmatprep.subr.mxu0 0.0
      %1045 = vmatpush1.msra.mxu0 %v178
      %1046 = vmatprep.subr.mxu0 0.0
      %1047 = vmatpush1.msra.mxu0 %v179
      %1048 = vmatprep.subr.mxu0 0.0
      %1049 = vmatpush1.msra.mxu0 %v180
      %1050 = vmatprep.subr.mxu0 0.0
      %1051 = vmatpush1.msra.mxu0 %v181
      %1052 = vmatprep.subr.mxu0 0.0
      %1053 = vmatpush1.msra.mxu0 %v182
      %1054 = vmatprep.subr.mxu0 0.0
      %1055 = vmatpush1.msra.mxu0 %v183
      %1056 = vmatprep.subr.mxu0 0.0
      %1057 = vmatpush1.msra.mxu0 %v184
      %1058 = vmatprep.subr.mxu0 0.0
      %1059 = vmatpush1.msra.mxu0 %v185
      %1060 = vmatprep.subr.mxu0 0.0
      %1061 = vmatpush1.msra.mxu0 %v186
      %1062 = vmatprep.subr.mxu0 0.0
      %1063 = vmatpush1.msra.mxu0 0.0
      %1064 = vmatprep.subr.mxu0 0.0
      %1065 = vmatpush1.msra.mxu0 0.0
      %1066 = vmatprep.subr.mxu0 0.0
      %1067 = vmatpush1.msra.mxu0 0.0
      %1068 = vmatprep.subr.mxu0 0.0
      %1069 = vmatpush1.msra.mxu0 0.0
      %1070 = vmatprep.subr.mxu0 0.0
      %1071 = vmatpush1.msra.mxu0 0.0
      %1072 = vmatprep.subr.mxu0 0.0
      %1073 = vmatpush1.msra.mxu0 0.0
      %1074 = vmatprep.subr.mxu0 0.0
      %1075 = vmatpush1.msra.mxu0 0.0
      %1076 = vmatprep.subr.mxu0 0.0
      %1077 = vmatpush1.msra.mxu0 0.0
      %1078 = vmatprep.subr.mxu0 0.0
      %1079 = vmatpush1.msra.mxu0 0.0
      %1080 = vmatprep.subr.mxu0 0.0
      %1081 = vmatpush1.msra.mxu0 0.0
      %1082 = vmatprep.subr.mxu0 0.0
      %1083 = vmatpush1.msra.mxu0 0.0
      %1084 = vmatprep.subr.mxu0 0.0
      %1085 = vmatpush1.msra.mxu0 0.0
      %1086 = vmatprep.subr.mxu0 0.0
      %1087 = vmatpush1.msra.mxu0 0.0
      %1088 = vmatprep.subr.mxu0 0.0
      %1089 = vmatpush1.msra.mxu0 0.0
      %1090 = vmatprep.subr.mxu0 0.0
      %1091 = vmatpush1.msra.mxu0 0.0
      %1092 = vmatprep.subr.mxu0 0.0
      %1093 = vmatpush1.msra.mxu0 0.0
      %1094 = vmatprep.mubr.f32.mxu0 0.0
      %1095 = vmatmul.mubr.f32.gmra.mrb[0].mxu0 %v1023
      %v1096 = vpop.f32.mrb[0].mxu0
      %v1097 = vadd.f32 %v199, %v1096
      %v1098 = vpop.f32.mrb[0].mxu0
      %1099 = vmatprep.mubr.f32.mxu0 0.0
      %1100 = vmatmul.mubr.f32.gmra.mrb[0].mxu0 %v1024
      %v1101 = vpop.f32.mrb[0].mxu0
      %v1102 = vadd.f32 %v199, %v1101
      %v1103 = vpop.f32.mrb[0].mxu0
      %1104 = vmatprep.mubr.f32.mxu0 0.0
      %1105 = vmatmul.mubr.f32.gmra.mrb[0].mxu0 %v1025
      %v1106 = vpop.f32.mrb[0].mxu0
      %v1107 = vadd.f32 %v199, %v1106
      %v1108 = vpop.f32.mrb[0].mxu0
      %1109 = vmatprep.mubr.f32.mxu0 0.0
      %1110 = vmatmul.mubr.f32.gmra.mrb[0].mxu0 %v1026
      %v1111 = vpop.f32.mrb[0].mxu0
      %v1112 = vadd.f32 %v199, %v1111
      %v1113 = vpop.f32.mrb[0].mxu0
      %1114 = vmatprep.mubr.f32.mxu0 0.0
      %1115 = vmatmul.mubr.f32.gmra.mrb[0].mxu0 %v1027
      %v1116 = vpop.f32.mrb[0].mxu0
      %v1117 = vadd.f32 %v199, %v1116
      %v1118 = vpop.f32.mrb[0].mxu0
      %1119 = vmatprep.mubr.f32.mxu0 0.0
      %1120 = vmatmul.mubr.f32.gmra.mrb[0].mxu0 %v1028
      %v1121 = vpop.f32.mrb[0].mxu0
      %v1122 = vadd.f32 %v199, %v1121
      %v1123 = vpop.f32.mrb[0].mxu0
      %1124 = vmatprep.mubr.f32.mxu0 0.0
      %1125 = vmatmul.mubr.f32.gmra.mrb[0].mxu0 %v1029
      %v1126 = vpop.f32.mrb[0].mxu0
      %v1127 = vadd.f32 %v199, %v1126
      %v1128 = vpop.f32.mrb[0].mxu0
      %1129 = vdwg.mxu0
      %v1130 = vmax.f32 %v1097, 0.0
      %v1131 = vmax.f32 %v1102, 0.0
      %v1132 = vmax.f32 %v1107, 0.0
      %v1133 = vmax.f32 %v1112, 0.0
      %v1134 = vmax.f32 %v1117, 0.0
      %v1135 = vmax.f32 %v1122, 0.0
      %v1136 = vmax.f32 %v1127, 0.0
      %1137 = vst [vmem:[#allocation2] sm:$0xff] %v1130
      %1138 = vst [vmem:[#allocation2 + $0x8] sm:$0xff] %v1131
      %1139 = vst [vmem:[#allocation2 + $0x10] sm:$0xff] %v1132
      %1140 = vst [vmem:[#allocation2 + $0x18] sm:$0xff] %v1133
      %1141 = vst [vmem:[#allocation2 + $0x20] sm:$0xff] %v1134
      %1142 = vst [vmem:[#allocation2 + $0x28] sm:$0xff] %v1135
      %1143 = vst [vmem:[#allocation2 + $0x30] sm:$0xff] %v1136
      %v1144 = vld [vmem:[#allocation2] ss:$2 sm:$0xff]
      %v1145 = vld [vmem:[%s316] ss:$2 sm:$0x3f]
      %v1146 = vld [vmem:[%s318] ss:$2 sm:$0xff]
      %v1147 = vld [vmem:[%s320] ss:$2 sm:$0x3f]
      %v1148 = vld [vmem:[%s322] ss:$2 sm:$0xff]
      %v1149 = vld [vmem:[%s324] ss:$2 sm:$0x3f]
      %v1150 = vld [vmem:[%s326] ss:$2 sm:$0xff]
      %v1151 = vld [vmem:[%s328] ss:$2 sm:$0x3f]
      %v1152 = vmax.f32 %v1144, %v1146
      %v1153 = vmax.f32 %v1145, %v1147
      %v1154 = vmax.f32 %v1148, %v1150
      %v1155 = vmax.f32 %v1149, %v1151
      %v1156 = vmax.f32 %v1152, %v1154
      %v1157 = vmax.f32 %v1153, %v1155
      %1158 = vst [vmem:[%s170 + $0x54] sm:$0xff] %v1156
      %1159 = vst [vmem:[%s170 + $0x5c] sm:$0x3f] %v1157
      %v1160 = vld [vmem:[%s165 + $0x188] sm:$0xff]
      %v1161 = vld [vmem:[%s165 + $0x190] sm:$0xff]
      %v1162 = vld [vmem:[%s165 + $0x198] sm:$0xff]
      %v1163 = vld [vmem:[%s165 + $0x1a0] sm:$0xff]
      %v1164 = vld [vmem:[%s165 + $0x1a8] sm:$0xff]
      %v1165 = vld [vmem:[%s165 + $0x1b0] sm:$0xff]
      %v1166 = vld [vmem:[%s165 + $0x1b8] sm:$0xff]
      %1167 = vmatprep.subr.mxu0 0.0
      %1168 = vmatpush1.msra.mxu0 %v171
      %1169 = vmatprep.subr.mxu0 0.0
      %1170 = vmatpush1.msra.mxu0 %v172
      %1171 = vmatprep.subr.mxu0 0.0
      %1172 = vmatpush1.msra.mxu0 %v173
      %1173 = vmatprep.subr.mxu0 0.0
      %1174 = vmatpush1.msra.mxu0 %v174
      %1175 = vmatprep.subr.mxu0 0.0
      %1176 = vmatpush1.msra.mxu0 %v175
      %1177 = vmatprep.subr.mxu0 0.0
      %1178 = vmatpush1.msra.mxu0 %v176
      %1179 = vmatprep.subr.mxu0 0.0
      %1180 = vmatpush1.msra.mxu0 %v177
      %1181 = vmatprep.subr.mxu0 0.0
      %1182 = vmatpush1.msra.mxu0 %v178
      %1183 = vmatprep.subr.mxu0 0.0
      %1184 = vmatpush1.msra.mxu0 %v179
      %1185 = vmatprep.subr.mxu0 0.0
      %1186 = vmatpush1.msra.mxu0 %v180
      %1187 = vmatprep.subr.mxu0 0.0
      %1188 = vmatpush1.msra.mxu0 %v181
      %1189 = vmatprep.subr.mxu0 0.0
      %1190 = vmatpush1.msra.mxu0 %v182
      %1191 = vmatprep.subr.mxu0 0.0
      %1192 = vmatpush1.msra.mxu0 %v183
      %1193 = vmatprep.subr.mxu0 0.0
      %1194 = vmatpush1.msra.mxu0 %v184
      %1195 = vmatprep.subr.mxu0 0.0
      %1196 = vmatpush1.msra.mxu0 %v185
      %1197 = vmatprep.subr.mxu0 0.0
      %1198 = vmatpush1.msra.mxu0 %v186
      %1199 = vmatprep.subr.mxu0 0.0
      %1200 = vmatpush1.msra.mxu0 0.0
      %1201 = vmatprep.subr.mxu0 0.0
      %1202 = vmatpush1.msra.mxu0 0.0
      %1203 = vmatprep.subr.mxu0 0.0
      %1204 = vmatpush1.msra.mxu0 0.0
      %1205 = vmatprep.subr.mxu0 0.0
      %1206 = vmatpush1.msra.mxu0 0.0
      %1207 = vmatprep.subr.mxu0 0.0
      %1208 = vmatpush1.msra.mxu0 0.0
      %1209 = vmatprep.subr.mxu0 0.0
      %1210 = vmatpush1.msra.mxu0 0.0
      %1211 = vmatprep.subr.mxu0 0.0
      %1212 = vmatpush1.msra.mxu0 0.0
      %1213 = vmatprep.subr.mxu0 0.0
      %1214 = vmatpush1.msra.mxu0 0.0
      %1215 = vmatprep.subr.mxu0 0.0
      %1216 = vmatpush1.msra.mxu0 0.0
      %1217 = vmatprep.subr.mxu0 0.0
      %1218 = vmatpush1.msra.mxu0 0.0
      %1219 = vmatprep.subr.mxu0 0.0
      %1220 = vmatpush1.msra.mxu0 0.0
      %1221 = vmatprep.subr.mxu0 0.0
      %1222 = vmatpush1.msra.mxu0 0.0
      %1223 = vmatprep.subr.mxu0 0.0
      %1224 = vmatpush1.msra.mxu0 0.0
      %1225 = vmatprep.subr.mxu0 0.0
      %1226 = vmatpush1.msra.mxu0 0.0
      %1227 = vmatprep.subr.mxu0 0.0
      %1228 = vmatpush1.msra.mxu0 0.0
      %1229 = vmatprep.subr.mxu0 0.0
      %1230 = vmatpush1.msra.mxu0 0.0
      %1231 = vmatprep.mubr.f32.mxu0 0.0
      %1232 = vmatmul.mubr.f32.gmra.mrb[0].mxu0 %v1160
      %v1233 = vpop.f32.mrb[0].mxu0
      %v1234 = vadd.f32 %v199, %v1233
      %v1235 = vpop.f32.mrb[0].mxu0
      %1236 = vmatprep.mubr.f32.mxu0 0.0
      %1237 = vmatmul.mubr.f32.gmra.mrb[0].mxu0 %v1161
      %v1238 = vpop.f32.mrb[0].mxu0
      %v1239 = vadd.f32 %v199, %v1238
      %v1240 = vpop.f32.mrb[0].mxu0
      %1241 = vmatprep.mubr.f32.mxu0 0.0
      %1242 = vmatmul.mubr.f32.gmra.mrb[0].mxu0 %v1162
      %v1243 = vpop.f32.mrb[0].mxu0
      %v1244 = vadd.f32 %v199, %v1243
      %v1245 = vpop.f32.mrb[0].mxu0
      %1246 = vmatprep.mubr.f32.mxu0 0.0
      %1247 = vmatmul.mubr.f32.gmra.mrb[0].mxu0 %v1163
      %v1248 = vpop.f32.mrb[0].mxu0
      %v1249 = vadd.f32 %v199, %v1248
      %v1250 = vpop.f32.mrb[0].mxu0
      %1251 = vmatprep.mubr.f32.mxu0 0.0
      %1252 = vmatmul.mubr.f32.gmra.mrb[0].mxu0 %v1164
      %v1253 = vpop.f32.mrb[0].mxu0
      %v1254 = vadd.f32 %v199, %v1253
      %v1255 = vpop.f32.mrb[0].mxu0
      %1256 = vmatprep.mubr.f32.mxu0 0.0
      %1257 = vmatmul.mubr.f32.gmra.mrb[0].mxu0 %v1165
      %v1258 = vpop.f32.mrb[0].mxu0
      %v1259 = vadd.f32 %v199, %v1258
      %v1260 = vpop.f32.mrb[0].mxu0
      %1261 = vmatprep.mubr.f32.mxu0 0.0
      %1262 = vmatmul.mubr.f32.gmra.mrb[0].mxu0 %v1166
      %v1263 = vpop.f32.mrb[0].mxu0
      %v1264 = vadd.f32 %v199, %v1263
      %v1265 = vpop.f32.mrb[0].mxu0
      %1266 = vdwg.mxu0
      %v1267 = vmax.f32 %v1234, 0.0
      %v1268 = vmax.f32 %v1239, 0.0
      %v1269 = vmax.f32 %v1244, 0.0
      %v1270 = vmax.f32 %v1249, 0.0
      %v1271 = vmax.f32 %v1254, 0.0
      %v1272 = vmax.f32 %v1259, 0.0
      %v1273 = vmax.f32 %v1264, 0.0
      %1274 = vst [vmem:[#allocation2] sm:$0xff] %v1267
      %1275 = vst [vmem:[#allocation2 + $0x8] sm:$0xff] %v1268
      %1276 = vst [vmem:[#allocation2 + $0x10] sm:$0xff] %v1269
      %1277 = vst [vmem:[#allocation2 + $0x18] sm:$0xff] %v1270
      %1278 = vst [vmem:[#allocation2 + $0x20] sm:$0xff] %v1271
      %1279 = vst [vmem:[#allocation2 + $0x28] sm:$0xff] %v1272
      %1280 = vst [vmem:[#allocation2 + $0x30] sm:$0xff] %v1273
      %v1281 = vld [vmem:[#allocation2] ss:$2 sm:$0xff]
      %v1282 = vld [vmem:[%s316] ss:$2 sm:$0x3f]
      %v1283 = vld [vmem:[%s318] ss:$2 sm:$0xff]
      %v1284 = vld [vmem:[%s320] ss:$2 sm:$0x3f]
      %v1285 = vld [vmem:[%s322] ss:$2 sm:$0xff]
      %v1286 = vld [vmem:[%s324] ss:$2 sm:$0x3f]
      %v1287 = vld [vmem:[%s326] ss:$2 sm:$0xff]
      %v1288 = vld [vmem:[%s328] ss:$2 sm:$0x3f]
      %v1289 = vmax.f32 %v1281, %v1283
      %v1290 = vmax.f32 %v1282, %v1284
      %v1291 = vmax.f32 %v1285, %v1287
      %v1292 = vmax.f32 %v1286, %v1288
      %v1293 = vmax.f32 %v1289, %v1291
      %v1294 = vmax.f32 %v1290, %v1292
      %1295 = vst [vmem:[%s170 + $0x62] sm:$0xff] %v1293
      %1296 = vst [vmem:[%s170 + $0x6a] sm:$0x3f] %v1294
      %v1297 = vld [vmem:[%s165 + $0x1c0] sm:$0xff]
      %v1298 = vld [vmem:[%s165 + $0x1c8] sm:$0xff]
      %v1299 = vld [vmem:[%s165 + $0x1d0] sm:$0xff]
      %v1300 = vld [vmem:[%s165 + $0x1d8] sm:$0xff]
      %v1301 = vld [vmem:[%s165 + $0x1e0] sm:$0xff]
      %v1302 = vld [vmem:[%s165 + $0x1e8] sm:$0xff]
      %v1303 = vld [vmem:[%s165 + $0x1f0] sm:$0xff]
      %1304 = vmatprep.subr.mxu0 0.0
      %1305 = vmatpush1.msra.mxu0 %v171
      %1306 = vmatprep.subr.mxu0 0.0
      %1307 = vmatpush1.msra.mxu0 %v172
      %1308 = vmatprep.subr.mxu0 0.0
      %1309 = vmatpush1.msra.mxu0 %v173
      %1310 = vmatprep.subr.mxu0 0.0
      %1311 = vmatpush1.msra.mxu0 %v174
      %1312 = vmatprep.subr.mxu0 0.0
      %1313 = vmatpush1.msra.mxu0 %v175
      %1314 = vmatprep.subr.mxu0 0.0
      %1315 = vmatpush1.msra.mxu0 %v176
      %1316 = vmatprep.subr.mxu0 0.0
      %1317 = vmatpush1.msra.mxu0 %v177
      %1318 = vmatprep.subr.mxu0 0.0
      %1319 = vmatpush1.msra.mxu0 %v178
      %1320 = vmatprep.subr.mxu0 0.0
      %1321 = vmatpush1.msra.mxu0 %v179
      %1322 = vmatprep.subr.mxu0 0.0
      %1323 = vmatpush1.msra.mxu0 %v180
      %1324 = vmatprep.subr.mxu0 0.0
      %1325 = vmatpush1.msra.mxu0 %v181
      %1326 = vmatprep.subr.mxu0 0.0
      %1327 = vmatpush1.msra.mxu0 %v182
      %1328 = vmatprep.subr.mxu0 0.0
      %1329 = vmatpush1.msra.mxu0 %v183
      %1330 = vmatprep.subr.mxu0 0.0
      %1331 = vmatpush1.msra.mxu0 %v184
      %1332 = vmatprep.subr.mxu0 0.0
      %1333 = vmatpush1.msra.mxu0 %v185
      %1334 = vmatprep.subr.mxu0 0.0
      %1335 = vmatpush1.msra.mxu0 %v186
      %1336 = vmatprep.subr.mxu0 0.0
      %1337 = vmatpush1.msra.mxu0 0.0
      %1338 = vmatprep.subr.mxu0 0.0
      %1339 = vmatpush1.msra.mxu0 0.0
      %1340 = vmatprep.subr.mxu0 0.0
      %1341 = vmatpush1.msra.mxu0 0.0
      %1342 = vmatprep.subr.mxu0 0.0
      %1343 = vmatpush1.msra.mxu0 0.0
      %1344 = vmatprep.subr.mxu0 0.0
      %1345 = vmatpush1.msra.mxu0 0.0
      %1346 = vmatprep.subr.mxu0 0.0
      %1347 = vmatpush1.msra.mxu0 0.0
      %1348 = vmatprep.subr.mxu0 0.0
      %1349 = vmatpush1.msra.mxu0 0.0
      %1350 = vmatprep.subr.mxu0 0.0
      %1351 = vmatpush1.msra.mxu0 0.0
      %1352 = vmatprep.subr.mxu0 0.0
      %1353 = vmatpush1.msra.mxu0 0.0
      %1354 = vmatprep.subr.mxu0 0.0
      %1355 = vmatpush1.msra.mxu0 0.0
      %1356 = vmatprep.subr.mxu0 0.0
      %1357 = vmatpush1.msra.mxu0 0.0
      %1358 = vmatprep.subr.mxu0 0.0
      %1359 = vmatpush1.msra.mxu0 0.0
      %1360 = vmatprep.subr.mxu0 0.0
      %1361 = vmatpush1.msra.mxu0 0.0
      %1362 = vmatprep.subr.mxu0 0.0
      %1363 = vmatpush1.msra.mxu0 0.0
      %1364 = vmatprep.subr.mxu0 0.0
      %1365 = vmatpush1.msra.mxu0 0.0
      %1366 = vmatprep.subr.mxu0 0.0
      %1367 = vmatpush1.msra.mxu0 0.0
      %1368 = vmatprep.mubr.f32.mxu0 0.0
      %1369 = vmatmul.mubr.f32.gmra.mrb[0].mxu0 %v1297
      %v1370 = vpop.f32.mrb[0].mxu0
      %v1371 = vadd.f32 %v199, %v1370
      %v1372 = vpop.f32.mrb[0].mxu0
      %1373 = vmatprep.mubr.f32.mxu0 0.0
      %1374 = vmatmul.mubr.f32.gmra.mrb[0].mxu0 %v1298
      %v1375 = vpop.f32.mrb[0].mxu0
      %v1376 = vadd.f32 %v199, %v1375
      %v1377 = vpop.f32.mrb[0].mxu0
      %1378 = vmatprep.mubr.f32.mxu0 0.0
      %1379 = vmatmul.mubr.f32.gmra.mrb[0].mxu0 %v1299
      %v1380 = vpop.f32.mrb[0].mxu0
      %v1381 = vadd.f32 %v199, %v1380
      %v1382 = vpop.f32.mrb[0].mxu0
      %1383 = vmatprep.mubr.f32.mxu0 0.0
      %1384 = vmatmul.mubr.f32.gmra.mrb[0].mxu0 %v1300
      %v1385 = vpop.f32.mrb[0].mxu0
      %v1386 = vadd.f32 %v199, %v1385
      %v1387 = vpop.f32.mrb[0].mxu0
      %1388 = vmatprep.mubr.f32.mxu0 0.0
      %1389 = vmatmul.mubr.f32.gmra.mrb[0].mxu0 %v1301
      %v1390 = vpop.f32.mrb[0].mxu0
      %v1391 = vadd.f32 %v199, %v1390
      %v1392 = vpop.f32.mrb[0].mxu0
      %1393 = vmatprep.mubr.f32.mxu0 0.0
      %1394 = vmatmul.mubr.f32.gmra.mrb[0].mxu0 %v1302
      %v1395 = vpop.f32.mrb[0].mxu0
      %v1396 = vadd.f32 %v199, %v1395
      %v1397 = vpop.f32.mrb[0].mxu0
      %1398 = vmatprep.mubr.f32.mxu0 0.0
      %1399 = vmatmul.mubr.f32.gmra.mrb[0].mxu0 %v1303
      %v1400 = vpop.f32.mrb[0].mxu0
      %v1401 = vadd.f32 %v199, %v1400
      %v1402 = vpop.f32.mrb[0].mxu0
      %1403 = vdwg.mxu0
      %v1404 = vmax.f32 %v1371, 0.0
      %v1405 = vmax.f32 %v1376, 0.0
      %v1406 = vmax.f32 %v1381, 0.0
      %v1407 = vmax.f32 %v1386, 0.0
      %v1408 = vmax.f32 %v1391, 0.0
      %v1409 = vmax.f32 %v1396, 0.0
      %v1410 = vmax.f32 %v1401, 0.0
      %1411 = vst [vmem:[#allocation2] sm:$0xff] %v1404
      %1412 = vst [vmem:[#allocation2 + $0x8] sm:$0xff] %v1405
      %1413 = vst [vmem:[#allocation2 + $0x10] sm:$0xff] %v1406
      %1414 = vst [vmem:[#allocation2 + $0x18] sm:$0xff] %v1407
      %1415 = vst [vmem:[#allocation2 + $0x20] sm:$0xff] %v1408
      %1416 = vst [vmem:[#allocation2 + $0x28] sm:$0xff] %v1409
      %1417 = vst [vmem:[#allocation2 + $0x30] sm:$0xff] %v1410
      %v1418 = vld [vmem:[#allocation2] ss:$2 sm:$0xff]
      %v1419 = vld [vmem:[%s316] ss:$2 sm:$0x3f]
      %v1420 = vld [vmem:[%s318] ss:$2 sm:$0xff]
      %v1421 = vld [vmem:[%s320] ss:$2 sm:$0x3f]
      %v1422 = vld [vmem:[%s322] ss:$2 sm:$0xff]
      %v1423 = vld [vmem:[%s324] ss:$2 sm:$0x3f]
      %v1424 = vld [vmem:[%s326] ss:$2 sm:$0xff]
      %v1425 = vld [vmem:[%s328] ss:$2 sm:$0x3f]
      %v1426 = vmax.f32 %v1418, %v1420
      %v1427 = vmax.f32 %v1419, %v1421
      %v1428 = vmax.f32 %v1422, %v1424
      %v1429 = vmax.f32 %v1423, %v1425
      %v1430 = vmax.f32 %v1426, %v1428
      %v1431 = vmax.f32 %v1427, %v1429
      %1432 = vst [vmem:[%s170 + $0x70] sm:$0xff] %v1430
      %1433 = vst [vmem:[%s170 + $0x78] sm:$0x3f] %v1431
      %v1434 = vld [vmem:[%s165 + $0x1f8] sm:$0xff]
      %v1435 = vld [vmem:[%s165 + $0x200] sm:$0xff]
      %v1436 = vld [vmem:[%s165 + $0x208] sm:$0xff]
      %v1437 = vld [vmem:[%s165 + $0x210] sm:$0xff]
      %v1438 = vld [vmem:[%s165 + $0x218] sm:$0xff]
      %v1439 = vld [vmem:[%s165 + $0x220] sm:$0xff]
      %v1440 = vld [vmem:[%s165 + $0x228] sm:$0xff]
      %1441 = vmatprep.subr.mxu0 0.0
      %1442 = vmatpush1.msra.mxu0 %v171
      %1443 = vmatprep.subr.mxu0 0.0
      %1444 = vmatpush1.msra.mxu0 %v172
      %1445 = vmatprep.subr.mxu0 0.0
      %1446 = vmatpush1.msra.mxu0 %v173
      %1447 = vmatprep.subr.mxu0 0.0
      %1448 = vmatpush1.msra.mxu0 %v174
      %1449 = vmatprep.subr.mxu0 0.0
      %1450 = vmatpush1.msra.mxu0 %v175
      %1451 = vmatprep.subr.mxu0 0.0
      %1452 = vmatpush1.msra.mxu0 %v176
      %1453 = vmatprep.subr.mxu0 0.0
      %1454 = vmatpush1.msra.mxu0 %v177
      %1455 = vmatprep.subr.mxu0 0.0
      %1456 = vmatpush1.msra.mxu0 %v178
      %1457 = vmatprep.subr.mxu0 0.0
      %1458 = vmatpush1.msra.mxu0 %v179
      %1459 = vmatprep.subr.mxu0 0.0
      %1460 = vmatpush1.msra.mxu0 %v180
      %1461 = vmatprep.subr.mxu0 0.0
      %1462 = vmatpush1.msra.mxu0 %v181
      %1463 = vmatprep.subr.mxu0 0.0
      %1464 = vmatpush1.msra.mxu0 %v182
      %1465 = vmatprep.subr.mxu0 0.0
      %1466 = vmatpush1.msra.mxu0 %v183
      %1467 = vmatprep.subr.mxu0 0.0
      %1468 = vmatpush1.msra.mxu0 %v184
      %1469 = vmatprep.subr.mxu0 0.0
      %1470 = vmatpush1.msra.mxu0 %v185
      %1471 = vmatprep.subr.mxu0 0.0
      %1472 = vmatpush1.msra.mxu0 %v186
      %1473 = vmatprep.subr.mxu0 0.0
      %1474 = vmatpush1.msra.mxu0 0.0
      %1475 = vmatprep.subr.mxu0 0.0
      %1476 = vmatpush1.msra.mxu0 0.0
      %1477 = vmatprep.subr.mxu0 0.0
      %1478 = vmatpush1.msra.mxu0 0.0
      %1479 = vmatprep.subr.mxu0 0.0
      %1480 = vmatpush1.msra.mxu0 0.0
      %1481 = vmatprep.subr.mxu0 0.0
      %1482 = vmatpush1.msra.mxu0 0.0
      %1483 = vmatprep.subr.mxu0 0.0
      %1484 = vmatpush1.msra.mxu0 0.0
      %1485 = vmatprep.subr.mxu0 0.0
      %1486 = vmatpush1.msra.mxu0 0.0
      %1487 = vmatprep.subr.mxu0 0.0
      %1488 = vmatpush1.msra.mxu0 0.0
      %1489 = vmatprep.subr.mxu0 0.0
      %1490 = vmatpush1.msra.mxu0 0.0
      %1491 = vmatprep.subr.mxu0 0.0
      %1492 = vmatpush1.msra.mxu0 0.0
      %1493 = vmatprep.subr.mxu0 0.0
      %1494 = vmatpush1.msra.mxu0 0.0
      %1495 = vmatprep.subr.mxu0 0.0
      %1496 = vmatpush1.msra.mxu0 0.0
      %1497 = vmatprep.subr.mxu0 0.0
      %1498 = vmatpush1.msra.mxu0 0.0
      %1499 = vmatprep.subr.mxu0 0.0
      %1500 = vmatpush1.msra.mxu0 0.0
      %1501 = vmatprep.subr.mxu0 0.0
      %1502 = vmatpush1.msra.mxu0 0.0
      %1503 = vmatprep.subr.mxu0 0.0
      %1504 = vmatpush1.msra.mxu0 0.0
      %1505 = vmatprep.mubr.f32.mxu0 0.0
      %1506 = vmatmul.mubr.f32.gmra.mrb[0].mxu0 %v1434
      %v1507 = vpop.f32.mrb[0].mxu0
      %v1508 = vadd.f32 %v199, %v1507
      %v1509 = vpop.f32.mrb[0].mxu0
      %1510 = vmatprep.mubr.f32.mxu0 0.0
      %1511 = vmatmul.mubr.f32.gmra.mrb[0].mxu0 %v1435
      %v1512 = vpop.f32.mrb[0].mxu0
      %v1513 = vadd.f32 %v199, %v1512
      %v1514 = vpop.f32.mrb[0].mxu0
      %1515 = vmatprep.mubr.f32.mxu0 0.0
      %1516 = vmatmul.mubr.f32.gmra.mrb[0].mxu0 %v1436
      %v1517 = vpop.f32.mrb[0].mxu0
      %v1518 = vadd.f32 %v199, %v1517
      %v1519 = vpop.f32.mrb[0].mxu0
      %1520 = vmatprep.mubr.f32.mxu0 0.0
      %1521 = vmatmul.mubr.f32.gmra.mrb[0].mxu0 %v1437
      %v1522 = vpop.f32.mrb[0].mxu0
      %v1523 = vadd.f32 %v199, %v1522
      %v1524 = vpop.f32.mrb[0].mxu0
      %1525 = vmatprep.mubr.f32.mxu0 0.0
      %1526 = vmatmul.mubr.f32.gmra.mrb[0].mxu0 %v1438
      %v1527 = vpop.f32.mrb[0].mxu0
      %v1528 = vadd.f32 %v199, %v1527
      %v1529 = vpop.f32.mrb[0].mxu0
      %1530 = vmatprep.mubr.f32.mxu0 0.0
      %1531 = vmatmul.mubr.f32.gmra.mrb[0].mxu0 %v1439
      %v1532 = vpop.f32.mrb[0].mxu0
      %v1533 = vadd.f32 %v199, %v1532
      %v1534 = vpop.f32.mrb[0].mxu0
      %1535 = vmatprep.mubr.f32.mxu0 0.0
      %1536 = vmatmul.mubr.f32.gmra.mrb[0].mxu0 %v1440
      %v1537 = vpop.f32.mrb[0].mxu0
      %v1538 = vadd.f32 %v199, %v1537
      %v1539 = vpop.f32.mrb[0].mxu0
      %1540 = vdwg.mxu0
      %v1541 = vmax.f32 %v1508, 0.0
      %v1542 = vmax.f32 %v1513, 0.0
      %v1543 = vmax.f32 %v1518, 0.0
      %v1544 = vmax.f32 %v1523, 0.0
      %v1545 = vmax.f32 %v1528, 0.0
      %v1546 = vmax.f32 %v1533, 0.0
      %v1547 = vmax.f32 %v1538, 0.0
      %1548 = vst [vmem:[#allocation2] sm:$0xff] %v1541
      %1549 = vst [vmem:[#allocation2 + $0x8] sm:$0xff] %v1542
      %1550 = vst [vmem:[#allocation2 + $0x10] sm:$0xff] %v1543
      %1551 = vst [vmem:[#allocation2 + $0x18] sm:$0xff] %v1544
      %1552 = vst [vmem:[#allocation2 + $0x20] sm:$0xff] %v1545
      %1553 = vst [vmem:[#allocation2 + $0x28] sm:$0xff] %v1546
      %1554 = vst [vmem:[#allocation2 + $0x30] sm:$0xff] %v1547
      %v1555 = vld [vmem:[#allocation2] ss:$2 sm:$0xff]
      %v1556 = vld [vmem:[%s316] ss:$2 sm:$0x3f]
      %v1557 = vld [vmem:[%s318] ss:$2 sm:$0xff]
      %v1558 = vld [vmem:[%s320] ss:$2 sm:$0x3f]
      %v1559 = vld [vmem:[%s322] ss:$2 sm:$0xff]
      %v1560 = vld [vmem:[%s324] ss:$2 sm:$0x3f]
      %v1561 = vld [vmem:[%s326] ss:$2 sm:$0xff]
      %v1562 = vld [vmem:[%s328] ss:$2 sm:$0x3f]
      %v1563 = vmax.f32 %v1555, %v1557
      %v1564 = vmax.f32 %v1556, %v1558
      %v1565 = vmax.f32 %v1559, %v1561
      %v1566 = vmax.f32 %v1560, %v1562
      %v1567 = vmax.f32 %v1563, %v1565
      %v1568 = vmax.f32 %v1564, %v1566
      %1569 = vst [vmem:[%s170 + $0x7e] sm:$0xff] %v1567
      %1570 = vst [vmem:[%s170 + $0x86] sm:$0x3f] %v1568
      %v1571 = vld [vmem:[%s165 + $0x230] sm:$0xff]
      %v1572 = vld [vmem:[%s165 + $0x238] sm:$0xff]
      %v1573 = vld [vmem:[%s165 + $0x240] sm:$0xff]
      %v1574 = vld [vmem:[%s165 + $0x248] sm:$0xff]
      %v1575 = vld [vmem:[%s165 + $0x250] sm:$0xff]
      %v1576 = vld [vmem:[%s165 + $0x258] sm:$0xff]
      %v1577 = vld [vmem:[%s165 + $0x260] sm:$0xff]
      %1578 = vmatprep.subr.mxu0 0.0
      %1579 = vmatpush1.msra.mxu0 %v171
      %1580 = vmatprep.subr.mxu0 0.0
      %1581 = vmatpush1.msra.mxu0 %v172
      %1582 = vmatprep.subr.mxu0 0.0
      %1583 = vmatpush1.msra.mxu0 %v173
      %1584 = vmatprep.subr.mxu0 0.0
      %1585 = vmatpush1.msra.mxu0 %v174
      %1586 = vmatprep.subr.mxu0 0.0
      %1587 = vmatpush1.msra.mxu0 %v175
      %1588 = vmatprep.subr.mxu0 0.0
      %1589 = vmatpush1.msra.mxu0 %v176
      %1590 = vmatprep.subr.mxu0 0.0
      %1591 = vmatpush1.msra.mxu0 %v177
      %1592 = vmatprep.subr.mxu0 0.0
      %1593 = vmatpush1.msra.mxu0 %v178
      %1594 = vmatprep.subr.mxu0 0.0
      %1595 = vmatpush1.msra.mxu0 %v179
      %1596 = vmatprep.subr.mxu0 0.0
      %1597 = vmatpush1.msra.mxu0 %v180
      %1598 = vmatprep.subr.mxu0 0.0
      %1599 = vmatpush1.msra.mxu0 %v181
      %1600 = vmatprep.subr.mxu0 0.0
      %1601 = vmatpush1.msra.mxu0 %v182
      %1602 = vmatprep.subr.mxu0 0.0
      %1603 = vmatpush1.msra.mxu0 %v183
      %1604 = vmatprep.subr.mxu0 0.0
      %1605 = vmatpush1.msra.mxu0 %v184
      %1606 = vmatprep.subr.mxu0 0.0
      %1607 = vmatpush1.msra.mxu0 %v185
      %1608 = vmatprep.subr.mxu0 0.0
      %1609 = vmatpush1.msra.mxu0 %v186
      %1610 = vmatprep.subr.mxu0 0.0
      %1611 = vmatpush1.msra.mxu0 0.0
      %1612 = vmatprep.subr.mxu0 0.0
      %1613 = vmatpush1.msra.mxu0 0.0
      %1614 = vmatprep.subr.mxu0 0.0
      %1615 = vmatpush1.msra.mxu0 0.0
      %1616 = vmatprep.subr.mxu0 0.0
      %1617 = vmatpush1.msra.mxu0 0.0
      %1618 = vmatprep.subr.mxu0 0.0
      %1619 = vmatpush1.msra.mxu0 0.0
      %1620 = vmatprep.subr.mxu0 0.0
      %1621 = vmatpush1.msra.mxu0 0.0
      %1622 = vmatprep.subr.mxu0 0.0
      %1623 = vmatpush1.msra.mxu0 0.0
      %1624 = vmatprep.subr.mxu0 0.0
      %1625 = vmatpush1.msra.mxu0 0.0
      %1626 = vmatprep.subr.mxu0 0.0
      %1627 = vmatpush1.msra.mxu0 0.0
      %1628 = vmatprep.subr.mxu0 0.0
      %1629 = vmatpush1.msra.mxu0 0.0
      %1630 = vmatprep.subr.mxu0 0.0
      %1631 = vmatpush1.msra.mxu0 0.0
      %1632 = vmatprep.subr.mxu0 0.0
      %1633 = vmatpush1.msra.mxu0 0.0
      %1634 = vmatprep.subr.mxu0 0.0
      %1635 = vmatpush1.msra.mxu0 0.0
      %1636 = vmatprep.subr.mxu0 0.0
      %1637 = vmatpush1.msra.mxu0 0.0
      %1638 = vmatprep.subr.mxu0 0.0
      %1639 = vmatpush1.msra.mxu0 0.0
      %1640 = vmatprep.subr.mxu0 0.0
      %1641 = vmatpush1.msra.mxu0 0.0
      %1642 = vmatprep.mubr.f32.mxu0 0.0
      %1643 = vmatmul.mubr.f32.gmra.mrb[0].mxu0 %v1571
      %v1644 = vpop.f32.mrb[0].mxu0
      %v1645 = vadd.f32 %v199, %v1644
      %v1646 = vpop.f32.mrb[0].mxu0
      %1647 = vmatprep.mubr.f32.mxu0 0.0
      %1648 = vmatmul.mubr.f32.gmra.mrb[0].mxu0 %v1572
      %v1649 = vpop.f32.mrb[0].mxu0
      %v1650 = vadd.f32 %v199, %v1649
      %v1651 = vpop.f32.mrb[0].mxu0
      %1652 = vmatprep.mubr.f32.mxu0 0.0
      %1653 = vmatmul.mubr.f32.gmra.mrb[0].mxu0 %v1573
      %v1654 = vpop.f32.mrb[0].mxu0
      %v1655 = vadd.f32 %v199, %v1654
      %v1656 = vpop.f32.mrb[0].mxu0
      %1657 = vmatprep.mubr.f32.mxu0 0.0
      %1658 = vmatmul.mubr.f32.gmra.mrb[0].mxu0 %v1574
      %v1659 = vpop.f32.mrb[0].mxu0
      %v1660 = vadd.f32 %v199, %v1659
      %v1661 = vpop.f32.mrb[0].mxu0
      %1662 = vmatprep.mubr.f32.mxu0 0.0
      %1663 = vmatmul.mubr.f32.gmra.mrb[0].mxu0 %v1575
      %v1664 = vpop.f32.mrb[0].mxu0
      %v1665 = vadd.f32 %v199, %v1664
      %v1666 = vpop.f32.mrb[0].mxu0
      %1667 = vmatprep.mubr.f32.mxu0 0.0
      %1668 = vmatmul.mubr.f32.gmra.mrb[0].mxu0 %v1576
      %v1669 = vpop.f32.mrb[0].mxu0
      %v1670 = vadd.f32 %v199, %v1669
      %v1671 = vpop.f32.mrb[0].mxu0
      %1672 = vmatprep.mubr.f32.mxu0 0.0
      %1673 = vmatmul.mubr.f32.gmra.mrb[0].mxu0 %v1577
      %v1674 = vpop.f32.mrb[0].mxu0
      %v1675 = vadd.f32 %v199, %v1674
      %v1676 = vpop.f32.mrb[0].mxu0
      %1677 = vdwg.mxu0
      %v1678 = vmax.f32 %v1645, 0.0
      %v1679 = vmax.f32 %v1650, 0.0
      %v1680 = vmax.f32 %v1655, 0.0
      %v1681 = vmax.f32 %v1660, 0.0
      %v1682 = vmax.f32 %v1665, 0.0
      %v1683 = vmax.f32 %v1670, 0.0
      %v1684 = vmax.f32 %v1675, 0.0
      %1685 = vst [vmem:[#allocation2] sm:$0xff] %v1678
      %1686 = vst [vmem:[#allocation2 + $0x8] sm:$0xff] %v1679
      %1687 = vst [vmem:[#allocation2 + $0x10] sm:$0xff] %v1680
      %1688 = vst [vmem:[#allocation2 + $0x18] sm:$0xff] %v1681
      %1689 = vst [vmem:[#allocation2 + $0x20] sm:$0xff] %v1682
      %1690 = vst [vmem:[#allocation2 + $0x28] sm:$0xff] %v1683
      %1691 = vst [vmem:[#allocation2 + $0x30] sm:$0xff] %v1684
      %v1692 = vld [vmem:[#allocation2] ss:$2 sm:$0xff]
      %v1693 = vld [vmem:[%s316] ss:$2 sm:$0x3f]
      %v1694 = vld [vmem:[%s318] ss:$2 sm:$0xff]
      %v1695 = vld [vmem:[%s320] ss:$2 sm:$0x3f]
      %v1696 = vld [vmem:[%s322] ss:$2 sm:$0xff]
      %v1697 = vld [vmem:[%s324] ss:$2 sm:$0x3f]
      %v1698 = vld [vmem:[%s326] ss:$2 sm:$0xff]
      %v1699 = vld [vmem:[%s328] ss:$2 sm:$0x3f]
      %v1700 = vmax.f32 %v1692, %v1694
      %v1701 = vmax.f32 %v1693, %v1695
      %v1702 = vmax.f32 %v1696, %v1698
      %v1703 = vmax.f32 %v1697, %v1699
      %v1704 = vmax.f32 %v1700, %v1702
      %v1705 = vmax.f32 %v1701, %v1703
      %1706 = vst [vmem:[%s170 + $0x8c] sm:$0xff] %v1704
      %1707 = vst [vmem:[%s170 + $0x94] sm:$0x3f] %v1705
      %v1708 = vld [vmem:[%s165 + $0x268] sm:$0xff]
      %v1709 = vld [vmem:[%s165 + $0x270] sm:$0xff]
      %v1710 = vld [vmem:[%s165 + $0x278] sm:$0xff]
      %v1711 = vld [vmem:[%s165 + $0x280] sm:$0xff]
      %v1712 = vld [vmem:[%s165 + $0x288] sm:$0xff]
      %v1713 = vld [vmem:[%s165 + $0x290] sm:$0xff]
      %v1714 = vld [vmem:[%s165 + $0x298] sm:$0xff]
      %1715 = vmatprep.subr.mxu0 0.0
      %1716 = vmatpush1.msra.mxu0 %v171
      %1717 = vmatprep.subr.mxu0 0.0
      %1718 = vmatpush1.msra.mxu0 %v172
      %1719 = vmatprep.subr.mxu0 0.0
      %1720 = vmatpush1.msra.mxu0 %v173
      %1721 = vmatprep.subr.mxu0 0.0
      %1722 = vmatpush1.msra.mxu0 %v174
      %1723 = vmatprep.subr.mxu0 0.0
      %1724 = vmatpush1.msra.mxu0 %v175
      %1725 = vmatprep.subr.mxu0 0.0
      %1726 = vmatpush1.msra.mxu0 %v176
      %1727 = vmatprep.subr.mxu0 0.0
      %1728 = vmatpush1.msra.mxu0 %v177
      %1729 = vmatprep.subr.mxu0 0.0
      %1730 = vmatpush1.msra.mxu0 %v178
      %1731 = vmatprep.subr.mxu0 0.0
      %1732 = vmatpush1.msra.mxu0 %v179
      %1733 = vmatprep.subr.mxu0 0.0
      %1734 = vmatpush1.msra.mxu0 %v180
      %1735 = vmatprep.subr.mxu0 0.0
      %1736 = vmatpush1.msra.mxu0 %v181
      %1737 = vmatprep.subr.mxu0 0.0
      %1738 = vmatpush1.msra.mxu0 %v182
      %1739 = vmatprep.subr.mxu0 0.0
      %1740 = vmatpush1.msra.mxu0 %v183
      %1741 = vmatprep.subr.mxu0 0.0
      %1742 = vmatpush1.msra.mxu0 %v184
      %1743 = vmatprep.subr.mxu0 0.0
      %1744 = vmatpush1.msra.mxu0 %v185
      %1745 = vmatprep.subr.mxu0 0.0
      %1746 = vmatpush1.msra.mxu0 %v186
      %1747 = vmatprep.subr.mxu0 0.0
      %1748 = vmatpush1.msra.mxu0 0.0
      %1749 = vmatprep.subr.mxu0 0.0
      %1750 = vmatpush1.msra.mxu0 0.0
      %1751 = vmatprep.subr.mxu0 0.0
      %1752 = vmatpush1.msra.mxu0 0.0
      %1753 = vmatprep.subr.mxu0 0.0
      %1754 = vmatpush1.msra.mxu0 0.0
      %1755 = vmatprep.subr.mxu0 0.0
      %1756 = vmatpush1.msra.mxu0 0.0
      %1757 = vmatprep.subr.mxu0 0.0
      %1758 = vmatpush1.msra.mxu0 0.0
      %1759 = vmatprep.subr.mxu0 0.0
      %1760 = vmatpush1.msra.mxu0 0.0
      %1761 = vmatprep.subr.mxu0 0.0
      %1762 = vmatpush1.msra.mxu0 0.0
      %1763 = vmatprep.subr.mxu0 0.0
      %1764 = vmatpush1.msra.mxu0 0.0
      %1765 = vmatprep.subr.mxu0 0.0
      %1766 = vmatpush1.msra.mxu0 0.0
      %1767 = vmatprep.subr.mxu0 0.0
      %1768 = vmatpush1.msra.mxu0 0.0
      %1769 = vmatprep.subr.mxu0 0.0
      %1770 = vmatpush1.msra.mxu0 0.0
      %1771 = vmatprep.subr.mxu0 0.0
      %1772 = vmatpush1.msra.mxu0 0.0
      %1773 = vmatprep.subr.mxu0 0.0
      %1774 = vmatpush1.msra.mxu0 0.0
      %1775 = vmatprep.subr.mxu0 0.0
      %1776 = vmatpush1.msra.mxu0 0.0
      %1777 = vmatprep.subr.mxu0 0.0
      %1778 = vmatpush1.msra.mxu0 0.0
      %1779 = vmatprep.mubr.f32.mxu0 0.0
      %1780 = vmatmul.mubr.f32.gmra.mrb[0].mxu0 %v1708
      %v1781 = vpop.f32.mrb[0].mxu0
      %v1782 = vadd.f32 %v199, %v1781
      %v1783 = vpop.f32.mrb[0].mxu0
      %1784 = vmatprep.mubr.f32.mxu0 0.0
      %1785 = vmatmul.mubr.f32.gmra.mrb[0].mxu0 %v1709
      %v1786 = vpop.f32.mrb[0].mxu0
      %v1787 = vadd.f32 %v199, %v1786
      %v1788 = vpop.f32.mrb[0].mxu0
      %1789 = vmatprep.mubr.f32.mxu0 0.0
      %1790 = vmatmul.mubr.f32.gmra.mrb[0].mxu0 %v1710
      %v1791 = vpop.f32.mrb[0].mxu0
      %v1792 = vadd.f32 %v199, %v1791
      %v1793 = vpop.f32.mrb[0].mxu0
      %1794 = vmatprep.mubr.f32.mxu0 0.0
      %1795 = vmatmul.mubr.f32.gmra.mrb[0].mxu0 %v1711
      %v1796 = vpop.f32.mrb[0].mxu0
      %v1797 = vadd.f32 %v199, %v1796
      %v1798 = vpop.f32.mrb[0].mxu0
      %1799 = vmatprep.mubr.f32.mxu0 0.0
      %1800 = vmatmul.mubr.f32.gmra.mrb[0].mxu0 %v1712
      %v1801 = vpop.f32.mrb[0].mxu0
      %v1802 = vadd.f32 %v199, %v1801
      %v1803 = vpop.f32.mrb[0].mxu0
      %1804 = vmatprep.mubr.f32.mxu0 0.0
      %1805 = vmatmul.mubr.f32.gmra.mrb[0].mxu0 %v1713
      %v1806 = vpop.f32.mrb[0].mxu0
      %v1807 = vadd.f32 %v199, %v1806
      %v1808 = vpop.f32.mrb[0].mxu0
      %1809 = vmatprep.mubr.f32.mxu0 0.0
      %1810 = vmatmul.mubr.f32.gmra.mrb[0].mxu0 %v1714
      %v1811 = vpop.f32.mrb[0].mxu0
      %v1812 = vadd.f32 %v199, %v1811
      %v1813 = vpop.f32.mrb[0].mxu0
      %1814 = vdwg.mxu0
      %v1815 = vmax.f32 %v1782, 0.0
      %v1816 = vmax.f32 %v1787, 0.0
      %v1817 = vmax.f32 %v1792, 0.0
      %v1818 = vmax.f32 %v1797, 0.0
      %v1819 = vmax.f32 %v1802, 0.0
      %v1820 = vmax.f32 %v1807, 0.0
      %v1821 = vmax.f32 %v1812, 0.0
      %1822 = vst [vmem:[#allocation2] sm:$0xff] %v1815
      %1823 = vst [vmem:[#allocation2 + $0x8] sm:$0xff] %v1816
      %1824 = vst [vmem:[#allocation2 + $0x10] sm:$0xff] %v1817
      %1825 = vst [vmem:[#allocation2 + $0x18] sm:$0xff] %v1818
      %1826 = vst [vmem:[#allocation2 + $0x20] sm:$0xff] %v1819
      %1827 = vst [vmem:[#allocation2 + $0x28] sm:$0xff] %v1820
      %1828 = vst [vmem:[#allocation2 + $0x30] sm:$0xff] %v1821
      %v1829 = vld [vmem:[#allocation2] ss:$2 sm:$0xff]
      %v1830 = vld [vmem:[%s316] ss:$2 sm:$0x3f]
      %v1831 = vld [vmem:[%s318] ss:$2 sm:$0xff]
      %v1832 = vld [vmem:[%s320] ss:$2 sm:$0x3f]
      %v1833 = vld [vmem:[%s322] ss:$2 sm:$0xff]
      %v1834 = vld [vmem:[%s324] ss:$2 sm:$0x3f]
      %v1835 = vld [vmem:[%s326] ss:$2 sm:$0xff]
      %v1836 = vld [vmem:[%s328] ss:$2 sm:$0x3f]
      %v1837 = vmax.f32 %v1829, %v1831
      %v1838 = vmax.f32 %v1830, %v1832
      %v1839 = vmax.f32 %v1833, %v1835
      %v1840 = vmax.f32 %v1834, %v1836
      %v1841 = vmax.f32 %v1837, %v1839
      %v1842 = vmax.f32 %v1838, %v1840
      %1843 = vst [vmem:[%s170 + $0x9a] sm:$0xff] %v1841
      %1844 = vst [vmem:[%s170 + $0xa2] sm:$0x3f] %v1842
      %v1845 = vld [vmem:[%s165 + $0x2a0] sm:$0xff]
      %v1846 = vld [vmem:[%s165 + $0x2a8] sm:$0xff]
      %v1847 = vld [vmem:[%s165 + $0x2b0] sm:$0xff]
      %v1848 = vld [vmem:[%s165 + $0x2b8] sm:$0xff]
      %v1849 = vld [vmem:[%s165 + $0x2c0] sm:$0xff]
      %v1850 = vld [vmem:[%s165 + $0x2c8] sm:$0xff]
      %v1851 = vld [vmem:[%s165 + $0x2d0] sm:$0xff]
      %1852 = vmatprep.subr.mxu0 0.0
      %1853 = vmatpush1.msra.mxu0 %v171
      %1854 = vmatprep.subr.mxu0 0.0
      %1855 = vmatpush1.msra.mxu0 %v172
      %1856 = vmatprep.subr.mxu0 0.0
      %1857 = vmatpush1.msra.mxu0 %v173
      %1858 = vmatprep.subr.mxu0 0.0
      %1859 = vmatpush1.msra.mxu0 %v174
      %1860 = vmatprep.subr.mxu0 0.0
      %1861 = vmatpush1.msra.mxu0 %v175
      %1862 = vmatprep.subr.mxu0 0.0
      %1863 = vmatpush1.msra.mxu0 %v176
      %1864 = vmatprep.subr.mxu0 0.0
      %1865 = vmatpush1.msra.mxu0 %v177
      %1866 = vmatprep.subr.mxu0 0.0
      %1867 = vmatpush1.msra.mxu0 %v178
      %1868 = vmatprep.subr.mxu0 0.0
      %1869 = vmatpush1.msra.mxu0 %v179
      %1870 = vmatprep.subr.mxu0 0.0
      %1871 = vmatpush1.msra.mxu0 %v180
      %1872 = vmatprep.subr.mxu0 0.0
      %1873 = vmatpush1.msra.mxu0 %v181
      %1874 = vmatprep.subr.mxu0 0.0
      %1875 = vmatpush1.msra.mxu0 %v182
      %1876 = vmatprep.subr.mxu0 0.0
      %1877 = vmatpush1.msra.mxu0 %v183
      %1878 = vmatprep.subr.mxu0 0.0
      %1879 = vmatpush1.msra.mxu0 %v184
      %1880 = vmatprep.subr.mxu0 0.0
      %1881 = vmatpush1.msra.mxu0 %v185
      %1882 = vmatprep.subr.mxu0 0.0
      %1883 = vmatpush1.msra.mxu0 %v186
      %1884 = vmatprep.subr.mxu0 0.0
      %1885 = vmatpush1.msra.mxu0 0.0
      %1886 = vmatprep.subr.mxu0 0.0
      %1887 = vmatpush1.msra.mxu0 0.0
      %1888 = vmatprep.subr.mxu0 0.0
      %1889 = vmatpush1.msra.mxu0 0.0
      %1890 = vmatprep.subr.mxu0 0.0
      %1891 = vmatpush1.msra.mxu0 0.0
      %1892 = vmatprep.subr.mxu0 0.0
      %1893 = vmatpush1.msra.mxu0 0.0
      %1894 = vmatprep.subr.mxu0 0.0
      %1895 = vmatpush1.msra.mxu0 0.0
      %1896 = vmatprep.subr.mxu0 0.0
      %1897 = vmatpush1.msra.mxu0 0.0
      %1898 = vmatprep.subr.mxu0 0.0
      %1899 = vmatpush1.msra.mxu0 0.0
      %1900 = vmatprep.subr.mxu0 0.0
      %1901 = vmatpush1.msra.mxu0 0.0
      %1902 = vmatprep.subr.mxu0 0.0
      %1903 = vmatpush1.msra.mxu0 0.0
      %1904 = vmatprep.subr.mxu0 0.0
      %1905 = vmatpush1.msra.mxu0 0.0
      %1906 = vmatprep.subr.mxu0 0.0
      %1907 = vmatpush1.msra.mxu0 0.0
      %1908 = vmatprep.subr.mxu0 0.0
      %1909 = vmatpush1.msra.mxu0 0.0
      %1910 = vmatprep.subr.mxu0 0.0
      %1911 = vmatpush1.msra.mxu0 0.0
      %1912 = vmatprep.subr.mxu0 0.0
      %1913 = vmatpush1.msra.mxu0 0.0
      %1914 = vmatprep.subr.mxu0 0.0
      %1915 = vmatpush1.msra.mxu0 0.0
      %1916 = vmatprep.mubr.f32.mxu0 0.0
      %1917 = vmatmul.mubr.f32.gmra.mrb[0].mxu0 %v1845
      %v1918 = vpop.f32.mrb[0].mxu0
      %v1919 = vadd.f32 %v199, %v1918
      %v1920 = vpop.f32.mrb[0].mxu0
      %1921 = vmatprep.mubr.f32.mxu0 0.0
      %1922 = vmatmul.mubr.f32.gmra.mrb[0].mxu0 %v1846
      %v1923 = vpop.f32.mrb[0].mxu0
      %v1924 = vadd.f32 %v199, %v1923
      %v1925 = vpop.f32.mrb[0].mxu0
      %1926 = vmatprep.mubr.f32.mxu0 0.0
      %1927 = vmatmul.mubr.f32.gmra.mrb[0].mxu0 %v1847
      %v1928 = vpop.f32.mrb[0].mxu0
      %v1929 = vadd.f32 %v199, %v1928
      %v1930 = vpop.f32.mrb[0].mxu0
      %1931 = vmatprep.mubr.f32.mxu0 0.0
      %1932 = vmatmul.mubr.f32.gmra.mrb[0].mxu0 %v1848
      %v1933 = vpop.f32.mrb[0].mxu0
      %v1934 = vadd.f32 %v199, %v1933
      %v1935 = vpop.f32.mrb[0].mxu0
      %1936 = vmatprep.mubr.f32.mxu0 0.0
      %1937 = vmatmul.mubr.f32.gmra.mrb[0].mxu0 %v1849
      %v1938 = vpop.f32.mrb[0].mxu0
      %v1939 = vadd.f32 %v199, %v1938
      %v1940 = vpop.f32.mrb[0].mxu0
      %1941 = vmatprep.mubr.f32.mxu0 0.0
      %1942 = vmatmul.mubr.f32.gmra.mrb[0].mxu0 %v1850
      %v1943 = vpop.f32.mrb[0].mxu0
      %v1944 = vadd.f32 %v199, %v1943
      %v1945 = vpop.f32.mrb[0].mxu0
      %1946 = vmatprep.mubr.f32.mxu0 0.0
      %1947 = vmatmul.mubr.f32.gmra.mrb[0].mxu0 %v1851
      %v1948 = vpop.f32.mrb[0].mxu0
      %v1949 = vadd.f32 %v199, %v1948
      %v1950 = vpop.f32.mrb[0].mxu0
      %1951 = vdwg.mxu0
      %v1952 = vmax.f32 %v1919, 0.0
      %v1953 = vmax.f32 %v1924, 0.0
      %v1954 = vmax.f32 %v1929, 0.0
      %v1955 = vmax.f32 %v1934, 0.0
      %v1956 = vmax.f32 %v1939, 0.0
      %v1957 = vmax.f32 %v1944, 0.0
      %v1958 = vmax.f32 %v1949, 0.0
      %1959 = vst [vmem:[#allocation2] sm:$0xff] %v1952
      %1960 = vst [vmem:[#allocation2 + $0x8] sm:$0xff] %v1953
      %1961 = vst [vmem:[#allocation2 + $0x10] sm:$0xff] %v1954
      %1962 = vst [vmem:[#allocation2 + $0x18] sm:$0xff] %v1955
      %1963 = vst [vmem:[#allocation2 + $0x20] sm:$0xff] %v1956
      %1964 = vst [vmem:[#allocation2 + $0x28] sm:$0xff] %v1957
      %1965 = vst [vmem:[#allocation2 + $0x30] sm:$0xff] %v1958
      %v1966 = vld [vmem:[#allocation2] ss:$2 sm:$0xff]
      %v1967 = vld [vmem:[%s316] ss:$2 sm:$0x3f]
      %v1968 = vld [vmem:[%s318] ss:$2 sm:$0xff]
      %v1969 = vld [vmem:[%s320] ss:$2 sm:$0x3f]
      %v1970 = vld [vmem:[%s322] ss:$2 sm:$0xff]
      %v1971 = vld [vmem:[%s324] ss:$2 sm:$0x3f]
      %v1972 = vld [vmem:[%s326] ss:$2 sm:$0xff]
      %v1973 = vld [vmem:[%s328] ss:$2 sm:$0x3f]
      %v1974 = vmax.f32 %v1966, %v1968
      %v1975 = vmax.f32 %v1967, %v1969
      %v1976 = vmax.f32 %v1970, %v1972
      %v1977 = vmax.f32 %v1971, %v1973
      %v1978 = vmax.f32 %v1974, %v1976
      %v1979 = vmax.f32 %v1975, %v1977
      %1980 = vst [vmem:[%s170 + $0xa8] sm:$0xff] %v1978
      %1981 = vst [vmem:[%s170 + $0xb0] sm:$0x3f] %v1979
      %v1982 = vld [vmem:[%s165 + $0x2d8] sm:$0xff]
      %v1983 = vld [vmem:[%s165 + $0x2e0] sm:$0xff]
      %v1984 = vld [vmem:[%s165 + $0x2e8] sm:$0xff]
      %v1985 = vld [vmem:[%s165 + $0x2f0] sm:$0xff]
      %v1986 = vld [vmem:[%s165 + $0x2f8] sm:$0xff]
      %v1987 = vld [vmem:[%s165 + $0x300] sm:$0xff]
      %v1988 = vld [vmem:[%s165 + $0x308] sm:$0xff]
      %1989 = vmatprep.subr.mxu0 0.0
      %1990 = vmatpush1.msra.mxu0 %v171
      %1991 = vmatprep.subr.mxu0 0.0
      %1992 = vmatpush1.msra.mxu0 %v172
      %1993 = vmatprep.subr.mxu0 0.0
      %1994 = vmatpush1.msra.mxu0 %v173
      %1995 = vmatprep.subr.mxu0 0.0
      %1996 = vmatpush1.msra.mxu0 %v174
      %1997 = vmatprep.subr.mxu0 0.0
      %1998 = vmatpush1.msra.mxu0 %v175
      %1999 = vmatprep.subr.mxu0 0.0
      %2000 = vmatpush1.msra.mxu0 %v176
      %2001 = vmatprep.subr.mxu0 0.0
      %2002 = vmatpush1.msra.mxu0 %v177
      %2003 = vmatprep.subr.mxu0 0.0
      %2004 = vmatpush1.msra.mxu0 %v178
      %2005 = vmatprep.subr.mxu0 0.0
      %2006 = vmatpush1.msra.mxu0 %v179
      %2007 = vmatprep.subr.mxu0 0.0
      %2008 = vmatpush1.msra.mxu0 %v180
      %2009 = vmatprep.subr.mxu0 0.0
      %2010 = vmatpush1.msra.mxu0 %v181
      %2011 = vmatprep.subr.mxu0 0.0
      %2012 = vmatpush1.msra.mxu0 %v182
      %2013 = vmatprep.subr.mxu0 0.0
      %2014 = vmatpush1.msra.mxu0 %v183
      %2015 = vmatprep.subr.mxu0 0.0
      %2016 = vmatpush1.msra.mxu0 %v184
      %2017 = vmatprep.subr.mxu0 0.0
      %2018 = vmatpush1.msra.mxu0 %v185
      %2019 = vmatprep.subr.mxu0 0.0
      %2020 = vmatpush1.msra.mxu0 %v186
      %2021 = vmatprep.subr.mxu0 0.0
      %2022 = vmatpush1.msra.mxu0 0.0
      %2023 = vmatprep.subr.mxu0 0.0
      %2024 = vmatpush1.msra.mxu0 0.0
      %2025 = vmatprep.subr.mxu0 0.0
      %2026 = vmatpush1.msra.mxu0 0.0
      %2027 = vmatprep.subr.mxu0 0.0
      %2028 = vmatpush1.msra.mxu0 0.0
      %2029 = vmatprep.subr.mxu0 0.0
      %2030 = vmatpush1.msra.mxu0 0.0
      %2031 = vmatprep.subr.mxu0 0.0
      %2032 = vmatpush1.msra.mxu0 0.0
      %2033 = vmatprep.subr.mxu0 0.0
      %2034 = vmatpush1.msra.mxu0 0.0
      %2035 = vmatprep.subr.mxu0 0.0
      %2036 = vmatpush1.msra.mxu0 0.0
      %2037 = vmatprep.subr.mxu0 0.0
      %2038 = vmatpush1.msra.mxu0 0.0
      %2039 = vmatprep.subr.mxu0 0.0
      %2040 = vmatpush1.msra.mxu0 0.0
      %2041 = vmatprep.subr.mxu0 0.0
      %2042 = vmatpush1.msra.mxu0 0.0
      %2043 = vmatprep.subr.mxu0 0.0
      %2044 = vmatpush1.msra.mxu0 0.0
      %2045 = vmatprep.subr.mxu0 0.0
      %2046 = vmatpush1.msra.mxu0 0.0
      %2047 = vmatprep.subr.mxu0 0.0
      %2048 = vmatpush1.msra.mxu0 0.0
      %2049 = vmatprep.subr.mxu0 0.0
      %2050 = vmatpush1.msra.mxu0 0.0
      %2051 = vmatprep.subr.mxu0 0.0
      %2052 = vmatpush1.msra.mxu0 0.0
      %2053 = vmatprep.mubr.f32.mxu0 0.0
      %2054 = vmatmul.mubr.f32.gmra.mrb[0].mxu0 %v1982
      %v2055 = vpop.f32.mrb[0].mxu0
      %v2056 = vadd.f32 %v199, %v2055
      %v2057 = vpop.f32.mrb[0].mxu0
      %2058 = vmatprep.mubr.f32.mxu0 0.0
      %2059 = vmatmul.mubr.f32.gmra.mrb[0].mxu0 %v1983
      %v2060 = vpop.f32.mrb[0].mxu0
      %v2061 = vadd.f32 %v199, %v2060
      %v2062 = vpop.f32.mrb[0].mxu0
      %2063 = vmatprep.mubr.f32.mxu0 0.0
      %2064 = vmatmul.mubr.f32.gmra.mrb[0].mxu0 %v1984
      %v2065 = vpop.f32.mrb[0].mxu0
      %v2066 = vadd.f32 %v199, %v2065
      %v2067 = vpop.f32.mrb[0].mxu0
      %2068 = vmatprep.mubr.f32.mxu0 0.0
      %2069 = vmatmul.mubr.f32.gmra.mrb[0].mxu0 %v1985
      %v2070 = vpop.f32.mrb[0].mxu0
      %v2071 = vadd.f32 %v199, %v2070
      %v2072 = vpop.f32.mrb[0].mxu0
      %2073 = vmatprep.mubr.f32.mxu0 0.0
      %2074 = vmatmul.mubr.f32.gmra.mrb[0].mxu0 %v1986
      %v2075 = vpop.f32.mrb[0].mxu0
      %v2076 = vadd.f32 %v199, %v2075
      %v2077 = vpop.f32.mrb[0].mxu0
      %2078 = vmatprep.mubr.f32.mxu0 0.0
      %2079 = vmatmul.mubr.f32.gmra.mrb[0].mxu0 %v1987
      %v2080 = vpop.f32.mrb[0].mxu0
      %v2081 = vadd.f32 %v199, %v2080
      %v2082 = vpop.f32.mrb[0].mxu0
      %2083 = vmatprep.mubr.f32.mxu0 0.0
      %2084 = vmatmul.mubr.f32.gmra.mrb[0].mxu0 %v1988
      %v2085 = vpop.f32.mrb[0].mxu0
      %v2086 = vadd.f32 %v199, %v2085
      %v2087 = vpop.f32.mrb[0].mxu0
      %2088 = vdwg.mxu0
      %v2089 = vmax.f32 %v2056, 0.0
      %v2090 = vmax.f32 %v2061, 0.0
      %v2091 = vmax.f32 %v2066, 0.0
      %v2092 = vmax.f32 %v2071, 0.0
      %v2093 = vmax.f32 %v2076, 0.0
      %v2094 = vmax.f32 %v2081, 0.0
      %v2095 = vmax.f32 %v2086, 0.0
      %2096 = vst [vmem:[#allocation2] sm:$0xff] %v2089
      %2097 = vst [vmem:[#allocation2 + $0x8] sm:$0xff] %v2090
      %2098 = vst [vmem:[#allocation2 + $0x10] sm:$0xff] %v2091
      %2099 = vst [vmem:[#allocation2 + $0x18] sm:$0xff] %v2092
      %2100 = vst [vmem:[#allocation2 + $0x20] sm:$0xff] %v2093
      %2101 = vst [vmem:[#allocation2 + $0x28] sm:$0xff] %v2094
      %2102 = vst [vmem:[#allocation2 + $0x30] sm:$0xff] %v2095
      %v2103 = vld [vmem:[#allocation2] ss:$2 sm:$0xff]
      %v2104 = vld [vmem:[%s316] ss:$2 sm:$0x3f]
      %v2105 = vld [vmem:[%s318] ss:$2 sm:$0xff]
      %v2106 = vld [vmem:[%s320] ss:$2 sm:$0x3f]
      %v2107 = vld [vmem:[%s322] ss:$2 sm:$0xff]
      %v2108 = vld [vmem:[%s324] ss:$2 sm:$0x3f]
      %v2109 = vld [vmem:[%s326] ss:$2 sm:$0xff]
      %v2110 = vld [vmem:[%s328] ss:$2 sm:$0x3f]
      %v2111 = vmax.f32 %v2103, %v2105
      %v2112 = vmax.f32 %v2104, %v2106
      %v2113 = vmax.f32 %v2107, %v2109
      %v2114 = vmax.f32 %v2108, %v2110
      %v2115 = vmax.f32 %v2111, %v2113
      %v2116 = vmax.f32 %v2112, %v2114
      %2117 = vst [vmem:[%s170 + $0xb6] sm:$0xff] %v2115
      %2118 = vst [vmem:[%s170 + $0xbe] sm:$0x3f] %v2116
      %p2119 = scmp.lt.s32.totalorder %s14, 1
      %s2120 = scalar_select %p2119, %s14, 1
      %s2121 = smul.addr %s2120, 25
      %s2122 = smul.addr %s2121, 8
      %s2123 = scalar_lea.vmem %s3, %s2122
      // Predicated region
      $region33: #{cnn_old_forward.3} parent=31 // pred_check
        %p2124 = pneg %p100
      $region34: #{cnn_old_forward.3} parent=31 // pred_check_branch
        %2126 = sbr.rel (%p2124) target = $region36
      $region35: #{cnn_old_forward.3} parent=31 // pred_region
        _
      $region36: #{cnn_old_forward.3} parent=31 // pred_fallthru
        _
    $region32: #{cnn_old_forward.3} parent=5 // pred_fallthru
      _
    %p2127 = scmp.le.s32.totalorder 2, %s9
    // Predicated region
    $region37: #{cnn_old_forward.3} parent=5 // pred_check
      %p2128 = pneg %p2127
    $region38: #{cnn_old_forward.3} parent=5 // pred_check_branch
      %2130 = sbr.rel (%p2128) target = $region40
    $region39: #{cnn_old_forward.3} parent=5 // pred_region
      %s2131 = ssub.s32 %s9, 2
      // Predicated region
      $region41: #{cnn_old_forward.3} parent=39 // pred_check
        %p2132 = pneg %p106
      $region42: #{cnn_old_forward.3} parent=39 // pred_check_branch
        %2134 = sbr.rel (%p2132) target = $region44
      $region43: #{cnn_old_forward.3} parent=39 // pred_region
        %p2135 = scmp.lt.s32.totalorder %s15, 1
        %s2136 = scalar_select %p2135, %s15, 1
        %s2137 = smul.addr %s2136, 25
        %s2138 = smul.addr %s2137, 8
        %s2139 = scalar_lea.vmem %s3, %s2138
      $region44: #{cnn_old_forward.3} parent=39 // pred_fallthru
        _
    $region40: #{cnn_old_forward.3} parent=5 // pred_fallthru
      _
  $region6: #{cnn_old_forward.3} parent=0 // loop_footer
    %s13 = sadd.s32 1, %s9
  $region7: #{cnn_old_forward.3} parent=0 // loop_footer_branch
    %8 = sbr.rel target = $region3
  $region8: #{cnn_old_forward.3} parent=0 // loop_exit
    _

// kernel: cnn_old_forward.4
$region0: #{cnn_old_forward.4}
  #allocation0 [shape = 'u32[]', space=smem, size = 0x4, offset = 0x4, fixed_abs, tag = 'smem constant byte address 0x4 - core index']
  #allocation1 [shape = 'u32[144,128]{1,0:T(1,128)}', space=vmem, size = 0x12000, scoped, tag = 'internal scratch']
  #allocation2 [shape = 'f32[20,128]{1,0:T(8,128)}', space=vmem, size = 0x3000, scoped, tag = 'scratch operand']
  %s0 = inlined_call_operand.vmem [shape: f32[2,100,256], index: 0, kind: input, shape index: {}]
  %s1 = inlined_call_operand.vmem [shape: f32[256,128], index: 1, kind: input, shape index: {}]
  %s2 = inlined_call_operand.vmem [shape: f32[1,128], index: 2, kind: input, shape index: {}]
  %s3 = inlined_call_operand.vmem [shape: f32[2,25,128], index: 3, kind: output, shape index: {}]
  %s4 = sld [smem:[#allocation0]]
  $region45: #{cnn_old_forward.4} parent=0
    _
  %s6 = ssub.s32 1, %s4
  %s7 = scalar_select 0, %s6, %s4
  loop: start=0, step=1, limit=4
  $region2: #{cnn_old_forward.4} parent=0 // loop_pre_header
    _
  $region3: #{cnn_old_forward.4} parent=0 // loop_header
    %s9 = sphi 0, %s13
    %p10 = scmp.ge.s32.totalorder %s9, 4
    %s19 = sphi 0, %s21
    %s22 = sphi 0, %s19
    %s23 = sphi 0, %s22
    %s39 = sphi 0, %s23
    %s43 = sphi 0, %s43
    %s45 = sphi 0, %s43
    %s46 = sphi 0, %s45
    %s60 = sphi 0, %s46
    %s64 = sphi 0, %s64
    %s66 = sphi 0, %s64
    %s67 = sphi 0, %s66
    %s81 = sphi 0, %s67
    %s87 = sphi 0, %s89
    %s90 = sphi 0, %s87
    %s91 = sphi 0, %s90
    %s107 = sphi 0, %s91
  $region4: #{cnn_old_forward.4} parent=0 // loop_header_branch
    %12 = sbr.rel (%p10) target = $region8
  $region5: #{cnn_old_forward.4} parent=0 // loop_body
    %s14 = ssub.s32 %s9, 1
    %s15 = ssub.s32 %s9, 2
    %s16 = sadd.s32 %s9, 1
    %s17 = ssub.s32 %s9, %s16
    %p18 = scmp.eq.s32.totalorder %s17, 0
    %s20 = sadd.s32 %s19, 1
    %s21 = scalar_select %p18, %s19, %s20
    %p24 = pneg %p18
    %p25 = scmp.eq.s32.totalorder %s9, 1
    %p26 = por %p24, %p25
    %p27 = scmp.ne.s32.totalorder %s19, %s22
    %p28 = scmp.eq.s32.totalorder %s9, 0
    %p29 = por %p27, %p28
    %p30 = scmp.ne.s32.totalorder %s19, %s22
    %p31 = scmp.eq.s32.totalorder %s14, 1
    %p32 = por %p30, %p31
    %p33 = scmp.ne.s32.totalorder %s22, %s23
    %p34 = scmp.eq.s32.totalorder %s14, 0
    %p35 = por %p33, %p34
    %p36 = scmp.ne.s32.totalorder %s22, %s23
    %p37 = scmp.eq.s32.totalorder %s15, 1
    %p38 = por %p36, %p37
    %p40 = scmp.ne.s32.totalorder %s23, %s39
    %p41 = scmp.eq.s32.totalorder %s15, 0
    %p42 = por %p40, %p41
    %s44 = sadd.s32 %s43, 1
    %p47 = scmp.eq.s32.totalorder %s9, 1
    %p48 = scmp.ne.s32.totalorder %s43, %s45
    %p49 = scmp.eq.s32.totalorder %s9, 0
    %p50 = por %p48, %p49
    %p51 = scmp.ne.s32.totalorder %s43, %s45
    %p52 = scmp.eq.s32.totalorder %s14, 1
    %p53 = por %p51, %p52
    %p54 = scmp.ne.s32.totalorder %s45, %s46
    %p55 = scmp.eq.s32.totalorder %s14, 0
    %p56 = por %p54, %p55
    %p57 = scmp.ne.s32.totalorder %s45, %s46
    %p58 = scmp.eq.s32.totalorder %s15, 1
    %p59 = por %p57, %p58
    %p61 = scmp.ne.s32.totalorder %s46, %s60
    %p62 = scmp.eq.s32.totalorder %s15, 0
    %p63 = por %p61, %p62
    %s65 = sadd.s32 %s64, 1
    %p68 = scmp.eq.s32.totalorder %s9, 1
    %p69 = scmp.ne.s32.totalorder %s64, %s66
    %p70 = scmp.eq.s32.totalorder %s9, 0
    %p71 = por %p69, %p70
    %p72 = scmp.ne.s32.totalorder %s64, %s66
    %p73 = scmp.eq.s32.totalorder %s14, 1
    %p74 = por %p72, %p73
    %p75 = scmp.ne.s32.totalorder %s66, %s67
    %p76 = scmp.eq.s32.totalorder %s14, 0
    %p77 = por %p75, %p76
    %p78 = scmp.ne.s32.totalorder %s66, %s67
    %p79 = scmp.eq.s32.totalorder %s15, 1
    %p80 = por %p78, %p79
    %p82 = scmp.ne.s32.totalorder %s67, %s81
    %p83 = scmp.eq.s32.totalorder %s15, 0
    %p84 = por %p82, %p83
    %s85 = ssub.s32 %s9, %s16
    %p86 = scmp.eq.s32.totalorder %s85, 0
    %s88 = sadd.s32 %s87, 1
    %s89 = scalar_select %p86, %s87, %s88
    %p92 = pneg %p86
    %p93 = scmp.eq.s32.totalorder %s9, 1
    %p94 = por %p92, %p93
    %p95 = scmp.ne.s32.totalorder %s87, %s90
    %p96 = scmp.eq.s32.totalorder %s9, 0
    %p97 = por %p95, %p96
    %p98 = scmp.ne.s32.totalorder %s87, %s90
    %p99 = scmp.eq.s32.totalorder %s14, 1
    %p100 = por %p98, %p99
    %p101 = scmp.ne.s32.totalorder %s90, %s91
    %p102 = scmp.eq.s32.totalorder %s14, 0
    %p103 = por %p101, %p102
    %p104 = scmp.ne.s32.totalorder %s90, %s91
    %p105 = scmp.eq.s32.totalorder %s15, 1
    %p106 = por %p104, %p105
    %p108 = scmp.ne.s32.totalorder %s91, %s107
    %p109 = scmp.eq.s32.totalorder %s15, 0
    %p110 = por %p108, %p109
    %p111 = scmp.le.s32.totalorder 1, %s9
    %p112 = scmp.lt.s32.totalorder %s9, 3
    %p113 = pnand %p111, %p112
    %p114 = pneg %p113
    // Predicated region
    $region9: #{cnn_old_forward.4} parent=5 // pred_check
      _
    $region10: #{cnn_old_forward.4} parent=5 // pred_check_branch
      %116 = sbr.rel (%p113) target = $region12
    $region11: #{cnn_old_forward.4} parent=5 // pred_region
      %s117 = ssub.s32 %s9, 1
      // Predicated region
      $region13: #{cnn_old_forward.4} parent=11 // pred_check
        %p118 = pneg %p56
      $region14: #{cnn_old_forward.4} parent=11 // pred_check_branch
        %120 = sbr.rel (%p118) target = $region16
      $region15: #{cnn_old_forward.4} parent=11 // pred_region
        _
      $region16: #{cnn_old_forward.4} parent=11 // pred_fallthru
        _
      // Predicated region
      $region17: #{cnn_old_forward.4} parent=11 // pred_check
        %p121 = pneg %p77
      $region18: #{cnn_old_forward.4} parent=11 // pred_check_branch
        %123 = sbr.rel (%p121) target = $region20
      $region19: #{cnn_old_forward.4} parent=11 // pred_region
        _
      $region20: #{cnn_old_forward.4} parent=11 // pred_fallthru
        _
    $region12: #{cnn_old_forward.4} parent=5 // pred_fallthru
      _
    %p124 = scmp.lt.s32.totalorder %s9, 2
    // Predicated region
    $region21: #{cnn_old_forward.4} parent=5 // pred_check
      %p125 = pneg %p124
    $region22: #{cnn_old_forward.4} parent=5 // pred_check_branch
      %127 = sbr.rel (%p125) target = $region24
    $region23: #{cnn_old_forward.4} parent=5 // pred_region
      // Predicated region
      $region25: #{cnn_old_forward.4} parent=23 // pred_check
        %p128 = pneg %p29
      $region26: #{cnn_old_forward.4} parent=23 // pred_check_branch
        %130 = sbr.rel (%p128) target = $region28
      $region27: #{cnn_old_forward.4} parent=23 // pred_region
        %p131 = scmp.lt.s32.totalorder %s9, 1
        %s132 = scalar_select %p131, %s9, 1
        %s133 = smul.addr %s132, 26
        %s134 = smul.addr %s133, 8
        %s135 = scalar_lea.vmem %s0, %s134
      $region28: #{cnn_old_forward.4} parent=23 // pred_fallthru
        _
    $region24: #{cnn_old_forward.4} parent=5 // pred_fallthru
      _
    %p136 = scmp.le.s32.totalorder 1, %s9
    %p137 = scmp.lt.s32.totalorder %s9, 3
    %p138 = pnand %p136, %p137
    %p139 = pneg %p138
    // Predicated region
    $region29: #{cnn_old_forward.4} parent=5 // pred_check
      _
    $region30: #{cnn_old_forward.4} parent=5 // pred_check_branch
      %141 = sbr.rel (%p138) target = $region32
    $region31: #{cnn_old_forward.4} parent=5 // pred_region
      %s142 = ssub.s32 %s9, 1
      %p143 = scmp.lt.s32.totalorder %s14, 1
      %s144 = scalar_select %p143, %s14, 1
      %s145 = smul.addr %s144, 26
      %s146 = smul.addr %s145, 8
      %s147 = scalar_lea.vmem %s0, %s146
      %p148 = pneg %p35
      %p149 = pneg %p32
      %p150 = pneg %p56
      %p151 = pneg %p53
      %p152 = pneg %p77
      %p153 = pneg %p74
      %p154 = pneg %p103
      %p155 = pneg %p100
      %p156 = scmp.lt.s32.totalorder %s14, 1
      %s157 = scalar_select %p156, %s14, 1
      %s158 = smul.addr %s157, 4
      %s159 = smul.addr %s158, 8
      %s160 = scalar_lea.vmem %s3, %s159
      %p161 = scmp.lt.s32.totalorder %s14, 1
      %s162 = scalar_select %p161, %s14, 1
      %s163 = smul.addr %s162, 26
      %s164 = smul.addr %s163, 8
      %s165 = scalar_lea.vmem %s0, %s164
      %p166 = scmp.lt.s32.totalorder %s14, 1
      %s167 = scalar_select %p166, %s14, 1
      %s168 = smul.addr %s167, 4
      %s169 = smul.addr %s168, 8
      %s170 = scalar_lea.vmem %s3, %s169
      %v171 = vld [vmem:[%s1] sm:$0xff]
      %v172 = vld [vmem:[%s1 + $0x8] sm:$0xff]
      %v173 = vld [vmem:[%s1 + $0x10] sm:$0xff]
      %v174 = vld [vmem:[%s1 + $0x18] sm:$0xff]
      %v175 = vld [vmem:[%s1 + $0x20] sm:$0xff]
      %v176 = vld [vmem:[%s1 + $0x28] sm:$0xff]
      %v177 = vld [vmem:[%s1 + $0x30] sm:$0xff]
      %v178 = vld [vmem:[%s1 + $0x38] sm:$0xff]
      %v179 = vld [vmem:[%s1 + $0x40] sm:$0xff]
      %v180 = vld [vmem:[%s1 + $0x48] sm:$0xff]
      %v181 = vld [vmem:[%s1 + $0x50] sm:$0xff]
      %v182 = vld [vmem:[%s1 + $0x58] sm:$0xff]
      %v183 = vld [vmem:[%s1 + $0x60] sm:$0xff]
      %v184 = vld [vmem:[%s1 + $0x68] sm:$0xff]
      %v185 = vld [vmem:[%s1 + $0x70] sm:$0xff]
      %v186 = vld [vmem:[%s1 + $0x78] sm:$0xff]
      %v187 = vld [vmem:[%s1 + $0x80] sm:$0xff]
      %v188 = vld [vmem:[%s1 + $0x88] sm:$0xff]
      %v189 = vld [vmem:[%s1 + $0x90] sm:$0xff]
      %v190 = vld [vmem:[%s1 + $0x98] sm:$0xff]
      %v191 = vld [vmem:[%s1 + $0xa0] sm:$0xff]
      %v192 = vld [vmem:[%s1 + $0xa8] sm:$0xff]
      %v193 = vld [vmem:[%s1 + $0xb0] sm:$0xff]
      %v194 = vld [vmem:[%s1 + $0xb8] sm:$0xff]
      %v195 = vld [vmem:[%s1 + $0xc0] sm:$0xff]
      %v196 = vld [vmem:[%s1 + $0xc8] sm:$0xff]
      %v197 = vld [vmem:[%s1 + $0xd0] sm:$0xff]
      %v198 = vld [vmem:[%s1 + $0xd8] sm:$0xff]
      %v199 = vld [vmem:[%s1 + $0xe0] sm:$0xff]
      %v200 = vld [vmem:[%s1 + $0xe8] sm:$0xff]
      %v201 = vld [vmem:[%s1 + $0xf0] sm:$0xff]
      %v202 = vld [vmem:[%s1 + $0xf8] sm:$0xff]
      %v203 = vld [vmem:[%s2] sm:$0x1]
      %v204 = vld [vmem:[%s165] sm:$0xff]
      %v205 = vld [vmem:[%s165 + $0x8] sm:$0xff]
      %v206 = vld [vmem:[%s165 + $0x10] sm:$0xff]
      %v207 = vld [vmem:[%s165 + $0x18] sm:$0xff]
      %v208 = vld [vmem:[%s165 + $0x20] sm:$0xf]
      %v209 = vld [vmem:[%s165 + $0x28] sm:$0xf]
      %v211 = vlaneseq
      %v212 = vshrl.u32 %v211, 7
      %v213 = vsub.s32 0, %v212
      %v214 = vrot.slane %v203, %v213
      %216 = vmatprep.subr.mxu0 0.0
      %217 = vmatpush1.msra.mxu0 %v171
      %218 = vmatprep.subr.mxu0 0.0
      %219 = vmatpush1.msra.mxu0 %v172
      %220 = vmatprep.subr.mxu0 0.0
      %221 = vmatpush1.msra.mxu0 %v173
      %222 = vmatprep.subr.mxu0 0.0
      %223 = vmatpush1.msra.mxu0 %v174
      %224 = vmatprep.subr.mxu0 0.0
      %225 = vmatpush1.msra.mxu0 %v175
      %226 = vmatprep.subr.mxu0 0.0
      %227 = vmatpush1.msra.mxu0 %v176
      %228 = vmatprep.subr.mxu0 0.0
      %229 = vmatpush1.msra.mxu0 %v177
      %230 = vmatprep.subr.mxu0 0.0
      %231 = vmatpush1.msra.mxu0 %v178
      %232 = vmatprep.subr.mxu0 0.0
      %233 = vmatpush1.msra.mxu0 %v179
      %234 = vmatprep.subr.mxu0 0.0
      %235 = vmatpush1.msra.mxu0 %v180
      %236 = vmatprep.subr.mxu0 0.0
      %237 = vmatpush1.msra.mxu0 %v181
      %238 = vmatprep.subr.mxu0 0.0
      %239 = vmatpush1.msra.mxu0 %v182
      %240 = vmatprep.subr.mxu0 0.0
      %241 = vmatpush1.msra.mxu0 %v183
      %242 = vmatprep.subr.mxu0 0.0
      %243 = vmatpush1.msra.mxu0 %v184
      %244 = vmatprep.subr.mxu0 0.0
      %245 = vmatpush1.msra.mxu0 %v185
      %246 = vmatprep.subr.mxu0 0.0
      %247 = vmatpush1.msra.mxu0 %v186
      %248 = vmatprep.subr.mxu0 0.0
      %249 = vmatpush1.msra.mxu0 %v187
      %250 = vmatprep.subr.mxu0 0.0
      %251 = vmatpush1.msra.mxu0 %v188
      %252 = vmatprep.subr.mxu0 0.0
      %253 = vmatpush1.msra.mxu0 %v189
      %254 = vmatprep.subr.mxu0 0.0
      %255 = vmatpush1.msra.mxu0 %v190
      %256 = vmatprep.subr.mxu0 0.0
      %257 = vmatpush1.msra.mxu0 %v191
      %258 = vmatprep.subr.mxu0 0.0
      %259 = vmatpush1.msra.mxu0 %v192
      %260 = vmatprep.subr.mxu0 0.0
      %261 = vmatpush1.msra.mxu0 %v193
      %262 = vmatprep.subr.mxu0 0.0
      %263 = vmatpush1.msra.mxu0 %v194
      %264 = vmatprep.subr.mxu0 0.0
      %265 = vmatpush1.msra.mxu0 %v195
      %266 = vmatprep.subr.mxu0 0.0
      %267 = vmatpush1.msra.mxu0 %v196
      %268 = vmatprep.subr.mxu0 0.0
      %269 = vmatpush1.msra.mxu0 %v197
      %270 = vmatprep.subr.mxu0 0.0
      %271 = vmatpush1.msra.mxu0 %v198
      %272 = vmatprep.subr.mxu0 0.0
      %273 = vmatpush1.msra.mxu0 %v199
      %274 = vmatprep.subr.mxu0 0.0
      %275 = vmatpush1.msra.mxu0 %v200
      %276 = vmatprep.subr.mxu0 0.0
      %277 = vmatpush1.msra.mxu0 %v201
      %278 = vmatprep.subr.mxu0 0.0
      %279 = vmatpush1.msra.mxu0 %v202
      %280 = vmatprep.mubr.f32.mxu0 %v205
      %281 = vmatmul.mubr.f32.gmra.mrb[0].mxu0 %v204
      %v282 = vpop.f32.mrb[0].mxu0
      %v283 = vadd.f32 %v214, %v282
      %v284 = vpop.f32.mrb[0].mxu0
      %285 = vmatprep.mubr.f32.mxu0 %v207
      %286 = vmatmul.mubr.f32.gmra.mrb[0].mxu0 %v206
      %v287 = vpop.f32.mrb[0].mxu0
      %v288 = vadd.f32 %v214, %v287
      %v289 = vpop.f32.mrb[0].mxu0
      %290 = vmatprep.mubr.f32.mxu0 %v209
      %291 = vmatmul.mubr.f32.gmra.mrb[0].mxu0 %v208
      %v292 = vpop.f32.mrb[0].mxu0
      %v293 = vadd.f32 %v214, %v292
      %v294 = vpop.f32.mrb[0].mxu0
      %295 = vdwg.mxu0
      %v296 = vmax.f32 %v283, 0.0
      %v297 = vmax.f32 %v288, 0.0
      %v298 = vmax.f32 %v293, 0.0
      %299 = vst [vmem:[#allocation2] sm:$0xff] %v296
      %300 = vst [vmem:[#allocation2 + $0x8] sm:$0xff] %v297
      %301 = vst [vmem:[#allocation2 + $0x10] sm:$0xf] %v298
      %v302 = vld [vmem:[#allocation2] ss:$2 sm:$0x1f]
      %s303 = scalar_lea.vmem [#allocation2], 1
      %v304 = vld [vmem:[%s303] ss:$2 sm:$0x1f]
      %s305 = scalar_lea.vmem [#allocation2], 10
      %v306 = vld [vmem:[%s305] ss:$2 sm:$0x1f]
      %s307 = scalar_lea.vmem [#allocation2], 11
      %v308 = vld [vmem:[%s307] ss:$2 sm:$0x1f]
      %v309 = vmax.f32 %v302, %v304
      %v310 = vmax.f32 %v306, %v308
      %v311 = vmax.f32 %v309, %v310
      %312 = vst [vmem:[%s170] sm:$0x1f] %v311
      %v313 = vld [vmem:[%s165 + $0x20] sm:$0xf0]
      %v314 = vld [vmem:[%s165 + $0x28] sm:$0xf0]
      %v315 = vld [vmem:[%s165 + $0x30] sm:$0xff]
      %v316 = vld [vmem:[%s165 + $0x38] sm:$0xff]
      %v317 = vld [vmem:[%s165 + $0x40] sm:$0xff]
      %v318 = vld [vmem:[%s165 + $0x48] sm:$0xff]
      %vm325 = vcmask 1043456
      %v326 = vrot.slane %v313, 4
      %v327 = vrot.slane %v315, 4
      %v328 = vsel %vm325, %v326, %v327
      %v329 = vrot.slane %v314, 4
      %v330 = vrot.slane %v316, 4
      %v331 = vsel %vm325, %v329, %v330
      %v332 = vrot.slane %v317, 4
      %v333 = vsel %vm325, %v327, %v332
      %v334 = vrot.slane %v318, 4
      %v335 = vsel %vm325, %v330, %v334
      %342 = vmatprep.subr.mxu0 0.0
      %343 = vmatpush1.msra.mxu0 %v171
      %344 = vmatprep.subr.mxu0 0.0
      %345 = vmatpush1.msra.mxu0 %v172
      %346 = vmatprep.subr.mxu0 0.0
      %347 = vmatpush1.msra.mxu0 %v173
      %348 = vmatprep.subr.mxu0 0.0
      %349 = vmatpush1.msra.mxu0 %v174
      %350 = vmatprep.subr.mxu0 0.0
      %351 = vmatpush1.msra.mxu0 %v175
      %352 = vmatprep.subr.mxu0 0.0
      %353 = vmatpush1.msra.mxu0 %v176
      %354 = vmatprep.subr.mxu0 0.0
      %355 = vmatpush1.msra.mxu0 %v177
      %356 = vmatprep.subr.mxu0 0.0
      %357 = vmatpush1.msra.mxu0 %v178
      %358 = vmatprep.subr.mxu0 0.0
      %359 = vmatpush1.msra.mxu0 %v179
      %360 = vmatprep.subr.mxu0 0.0
      %361 = vmatpush1.msra.mxu0 %v180
      %362 = vmatprep.subr.mxu0 0.0
      %363 = vmatpush1.msra.mxu0 %v181
      %364 = vmatprep.subr.mxu0 0.0
      %365 = vmatpush1.msra.mxu0 %v182
      %366 = vmatprep.subr.mxu0 0.0
      %367 = vmatpush1.msra.mxu0 %v183
      %368 = vmatprep.subr.mxu0 0.0
      %369 = vmatpush1.msra.mxu0 %v184
      %370 = vmatprep.subr.mxu0 0.0
      %371 = vmatpush1.msra.mxu0 %v185
      %372 = vmatprep.subr.mxu0 0.0
      %373 = vmatpush1.msra.mxu0 %v186
      %374 = vmatprep.subr.mxu0 0.0
      %375 = vmatpush1.msra.mxu0 %v187
      %376 = vmatprep.subr.mxu0 0.0
      %377 = vmatpush1.msra.mxu0 %v188
      %378 = vmatprep.subr.mxu0 0.0
      %379 = vmatpush1.msra.mxu0 %v189
      %380 = vmatprep.subr.mxu0 0.0
      %381 = vmatpush1.msra.mxu0 %v190
      %382 = vmatprep.subr.mxu0 0.0
      %383 = vmatpush1.msra.mxu0 %v191
      %384 = vmatprep.subr.mxu0 0.0
      %385 = vmatpush1.msra.mxu0 %v192
      %386 = vmatprep.subr.mxu0 0.0
      %387 = vmatpush1.msra.mxu0 %v193
      %388 = vmatprep.subr.mxu0 0.0
      %389 = vmatpush1.msra.mxu0 %v194
      %390 = vmatprep.subr.mxu0 0.0
      %391 = vmatpush1.msra.mxu0 %v195
      %392 = vmatprep.subr.mxu0 0.0
      %393 = vmatpush1.msra.mxu0 %v196
      %394 = vmatprep.subr.mxu0 0.0
      %395 = vmatpush1.msra.mxu0 %v197
      %396 = vmatprep.subr.mxu0 0.0
      %397 = vmatpush1.msra.mxu0 %v198
      %398 = vmatprep.subr.mxu0 0.0
      %399 = vmatpush1.msra.mxu0 %v199
      %400 = vmatprep.subr.mxu0 0.0
      %401 = vmatpush1.msra.mxu0 %v200
      %402 = vmatprep.subr.mxu0 0.0
      %403 = vmatpush1.msra.mxu0 %v201
      %404 = vmatprep.subr.mxu0 0.0
      %405 = vmatpush1.msra.mxu0 %v202
      %406 = vmatprep.mubr.f32.mxu0 %v331
      %407 = vmatmul.mubr.f32.gmra.mrb[0].mxu0 %v328
      %v408 = vpop.f32.mrb[0].mxu0
      %v409 = vadd.f32 %v214, %v408
      %v410 = vpop.f32.mrb[0].mxu0
      %411 = vmatprep.mubr.f32.mxu0 %v335
      %412 = vmatmul.mubr.f32.gmra.mrb[0].mxu0 %v333
      %v413 = vpop.f32.mrb[0].mxu0
      %v414 = vadd.f32 %v214, %v413
      %v415 = vpop.f32.mrb[0].mxu0
      %416 = vmatprep.mubr.f32.mxu0 %v334
      %417 = vmatmul.mubr.f32.gmra.mrb[0].mxu0 %v332
      %v418 = vpop.f32.mrb[0].mxu0
      %v419 = vadd.f32 %v214, %v418
      %v420 = vpop.f32.mrb[0].mxu0
      %421 = vdwg.mxu0
      %v422 = vmax.f32 %v409, 0.0
      %v423 = vmax.f32 %v414, 0.0
      %v424 = vmax.f32 %v419, 0.0
      %425 = vst [vmem:[#allocation2] sm:$0xff] %v422
      %426 = vst [vmem:[#allocation2 + $0x8] sm:$0xff] %v423
      %427 = vst [vmem:[#allocation2 + $0x10] sm:$0xf] %v424
      %v428 = vld [vmem:[#allocation2] ss:$2 sm:$0x1f]
      %v429 = vld [vmem:[%s303] ss:$2 sm:$0x1f]
      %v430 = vld [vmem:[%s305] ss:$2 sm:$0x1f]
      %v431 = vld [vmem:[%s307] ss:$2 sm:$0x1f]
      %v432 = vmax.f32 %v428, %v429
      %v433 = vmax.f32 %v430, %v431
      %v434 = vmax.f32 %v432, %v433
      %435 = vst [vmem:[%s170 + $0x5] sm:$0x1f] %v434
      %v436 = vld [vmem:[%s165 + $0x50] sm:$0xff]
      %v437 = vld [vmem:[%s165 + $0x58] sm:$0xff]
      %v438 = vld [vmem:[%s165 + $0x60] sm:$0xff]
      %v439 = vld [vmem:[%s165 + $0x68] sm:$0xff]
      %v440 = vld [vmem:[%s165 + $0x70] sm:$0xf]
      %v441 = vld [vmem:[%s165 + $0x78] sm:$0xf]
      %442 = vmatprep.subr.mxu0 0.0
      %443 = vmatpush1.msra.mxu0 %v171
      %444 = vmatprep.subr.mxu0 0.0
      %445 = vmatpush1.msra.mxu0 %v172
      %446 = vmatprep.subr.mxu0 0.0
      %447 = vmatpush1.msra.mxu0 %v173
      %448 = vmatprep.subr.mxu0 0.0
      %449 = vmatpush1.msra.mxu0 %v174
      %450 = vmatprep.subr.mxu0 0.0
      %451 = vmatpush1.msra.mxu0 %v175
      %452 = vmatprep.subr.mxu0 0.0
      %453 = vmatpush1.msra.mxu0 %v176
      %454 = vmatprep.subr.mxu0 0.0
      %455 = vmatpush1.msra.mxu0 %v177
      %456 = vmatprep.subr.mxu0 0.0
      %457 = vmatpush1.msra.mxu0 %v178
      %458 = vmatprep.subr.mxu0 0.0
      %459 = vmatpush1.msra.mxu0 %v179
      %460 = vmatprep.subr.mxu0 0.0
      %461 = vmatpush1.msra.mxu0 %v180
      %462 = vmatprep.subr.mxu0 0.0
      %463 = vmatpush1.msra.mxu0 %v181
      %464 = vmatprep.subr.mxu0 0.0
      %465 = vmatpush1.msra.mxu0 %v182
      %466 = vmatprep.subr.mxu0 0.0
      %467 = vmatpush1.msra.mxu0 %v183
      %468 = vmatprep.subr.mxu0 0.0
      %469 = vmatpush1.msra.mxu0 %v184
      %470 = vmatprep.subr.mxu0 0.0
      %471 = vmatpush1.msra.mxu0 %v185
      %472 = vmatprep.subr.mxu0 0.0
      %473 = vmatpush1.msra.mxu0 %v186
      %474 = vmatprep.subr.mxu0 0.0
      %475 = vmatpush1.msra.mxu0 %v187
      %476 = vmatprep.subr.mxu0 0.0
      %477 = vmatpush1.msra.mxu0 %v188
      %478 = vmatprep.subr.mxu0 0.0
      %479 = vmatpush1.msra.mxu0 %v189
      %480 = vmatprep.subr.mxu0 0.0
      %481 = vmatpush1.msra.mxu0 %v190
      %482 = vmatprep.subr.mxu0 0.0
      %483 = vmatpush1.msra.mxu0 %v191
      %484 = vmatprep.subr.mxu0 0.0
      %485 = vmatpush1.msra.mxu0 %v192
      %486 = vmatprep.subr.mxu0 0.0
      %487 = vmatpush1.msra.mxu0 %v193
      %488 = vmatprep.subr.mxu0 0.0
      %489 = vmatpush1.msra.mxu0 %v194
      %490 = vmatprep.subr.mxu0 0.0
      %491 = vmatpush1.msra.mxu0 %v195
      %492 = vmatprep.subr.mxu0 0.0
      %493 = vmatpush1.msra.mxu0 %v196
      %494 = vmatprep.subr.mxu0 0.0
      %495 = vmatpush1.msra.mxu0 %v197
      %496 = vmatprep.subr.mxu0 0.0
      %497 = vmatpush1.msra.mxu0 %v198
      %498 = vmatprep.subr.mxu0 0.0
      %499 = vmatpush1.msra.mxu0 %v199
      %500 = vmatprep.subr.mxu0 0.0
      %501 = vmatpush1.msra.mxu0 %v200
      %502 = vmatprep.subr.mxu0 0.0
      %503 = vmatpush1.msra.mxu0 %v201
      %504 = vmatprep.subr.mxu0 0.0
      %505 = vmatpush1.msra.mxu0 %v202
      %506 = vmatprep.mubr.f32.mxu0 %v437
      %507 = vmatmul.mubr.f32.gmra.mrb[0].mxu0 %v436
      %v508 = vpop.f32.mrb[0].mxu0
      %v509 = vadd.f32 %v214, %v508
      %v510 = vpop.f32.mrb[0].mxu0
      %511 = vmatprep.mubr.f32.mxu0 %v439
      %512 = vmatmul.mubr.f32.gmra.mrb[0].mxu0 %v438
      %v513 = vpop.f32.mrb[0].mxu0
      %v514 = vadd.f32 %v214, %v513
      %v515 = vpop.f32.mrb[0].mxu0
      %516 = vmatprep.mubr.f32.mxu0 %v441
      %517 = vmatmul.mubr.f32.gmra.mrb[0].mxu0 %v440
      %v518 = vpop.f32.mrb[0].mxu0
      %v519 = vadd.f32 %v214, %v518
      %v520 = vpop.f32.mrb[0].mxu0
      %521 = vdwg.mxu0
      %v522 = vmax.f32 %v509, 0.0
      %v523 = vmax.f32 %v514, 0.0
      %v524 = vmax.f32 %v519, 0.0
      %525 = vst [vmem:[#allocation2] sm:$0xff] %v522
      %526 = vst [vmem:[#allocation2 + $0x8] sm:$0xff] %v523
      %527 = vst [vmem:[#allocation2 + $0x10] sm:$0xf] %v524
      %v528 = vld [vmem:[#allocation2] ss:$2 sm:$0x1f]
      %v529 = vld [vmem:[%s303] ss:$2 sm:$0x1f]
      %v530 = vld [vmem:[%s305] ss:$2 sm:$0x1f]
      %v531 = vld [vmem:[%s307] ss:$2 sm:$0x1f]
      %v532 = vmax.f32 %v528, %v529
      %v533 = vmax.f32 %v530, %v531
      %v534 = vmax.f32 %v532, %v533
      %535 = vst [vmem:[%s170 + $0xa] sm:$0x1f] %v534
      %v536 = vld [vmem:[%s165 + $0x70] sm:$0xf0]
      %v537 = vld [vmem:[%s165 + $0x78] sm:$0xf0]
      %v538 = vld [vmem:[%s165 + $0x80] sm:$0xff]
      %v539 = vld [vmem:[%s165 + $0x88] sm:$0xff]
      %v540 = vld [vmem:[%s165 + $0x90] sm:$0xff]
      %v541 = vld [vmem:[%s165 + $0x98] sm:$0xff]
      %v548 = vrot.slane %v536, 4
      %v549 = vrot.slane %v538, 4
      %v550 = vsel %vm325, %v548, %v549
      %v551 = vrot.slane %v537, 4
      %v552 = vrot.slane %v539, 4
      %v553 = vsel %vm325, %v551, %v552
      %v554 = vrot.slane %v540, 4
      %v555 = vsel %vm325, %v549, %v554
      %v556 = vrot.slane %v541, 4
      %v557 = vsel %vm325, %v552, %v556
      %564 = vmatprep.subr.mxu0 0.0
      %565 = vmatpush1.msra.mxu0 %v171
      %566 = vmatprep.subr.mxu0 0.0
      %567 = vmatpush1.msra.mxu0 %v172
      %568 = vmatprep.subr.mxu0 0.0
      %569 = vmatpush1.msra.mxu0 %v173
      %570 = vmatprep.subr.mxu0 0.0
      %571 = vmatpush1.msra.mxu0 %v174
      %572 = vmatprep.subr.mxu0 0.0
      %573 = vmatpush1.msra.mxu0 %v175
      %574 = vmatprep.subr.mxu0 0.0
      %575 = vmatpush1.msra.mxu0 %v176
      %576 = vmatprep.subr.mxu0 0.0
      %577 = vmatpush1.msra.mxu0 %v177
      %578 = vmatprep.subr.mxu0 0.0
      %579 = vmatpush1.msra.mxu0 %v178
      %580 = vmatprep.subr.mxu0 0.0
      %581 = vmatpush1.msra.mxu0 %v179
      %582 = vmatprep.subr.mxu0 0.0
      %583 = vmatpush1.msra.mxu0 %v180
      %584 = vmatprep.subr.mxu0 0.0
      %585 = vmatpush1.msra.mxu0 %v181
      %586 = vmatprep.subr.mxu0 0.0
      %587 = vmatpush1.msra.mxu0 %v182
      %588 = vmatprep.subr.mxu0 0.0
      %589 = vmatpush1.msra.mxu0 %v183
      %590 = vmatprep.subr.mxu0 0.0
      %591 = vmatpush1.msra.mxu0 %v184
      %592 = vmatprep.subr.mxu0 0.0
      %593 = vmatpush1.msra.mxu0 %v185
      %594 = vmatprep.subr.mxu0 0.0
      %595 = vmatpush1.msra.mxu0 %v186
      %596 = vmatprep.subr.mxu0 0.0
      %597 = vmatpush1.msra.mxu0 %v187
      %598 = vmatprep.subr.mxu0 0.0
      %599 = vmatpush1.msra.mxu0 %v188
      %600 = vmatprep.subr.mxu0 0.0
      %601 = vmatpush1.msra.mxu0 %v189
      %602 = vmatprep.subr.mxu0 0.0
      %603 = vmatpush1.msra.mxu0 %v190
      %604 = vmatprep.subr.mxu0 0.0
      %605 = vmatpush1.msra.mxu0 %v191
      %606 = vmatprep.subr.mxu0 0.0
      %607 = vmatpush1.msra.mxu0 %v192
      %608 = vmatprep.subr.mxu0 0.0
      %609 = vmatpush1.msra.mxu0 %v193
      %610 = vmatprep.subr.mxu0 0.0
      %611 = vmatpush1.msra.mxu0 %v194
      %612 = vmatprep.subr.mxu0 0.0
      %613 = vmatpush1.msra.mxu0 %v195
      %614 = vmatprep.subr.mxu0 0.0
      %615 = vmatpush1.msra.mxu0 %v196
      %616 = vmatprep.subr.mxu0 0.0
      %617 = vmatpush1.msra.mxu0 %v197
      %618 = vmatprep.subr.mxu0 0.0
      %619 = vmatpush1.msra.mxu0 %v198
      %620 = vmatprep.subr.mxu0 0.0
      %621 = vmatpush1.msra.mxu0 %v199
      %622 = vmatprep.subr.mxu0 0.0
      %623 = vmatpush1.msra.mxu0 %v200
      %624 = vmatprep.subr.mxu0 0.0
      %625 = vmatpush1.msra.mxu0 %v201
      %626 = vmatprep.subr.mxu0 0.0
      %627 = vmatpush1.msra.mxu0 %v202
      %628 = vmatprep.mubr.f32.mxu0 %v553
      %629 = vmatmul.mubr.f32.gmra.mrb[0].mxu0 %v550
      %v630 = vpop.f32.mrb[0].mxu0
      %v631 = vadd.f32 %v214, %v630
      %v632 = vpop.f32.mrb[0].mxu0
      %633 = vmatprep.mubr.f32.mxu0 %v557
      %634 = vmatmul.mubr.f32.gmra.mrb[0].mxu0 %v555
      %v635 = vpop.f32.mrb[0].mxu0
      %v636 = vadd.f32 %v214, %v635
      %v637 = vpop.f32.mrb[0].mxu0
      %638 = vmatprep.mubr.f32.mxu0 %v556
      %639 = vmatmul.mubr.f32.gmra.mrb[0].mxu0 %v554
      %v640 = vpop.f32.mrb[0].mxu0
      %v641 = vadd.f32 %v214, %v640
      %v642 = vpop.f32.mrb[0].mxu0
      %643 = vdwg.mxu0
      %v644 = vmax.f32 %v631, 0.0
      %v645 = vmax.f32 %v636, 0.0
      %v646 = vmax.f32 %v641, 0.0
      %647 = vst [vmem:[#allocation2] sm:$0xff] %v644
      %648 = vst [vmem:[#allocation2 + $0x8] sm:$0xff] %v645
      %649 = vst [vmem:[#allocation2 + $0x10] sm:$0xf] %v646
      %v650 = vld [vmem:[#allocation2] ss:$2 sm:$0x1f]
      %v651 = vld [vmem:[%s303] ss:$2 sm:$0x1f]
      %v652 = vld [vmem:[%s305] ss:$2 sm:$0x1f]
      %v653 = vld [vmem:[%s307] ss:$2 sm:$0x1f]
      %v654 = vmax.f32 %v650, %v651
      %v655 = vmax.f32 %v652, %v653
      %v656 = vmax.f32 %v654, %v655
      %657 = vst [vmem:[%s170 + $0xf] sm:$0x1f] %v656
      %v658 = vld [vmem:[%s165 + $0xa0] sm:$0xff]
      %v659 = vld [vmem:[%s165 + $0xa8] sm:$0xff]
      %v660 = vld [vmem:[%s165 + $0xb0] sm:$0xff]
      %v661 = vld [vmem:[%s165 + $0xb8] sm:$0xff]
      %v662 = vld [vmem:[%s165 + $0xc0] sm:$0xf]
      %v663 = vld [vmem:[%s165 + $0xc8] sm:$0xf]
      %664 = vmatprep.subr.mxu0 0.0
      %665 = vmatpush1.msra.mxu0 %v171
      %666 = vmatprep.subr.mxu0 0.0
      %667 = vmatpush1.msra.mxu0 %v172
      %668 = vmatprep.subr.mxu0 0.0
      %669 = vmatpush1.msra.mxu0 %v173
      %670 = vmatprep.subr.mxu0 0.0
      %671 = vmatpush1.msra.mxu0 %v174
      %672 = vmatprep.subr.mxu0 0.0
      %673 = vmatpush1.msra.mxu0 %v175
      %674 = vmatprep.subr.mxu0 0.0
      %675 = vmatpush1.msra.mxu0 %v176
      %676 = vmatprep.subr.mxu0 0.0
      %677 = vmatpush1.msra.mxu0 %v177
      %678 = vmatprep.subr.mxu0 0.0
      %679 = vmatpush1.msra.mxu0 %v178
      %680 = vmatprep.subr.mxu0 0.0
      %681 = vmatpush1.msra.mxu0 %v179
      %682 = vmatprep.subr.mxu0 0.0
      %683 = vmatpush1.msra.mxu0 %v180
      %684 = vmatprep.subr.mxu0 0.0
      %685 = vmatpush1.msra.mxu0 %v181
      %686 = vmatprep.subr.mxu0 0.0
      %687 = vmatpush1.msra.mxu0 %v182
      %688 = vmatprep.subr.mxu0 0.0
      %689 = vmatpush1.msra.mxu0 %v183
      %690 = vmatprep.subr.mxu0 0.0
      %691 = vmatpush1.msra.mxu0 %v184
      %692 = vmatprep.subr.mxu0 0.0
      %693 = vmatpush1.msra.mxu0 %v185
      %694 = vmatprep.subr.mxu0 0.0
      %695 = vmatpush1.msra.mxu0 %v186
      %696 = vmatprep.subr.mxu0 0.0
      %697 = vmatpush1.msra.mxu0 %v187
      %698 = vmatprep.subr.mxu0 0.0
      %699 = vmatpush1.msra.mxu0 %v188
      %700 = vmatprep.subr.mxu0 0.0
      %701 = vmatpush1.msra.mxu0 %v189
      %702 = vmatprep.subr.mxu0 0.0
      %703 = vmatpush1.msra.mxu0 %v190
      %704 = vmatprep.subr.mxu0 0.0
      %705 = vmatpush1.msra.mxu0 %v191
      %706 = vmatprep.subr.mxu0 0.0
      %707 = vmatpush1.msra.mxu0 %v192
      %708 = vmatprep.subr.mxu0 0.0
      %709 = vmatpush1.msra.mxu0 %v193
      %710 = vmatprep.subr.mxu0 0.0
      %711 = vmatpush1.msra.mxu0 %v194
      %712 = vmatprep.subr.mxu0 0.0
      %713 = vmatpush1.msra.mxu0 %v195
      %714 = vmatprep.subr.mxu0 0.0
      %715 = vmatpush1.msra.mxu0 %v196
      %716 = vmatprep.subr.mxu0 0.0
      %717 = vmatpush1.msra.mxu0 %v197
      %718 = vmatprep.subr.mxu0 0.0
      %719 = vmatpush1.msra.mxu0 %v198
      %720 = vmatprep.subr.mxu0 0.0
      %721 = vmatpush1.msra.mxu0 %v199
      %722 = vmatprep.subr.mxu0 0.0
      %723 = vmatpush1.msra.mxu0 %v200
      %724 = vmatprep.subr.mxu0 0.0
      %725 = vmatpush1.msra.mxu0 %v201
      %726 = vmatprep.subr.mxu0 0.0
      %727 = vmatpush1.msra.mxu0 %v202
      %728 = vmatprep.mubr.f32.mxu0 %v659
      %729 = vmatmul.mubr.f32.gmra.mrb[0].mxu0 %v658
      %v730 = vpop.f32.mrb[0].mxu0
      %v731 = vadd.f32 %v214, %v730
      %v732 = vpop.f32.mrb[0].mxu0
      %733 = vmatprep.mubr.f32.mxu0 %v661
      %734 = vmatmul.mubr.f32.gmra.mrb[0].mxu0 %v660
      %v735 = vpop.f32.mrb[0].mxu0
      %v736 = vadd.f32 %v214, %v735
      %v737 = vpop.f32.mrb[0].mxu0
      %738 = vmatprep.mubr.f32.mxu0 %v663
      %739 = vmatmul.mubr.f32.gmra.mrb[0].mxu0 %v662
      %v740 = vpop.f32.mrb[0].mxu0
      %v741 = vadd.f32 %v214, %v740
      %v742 = vpop.f32.mrb[0].mxu0
      %743 = vdwg.mxu0
      %v744 = vmax.f32 %v731, 0.0
      %v745 = vmax.f32 %v736, 0.0
      %v746 = vmax.f32 %v741, 0.0
      %747 = vst [vmem:[#allocation2] sm:$0xff] %v744
      %748 = vst [vmem:[#allocation2 + $0x8] sm:$0xff] %v745
      %749 = vst [vmem:[#allocation2 + $0x10] sm:$0xf] %v746
      %v750 = vld [vmem:[#allocation2] ss:$2 sm:$0x1f]
      %v751 = vld [vmem:[%s303] ss:$2 sm:$0x1f]
      %v752 = vld [vmem:[%s305] ss:$2 sm:$0x1f]
      %v753 = vld [vmem:[%s307] ss:$2 sm:$0x1f]
      %v754 = vmax.f32 %v750, %v751
      %v755 = vmax.f32 %v752, %v753
      %v756 = vmax.f32 %v754, %v755
      %757 = vst [vmem:[%s170 + $0x14] sm:$0x1f] %v756
      %p758 = scmp.lt.s32.totalorder %s14, 1
      %s759 = scalar_select %p758, %s14, 1
      %s760 = smul.addr %s759, 4
      %s761 = smul.addr %s760, 8
      %s762 = scalar_lea.vmem %s3, %s761
      // Predicated region
      $region33: #{cnn_old_forward.4} parent=31 // pred_check
        %p763 = pneg %p100
      $region34: #{cnn_old_forward.4} parent=31 // pred_check_branch
        %765 = sbr.rel (%p763) target = $region36
      $region35: #{cnn_old_forward.4} parent=31 // pred_region
        _
      $region36: #{cnn_old_forward.4} parent=31 // pred_fallthru
        _
    $region32: #{cnn_old_forward.4} parent=5 // pred_fallthru
      _
    %p766 = scmp.le.s32.totalorder 2, %s9
    // Predicated region
    $region37: #{cnn_old_forward.4} parent=5 // pred_check
      %p767 = pneg %p766
    $region38: #{cnn_old_forward.4} parent=5 // pred_check_branch
      %769 = sbr.rel (%p767) target = $region40
    $region39: #{cnn_old_forward.4} parent=5 // pred_region
      %s770 = ssub.s32 %s9, 2
      // Predicated region
      $region41: #{cnn_old_forward.4} parent=39 // pred_check
        %p771 = pneg %p106
      $region42: #{cnn_old_forward.4} parent=39 // pred_check_branch
        %773 = sbr.rel (%p771) target = $region44
      $region43: #{cnn_old_forward.4} parent=39 // pred_region
        %p774 = scmp.lt.s32.totalorder %s15, 1
        %s775 = scalar_select %p774, %s15, 1
        %s776 = smul.addr %s775, 4
        %s777 = smul.addr %s776, 8
        %s778 = scalar_lea.vmem %s3, %s777
      $region44: #{cnn_old_forward.4} parent=39 // pred_fallthru
        _
    $region40: #{cnn_old_forward.4} parent=5 // pred_fallthru
      _
  $region6: #{cnn_old_forward.4} parent=0 // loop_footer
    %s13 = sadd.s32 1, %s9
  $region7: #{cnn_old_forward.4} parent=0 // loop_footer_branch
    %8 = sbr.rel target = $region3
  $region8: #{cnn_old_forward.4} parent=0 // loop_exit
    _

// kernel: cnn_old_forward.5
$region0: #{cnn_old_forward.5}
  #allocation0 [shape = 'u32[]', space=smem, size = 0x4, offset = 0x4, fixed_abs, tag = 'smem constant byte address 0x4 - core index']
  #allocation1 [shape = 'u32[144,128]{1,0:T(1,128)}', space=vmem, size = 0x12000, scoped, tag = 'internal scratch']
  %s0 = inlined_call_operand.vmem [shape: f32[8,3200], index: 0, kind: input, shape index: {}]
  %s1 = inlined_call_operand.vmem [shape: f32[3200,128], index: 1, kind: input, shape index: {}]
  %s2 = inlined_call_operand.vmem [shape: f32[1,128], index: 2, kind: input, shape index: {}]
  %s3 = inlined_call_operand.vmem [shape: f32[128,128], index: 3, kind: input, shape index: {}]
  %s4 = inlined_call_operand.vmem [shape: f32[1,128], index: 4, kind: input, shape index: {}]
  %s5 = inlined_call_operand.vmem [shape: f32[128,128], index: 5, kind: input, shape index: {}]
  %s6 = inlined_call_operand.vmem [shape: f32[1,128], index: 6, kind: input, shape index: {}]
  %s7 = inlined_call_operand.vmem [shape: f32[8,128], index: 7, kind: output, shape index: {}]
  %s8 = sld [smem:[#allocation0]]
  $region38: #{cnn_old_forward.5} parent=0
    _
  %s10 = ssub.s32 1, %s8
  %s11 = scalar_select 0, %s10, %s8
  // Predicated region
  $region2: #{cnn_old_forward.5} parent=0 // pred_check
    _
  $region3: #{cnn_old_forward.5} parent=0 // pred_check_branch
    %13 = sbr.rel (0) target = $region5
  $region4: #{cnn_old_forward.5} parent=0 // pred_region
    _
  $region5: #{cnn_old_forward.5} parent=0 // pred_fallthru
    _
  // Predicated region
  $region6: #{cnn_old_forward.5} parent=0 // pred_check
    _
  $region7: #{cnn_old_forward.5} parent=0 // pred_check_branch
    %15 = sbr.rel (0) target = $region9
  $region8: #{cnn_old_forward.5} parent=0 // pred_region
    _
  $region9: #{cnn_old_forward.5} parent=0 // pred_fallthru
    _
  // Predicated region
  $region10: #{cnn_old_forward.5} parent=0 // pred_check
    _
  $region11: #{cnn_old_forward.5} parent=0 // pred_check_branch
    %17 = sbr.rel (0) target = $region13
  $region12: #{cnn_old_forward.5} parent=0 // pred_region
    _
  $region13: #{cnn_old_forward.5} parent=0 // pred_fallthru
    _
  // Predicated region
  $region14: #{cnn_old_forward.5} parent=0 // pred_check
    _
  $region15: #{cnn_old_forward.5} parent=0 // pred_check_branch
    %19 = sbr.rel (0) target = $region17
  $region16: #{cnn_old_forward.5} parent=0 // pred_region
    _
  $region17: #{cnn_old_forward.5} parent=0 // pred_fallthru
    _
  // Predicated region
  $region18: #{cnn_old_forward.5} parent=0 // pred_check
    _
  $region19: #{cnn_old_forward.5} parent=0 // pred_check_branch
    %21 = sbr.rel (0) target = $region21
  $region20: #{cnn_old_forward.5} parent=0 // pred_region
    _
  $region21: #{cnn_old_forward.5} parent=0 // pred_fallthru
    _
  // Predicated region
  $region22: #{cnn_old_forward.5} parent=0 // pred_check
    _
  $region23: #{cnn_old_forward.5} parent=0 // pred_check_branch
    %23 = sbr.rel (0) target = $region25
  $region24: #{cnn_old_forward.5} parent=0 // pred_region
    _
  $region25: #{cnn_old_forward.5} parent=0 // pred_fallthru
    _
  // Predicated region
  $region26: #{cnn_old_forward.5} parent=0 // pred_check
    _
  $region27: #{cnn_old_forward.5} parent=0 // pred_check_branch
    %25 = sbr.rel (0) target = $region29
  $region28: #{cnn_old_forward.5} parent=0 // pred_region
    _
  $region29: #{cnn_old_forward.5} parent=0 // pred_fallthru
    _
  %v26 = vld [vmem:[%s0] sm:$0xff]
  %v27 = vld [vmem:[%s0 + $0x8] sm:$0xff]
  %v28 = vld [vmem:[%s0 + $0x10] sm:$0xff]
  %v29 = vld [vmem:[%s0 + $0x18] sm:$0xff]
  %v30 = vld [vmem:[%s0 + $0x20] sm:$0xff]
  %v31 = vld [vmem:[%s0 + $0x28] sm:$0xff]
  %v32 = vld [vmem:[%s0 + $0x30] sm:$0xff]
  %v33 = vld [vmem:[%s0 + $0x38] sm:$0xff]
  %v34 = vld [vmem:[%s0 + $0x40] sm:$0xff]
  %v35 = vld [vmem:[%s0 + $0x48] sm:$0xff]
  %v36 = vld [vmem:[%s0 + $0x50] sm:$0xff]
  %v37 = vld [vmem:[%s0 + $0x58] sm:$0xff]
  %v38 = vld [vmem:[%s0 + $0x60] sm:$0xff]
  %v39 = vld [vmem:[%s0 + $0x68] sm:$0xff]
  %v40 = vld [vmem:[%s0 + $0x70] sm:$0xff]
  %v41 = vld [vmem:[%s0 + $0x78] sm:$0xff]
  %v42 = vld [vmem:[%s0 + $0x80] sm:$0xff]
  %v43 = vld [vmem:[%s0 + $0x88] sm:$0xff]
  %v44 = vld [vmem:[%s0 + $0x90] sm:$0xff]
  %v45 = vld [vmem:[%s0 + $0x98] sm:$0xff]
  %v46 = vld [vmem:[%s0 + $0xa0] sm:$0xff]
  %v47 = vld [vmem:[%s0 + $0xa8] sm:$0xff]
  %v48 = vld [vmem:[%s0 + $0xb0] sm:$0xff]
  %v49 = vld [vmem:[%s0 + $0xb8] sm:$0xff]
  %v50 = vld [vmem:[%s0 + $0xc0] sm:$0xff]
  %v51 = vld [vmem:[%s1] sm:$0xff]
  %v52 = vld [vmem:[%s1 + $0x8] sm:$0xff]
  %v53 = vld [vmem:[%s1 + $0x10] sm:$0xff]
  %v54 = vld [vmem:[%s1 + $0x18] sm:$0xff]
  %v55 = vld [vmem:[%s1 + $0x20] sm:$0xff]
  %v56 = vld [vmem:[%s1 + $0x28] sm:$0xff]
  %v57 = vld [vmem:[%s1 + $0x30] sm:$0xff]
  %v58 = vld [vmem:[%s1 + $0x38] sm:$0xff]
  %v59 = vld [vmem:[%s1 + $0x40] sm:$0xff]
  %v60 = vld [vmem:[%s1 + $0x48] sm:$0xff]
  %v61 = vld [vmem:[%s1 + $0x50] sm:$0xff]
  %v62 = vld [vmem:[%s1 + $0x58] sm:$0xff]
  %v63 = vld [vmem:[%s1 + $0x60] sm:$0xff]
  %v64 = vld [vmem:[%s1 + $0x68] sm:$0xff]
  %v65 = vld [vmem:[%s1 + $0x70] sm:$0xff]
  %v66 = vld [vmem:[%s1 + $0x78] sm:$0xff]
  %v67 = vld [vmem:[%s1 + $0x80] sm:$0xff]
  %v68 = vld [vmem:[%s1 + $0x88] sm:$0xff]
  %v69 = vld [vmem:[%s1 + $0x90] sm:$0xff]
  %v70 = vld [vmem:[%s1 + $0x98] sm:$0xff]
  %v71 = vld [vmem:[%s1 + $0xa0] sm:$0xff]
  %v72 = vld [vmem:[%s1 + $0xa8] sm:$0xff]
  %v73 = vld [vmem:[%s1 + $0xb0] sm:$0xff]
  %v74 = vld [vmem:[%s1 + $0xb8] sm:$0xff]
  %v75 = vld [vmem:[%s1 + $0xc0] sm:$0xff]
  %v76 = vld [vmem:[%s1 + $0xc8] sm:$0xff]
  %v77 = vld [vmem:[%s1 + $0xd0] sm:$0xff]
  %v78 = vld [vmem:[%s1 + $0xd8] sm:$0xff]
  %v79 = vld [vmem:[%s1 + $0xe0] sm:$0xff]
  %v80 = vld [vmem:[%s1 + $0xe8] sm:$0xff]
  %v81 = vld [vmem:[%s1 + $0xf0] sm:$0xff]
  %v82 = vld [vmem:[%s1 + $0xf8] sm:$0xff]
  %v83 = vld [vmem:[%s1 + $0x100] sm:$0xff]
  %v84 = vld [vmem:[%s1 + $0x108] sm:$0xff]
  %v85 = vld [vmem:[%s1 + $0x110] sm:$0xff]
  %v86 = vld [vmem:[%s1 + $0x118] sm:$0xff]
  %v87 = vld [vmem:[%s1 + $0x120] sm:$0xff]
  %v88 = vld [vmem:[%s1 + $0x128] sm:$0xff]
  %v89 = vld [vmem:[%s1 + $0x130] sm:$0xff]
  %v90 = vld [vmem:[%s1 + $0x138] sm:$0xff]
  %v91 = vld [vmem:[%s1 + $0x140] sm:$0xff]
  %v92 = vld [vmem:[%s1 + $0x148] sm:$0xff]
  %v93 = vld [vmem:[%s1 + $0x150] sm:$0xff]
  %v94 = vld [vmem:[%s1 + $0x158] sm:$0xff]
  %v95 = vld [vmem:[%s1 + $0x160] sm:$0xff]
  %v96 = vld [vmem:[%s1 + $0x168] sm:$0xff]
  %v97 = vld [vmem:[%s1 + $0x170] sm:$0xff]
  %v98 = vld [vmem:[%s1 + $0x178] sm:$0xff]
  %v99 = vld [vmem:[%s1 + $0x180] sm:$0xff]
  %v100 = vld [vmem:[%s1 + $0x188] sm:$0xff]
  %v101 = vld [vmem:[%s1 + $0x190] sm:$0xff]
  %v102 = vld [vmem:[%s1 + $0x198] sm:$0xff]
  %v103 = vld [vmem:[%s1 + $0x1a0] sm:$0xff]
  %v104 = vld [vmem:[%s1 + $0x1a8] sm:$0xff]
  %v105 = vld [vmem:[%s1 + $0x1b0] sm:$0xff]
  %v106 = vld [vmem:[%s1 + $0x1b8] sm:$0xff]
  %v107 = vld [vmem:[%s1 + $0x1c0] sm:$0xff]
  %v108 = vld [vmem:[%s1 + $0x1c8] sm:$0xff]
  %v109 = vld [vmem:[%s1 + $0x1d0] sm:$0xff]
  %v110 = vld [vmem:[%s1 + $0x1d8] sm:$0xff]
  %v111 = vld [vmem:[%s1 + $0x1e0] sm:$0xff]
  %v112 = vld [vmem:[%s1 + $0x1e8] sm:$0xff]
  %v113 = vld [vmem:[%s1 + $0x1f0] sm:$0xff]
  %v114 = vld [vmem:[%s1 + $0x1f8] sm:$0xff]
  %v115 = vld [vmem:[%s1 + $0x200] sm:$0xff]
  %v116 = vld [vmem:[%s1 + $0x208] sm:$0xff]
  %v117 = vld [vmem:[%s1 + $0x210] sm:$0xff]
  %v118 = vld [vmem:[%s1 + $0x218] sm:$0xff]
  %v119 = vld [vmem:[%s1 + $0x220] sm:$0xff]
  %v120 = vld [vmem:[%s1 + $0x228] sm:$0xff]
  %v121 = vld [vmem:[%s1 + $0x230] sm:$0xff]
  %v122 = vld [vmem:[%s1 + $0x238] sm:$0xff]
  %v123 = vld [vmem:[%s1 + $0x240] sm:$0xff]
  %v124 = vld [vmem:[%s1 + $0x248] sm:$0xff]
  %v125 = vld [vmem:[%s1 + $0x250] sm:$0xff]
  %v126 = vld [vmem:[%s1 + $0x258] sm:$0xff]
  %v127 = vld [vmem:[%s1 + $0x260] sm:$0xff]
  %v128 = vld [vmem:[%s1 + $0x268] sm:$0xff]
  %v129 = vld [vmem:[%s1 + $0x270] sm:$0xff]
  %v130 = vld [vmem:[%s1 + $0x278] sm:$0xff]
  %v131 = vld [vmem:[%s1 + $0x280] sm:$0xff]
  %v132 = vld [vmem:[%s1 + $0x288] sm:$0xff]
  %v133 = vld [vmem:[%s1 + $0x290] sm:$0xff]
  %v134 = vld [vmem:[%s1 + $0x298] sm:$0xff]
  %v135 = vld [vmem:[%s1 + $0x2a0] sm:$0xff]
  %v136 = vld [vmem:[%s1 + $0x2a8] sm:$0xff]
  %v137 = vld [vmem:[%s1 + $0x2b0] sm:$0xff]
  %v138 = vld [vmem:[%s1 + $0x2b8] sm:$0xff]
  %v139 = vld [vmem:[%s1 + $0x2c0] sm:$0xff]
  %v140 = vld [vmem:[%s1 + $0x2c8] sm:$0xff]
  %v141 = vld [vmem:[%s1 + $0x2d0] sm:$0xff]
  %v142 = vld [vmem:[%s1 + $0x2d8] sm:$0xff]
  %v143 = vld [vmem:[%s1 + $0x2e0] sm:$0xff]
  %v144 = vld [vmem:[%s1 + $0x2e8] sm:$0xff]
  %v145 = vld [vmem:[%s1 + $0x2f0] sm:$0xff]
  %v146 = vld [vmem:[%s1 + $0x2f8] sm:$0xff]
  %v147 = vld [vmem:[%s1 + $0x300] sm:$0xff]
  %v148 = vld [vmem:[%s1 + $0x308] sm:$0xff]
  %v149 = vld [vmem:[%s1 + $0x310] sm:$0xff]
  %v150 = vld [vmem:[%s1 + $0x318] sm:$0xff]
  %v151 = vld [vmem:[%s1 + $0x320] sm:$0xff]
  %v152 = vld [vmem:[%s1 + $0x328] sm:$0xff]
  %v153 = vld [vmem:[%s1 + $0x330] sm:$0xff]
  %v154 = vld [vmem:[%s1 + $0x338] sm:$0xff]
  %v155 = vld [vmem:[%s1 + $0x340] sm:$0xff]
  %v156 = vld [vmem:[%s1 + $0x348] sm:$0xff]
  %v157 = vld [vmem:[%s1 + $0x350] sm:$0xff]
  %v158 = vld [vmem:[%s1 + $0x358] sm:$0xff]
  %v159 = vld [vmem:[%s1 + $0x360] sm:$0xff]
  %v160 = vld [vmem:[%s1 + $0x368] sm:$0xff]
  %v161 = vld [vmem:[%s1 + $0x370] sm:$0xff]
  %v162 = vld [vmem:[%s1 + $0x378] sm:$0xff]
  %v163 = vld [vmem:[%s1 + $0x380] sm:$0xff]
  %v164 = vld [vmem:[%s1 + $0x388] sm:$0xff]
  %v165 = vld [vmem:[%s1 + $0x390] sm:$0xff]
  %v166 = vld [vmem:[%s1 + $0x398] sm:$0xff]
  %v167 = vld [vmem:[%s1 + $0x3a0] sm:$0xff]
  %v168 = vld [vmem:[%s1 + $0x3a8] sm:$0xff]
  %v169 = vld [vmem:[%s1 + $0x3b0] sm:$0xff]
  %v170 = vld [vmem:[%s1 + $0x3b8] sm:$0xff]
  %v171 = vld [vmem:[%s1 + $0x3c0] sm:$0xff]
  %v172 = vld [vmem:[%s1 + $0x3c8] sm:$0xff]
  %v173 = vld [vmem:[%s1 + $0x3d0] sm:$0xff]
  %v174 = vld [vmem:[%s1 + $0x3d8] sm:$0xff]
  %v175 = vld [vmem:[%s1 + $0x3e0] sm:$0xff]
  %v176 = vld [vmem:[%s1 + $0x3e8] sm:$0xff]
  %v177 = vld [vmem:[%s1 + $0x3f0] sm:$0xff]
  %v178 = vld [vmem:[%s1 + $0x3f8] sm:$0xff]
  %v179 = vld [vmem:[%s1 + $0x400] sm:$0xff]
  %v180 = vld [vmem:[%s1 + $0x408] sm:$0xff]
  %v181 = vld [vmem:[%s1 + $0x410] sm:$0xff]
  %v182 = vld [vmem:[%s1 + $0x418] sm:$0xff]
  %v183 = vld [vmem:[%s1 + $0x420] sm:$0xff]
  %v184 = vld [vmem:[%s1 + $0x428] sm:$0xff]
  %v185 = vld [vmem:[%s1 + $0x430] sm:$0xff]
  %v186 = vld [vmem:[%s1 + $0x438] sm:$0xff]
  %v187 = vld [vmem:[%s1 + $0x440] sm:$0xff]
  %v188 = vld [vmem:[%s1 + $0x448] sm:$0xff]
  %v189 = vld [vmem:[%s1 + $0x450] sm:$0xff]
  %v190 = vld [vmem:[%s1 + $0x458] sm:$0xff]
  %v191 = vld [vmem:[%s1 + $0x460] sm:$0xff]
  %v192 = vld [vmem:[%s1 + $0x468] sm:$0xff]
  %v193 = vld [vmem:[%s1 + $0x470] sm:$0xff]
  %v194 = vld [vmem:[%s1 + $0x478] sm:$0xff]
  %v195 = vld [vmem:[%s1 + $0x480] sm:$0xff]
  %v196 = vld [vmem:[%s1 + $0x488] sm:$0xff]
  %v197 = vld [vmem:[%s1 + $0x490] sm:$0xff]
  %v198 = vld [vmem:[%s1 + $0x498] sm:$0xff]
  %v199 = vld [vmem:[%s1 + $0x4a0] sm:$0xff]
  %v200 = vld [vmem:[%s1 + $0x4a8] sm:$0xff]
  %v201 = vld [vmem:[%s1 + $0x4b0] sm:$0xff]
  %v202 = vld [vmem:[%s1 + $0x4b8] sm:$0xff]
  %v203 = vld [vmem:[%s1 + $0x4c0] sm:$0xff]
  %v204 = vld [vmem:[%s1 + $0x4c8] sm:$0xff]
  %v205 = vld [vmem:[%s1 + $0x4d0] sm:$0xff]
  %v206 = vld [vmem:[%s1 + $0x4d8] sm:$0xff]
  %v207 = vld [vmem:[%s1 + $0x4e0] sm:$0xff]
  %v208 = vld [vmem:[%s1 + $0x4e8] sm:$0xff]
  %v209 = vld [vmem:[%s1 + $0x4f0] sm:$0xff]
  %v210 = vld [vmem:[%s1 + $0x4f8] sm:$0xff]
  %v211 = vld [vmem:[%s1 + $0x500] sm:$0xff]
  %v212 = vld [vmem:[%s1 + $0x508] sm:$0xff]
  %v213 = vld [vmem:[%s1 + $0x510] sm:$0xff]
  %v214 = vld [vmem:[%s1 + $0x518] sm:$0xff]
  %v215 = vld [vmem:[%s1 + $0x520] sm:$0xff]
  %v216 = vld [vmem:[%s1 + $0x528] sm:$0xff]
  %v217 = vld [vmem:[%s1 + $0x530] sm:$0xff]
  %v218 = vld [vmem:[%s1 + $0x538] sm:$0xff]
  %v219 = vld [vmem:[%s1 + $0x540] sm:$0xff]
  %v220 = vld [vmem:[%s1 + $0x548] sm:$0xff]
  %v221 = vld [vmem:[%s1 + $0x550] sm:$0xff]
  %v222 = vld [vmem:[%s1 + $0x558] sm:$0xff]
  %v223 = vld [vmem:[%s1 + $0x560] sm:$0xff]
  %v224 = vld [vmem:[%s1 + $0x568] sm:$0xff]
  %v225 = vld [vmem:[%s1 + $0x570] sm:$0xff]
  %v226 = vld [vmem:[%s1 + $0x578] sm:$0xff]
  %v227 = vld [vmem:[%s1 + $0x580] sm:$0xff]
  %v228 = vld [vmem:[%s1 + $0x588] sm:$0xff]
  %v229 = vld [vmem:[%s1 + $0x590] sm:$0xff]
  %v230 = vld [vmem:[%s1 + $0x598] sm:$0xff]
  %v231 = vld [vmem:[%s1 + $0x5a0] sm:$0xff]
  %v232 = vld [vmem:[%s1 + $0x5a8] sm:$0xff]
  %v233 = vld [vmem:[%s1 + $0x5b0] sm:$0xff]
  %v234 = vld [vmem:[%s1 + $0x5b8] sm:$0xff]
  %v235 = vld [vmem:[%s1 + $0x5c0] sm:$0xff]
  %v236 = vld [vmem:[%s1 + $0x5c8] sm:$0xff]
  %v237 = vld [vmem:[%s1 + $0x5d0] sm:$0xff]
  %v238 = vld [vmem:[%s1 + $0x5d8] sm:$0xff]
  %v239 = vld [vmem:[%s1 + $0x5e0] sm:$0xff]
  %v240 = vld [vmem:[%s1 + $0x5e8] sm:$0xff]
  %v241 = vld [vmem:[%s1 + $0x5f0] sm:$0xff]
  %v242 = vld [vmem:[%s1 + $0x5f8] sm:$0xff]
  %v243 = vld [vmem:[%s1 + $0x600] sm:$0xff]
  %v244 = vld [vmem:[%s1 + $0x608] sm:$0xff]
  %v245 = vld [vmem:[%s1 + $0x610] sm:$0xff]
  %v246 = vld [vmem:[%s1 + $0x618] sm:$0xff]
  %v247 = vld [vmem:[%s1 + $0x620] sm:$0xff]
  %v248 = vld [vmem:[%s1 + $0x628] sm:$0xff]
  %v249 = vld [vmem:[%s1 + $0x630] sm:$0xff]
  %v250 = vld [vmem:[%s1 + $0x638] sm:$0xff]
  %v251 = vld [vmem:[%s1 + $0x640] sm:$0xff]
  %v252 = vld [vmem:[%s1 + $0x648] sm:$0xff]
  %v253 = vld [vmem:[%s1 + $0x650] sm:$0xff]
  %v254 = vld [vmem:[%s1 + $0x658] sm:$0xff]
  %v255 = vld [vmem:[%s1 + $0x660] sm:$0xff]
  %v256 = vld [vmem:[%s1 + $0x668] sm:$0xff]
  %v257 = vld [vmem:[%s1 + $0x670] sm:$0xff]
  %v258 = vld [vmem:[%s1 + $0x678] sm:$0xff]
  %v259 = vld [vmem:[%s1 + $0x680] sm:$0xff]
  %v260 = vld [vmem:[%s1 + $0x688] sm:$0xff]
  %v261 = vld [vmem:[%s1 + $0x690] sm:$0xff]
  %v262 = vld [vmem:[%s1 + $0x698] sm:$0xff]
  %v263 = vld [vmem:[%s1 + $0x6a0] sm:$0xff]
  %v264 = vld [vmem:[%s1 + $0x6a8] sm:$0xff]
  %v265 = vld [vmem:[%s1 + $0x6b0] sm:$0xff]
  %v266 = vld [vmem:[%s1 + $0x6b8] sm:$0xff]
  %v267 = vld [vmem:[%s1 + $0x6c0] sm:$0xff]
  %v268 = vld [vmem:[%s1 + $0x6c8] sm:$0xff]
  %v269 = vld [vmem:[%s1 + $0x6d0] sm:$0xff]
  %v270 = vld [vmem:[%s1 + $0x6d8] sm:$0xff]
  %v271 = vld [vmem:[%s1 + $0x6e0] sm:$0xff]
  %v272 = vld [vmem:[%s1 + $0x6e8] sm:$0xff]
  %v273 = vld [vmem:[%s1 + $0x6f0] sm:$0xff]
  %v274 = vld [vmem:[%s1 + $0x6f8] sm:$0xff]
  %v275 = vld [vmem:[%s1 + $0x700] sm:$0xff]
  %v276 = vld [vmem:[%s1 + $0x708] sm:$0xff]
  %v277 = vld [vmem:[%s1 + $0x710] sm:$0xff]
  %v278 = vld [vmem:[%s1 + $0x718] sm:$0xff]
  %v279 = vld [vmem:[%s1 + $0x720] sm:$0xff]
  %v280 = vld [vmem:[%s1 + $0x728] sm:$0xff]
  %v281 = vld [vmem:[%s1 + $0x730] sm:$0xff]
  %v282 = vld [vmem:[%s1 + $0x738] sm:$0xff]
  %v283 = vld [vmem:[%s1 + $0x740] sm:$0xff]
  %v284 = vld [vmem:[%s1 + $0x748] sm:$0xff]
  %v285 = vld [vmem:[%s1 + $0x750] sm:$0xff]
  %v286 = vld [vmem:[%s1 + $0x758] sm:$0xff]
  %v287 = vld [vmem:[%s1 + $0x760] sm:$0xff]
  %v288 = vld [vmem:[%s1 + $0x768] sm:$0xff]
  %v289 = vld [vmem:[%s1 + $0x770] sm:$0xff]
  %v290 = vld [vmem:[%s1 + $0x778] sm:$0xff]
  %v291 = vld [vmem:[%s1 + $0x780] sm:$0xff]
  %v292 = vld [vmem:[%s1 + $0x788] sm:$0xff]
  %v293 = vld [vmem:[%s1 + $0x790] sm:$0xff]
  %v294 = vld [vmem:[%s1 + $0x798] sm:$0xff]
  %v295 = vld [vmem:[%s1 + $0x7a0] sm:$0xff]
  %v296 = vld [vmem:[%s1 + $0x7a8] sm:$0xff]
  %v297 = vld [vmem:[%s1 + $0x7b0] sm:$0xff]
  %v298 = vld [vmem:[%s1 + $0x7b8] sm:$0xff]
  %v299 = vld [vmem:[%s1 + $0x7c0] sm:$0xff]
  %v300 = vld [vmem:[%s1 + $0x7c8] sm:$0xff]
  %v301 = vld [vmem:[%s1 + $0x7d0] sm:$0xff]
  %v302 = vld [vmem:[%s1 + $0x7d8] sm:$0xff]
  %v303 = vld [vmem:[%s1 + $0x7e0] sm:$0xff]
  %v304 = vld [vmem:[%s1 + $0x7e8] sm:$0xff]
  %v305 = vld [vmem:[%s1 + $0x7f0] sm:$0xff]
  %v306 = vld [vmem:[%s1 + $0x7f8] sm:$0xff]
  %v307 = vld [vmem:[%s1 + $0x800] sm:$0xff]
  %v308 = vld [vmem:[%s1 + $0x808] sm:$0xff]
  %v309 = vld [vmem:[%s1 + $0x810] sm:$0xff]
  %v310 = vld [vmem:[%s1 + $0x818] sm:$0xff]
  %v311 = vld [vmem:[%s1 + $0x820] sm:$0xff]
  %v312 = vld [vmem:[%s1 + $0x828] sm:$0xff]
  %v313 = vld [vmem:[%s1 + $0x830] sm:$0xff]
  %v314 = vld [vmem:[%s1 + $0x838] sm:$0xff]
  %v315 = vld [vmem:[%s1 + $0x840] sm:$0xff]
  %v316 = vld [vmem:[%s1 + $0x848] sm:$0xff]
  %v317 = vld [vmem:[%s1 + $0x850] sm:$0xff]
  %v318 = vld [vmem:[%s1 + $0x858] sm:$0xff]
  %v319 = vld [vmem:[%s1 + $0x860] sm:$0xff]
  %v320 = vld [vmem:[%s1 + $0x868] sm:$0xff]
  %v321 = vld [vmem:[%s1 + $0x870] sm:$0xff]
  %v322 = vld [vmem:[%s1 + $0x878] sm:$0xff]
  %v323 = vld [vmem:[%s1 + $0x880] sm:$0xff]
  %v324 = vld [vmem:[%s1 + $0x888] sm:$0xff]
  %v325 = vld [vmem:[%s1 + $0x890] sm:$0xff]
  %v326 = vld [vmem:[%s1 + $0x898] sm:$0xff]
  %v327 = vld [vmem:[%s1 + $0x8a0] sm:$0xff]
  %v328 = vld [vmem:[%s1 + $0x8a8] sm:$0xff]
  %v329 = vld [vmem:[%s1 + $0x8b0] sm:$0xff]
  %v330 = vld [vmem:[%s1 + $0x8b8] sm:$0xff]
  %v331 = vld [vmem:[%s1 + $0x8c0] sm:$0xff]
  %v332 = vld [vmem:[%s1 + $0x8c8] sm:$0xff]
  %v333 = vld [vmem:[%s1 + $0x8d0] sm:$0xff]
  %v334 = vld [vmem:[%s1 + $0x8d8] sm:$0xff]
  %v335 = vld [vmem:[%s1 + $0x8e0] sm:$0xff]
  %v336 = vld [vmem:[%s1 + $0x8e8] sm:$0xff]
  %v337 = vld [vmem:[%s1 + $0x8f0] sm:$0xff]
  %v338 = vld [vmem:[%s1 + $0x8f8] sm:$0xff]
  %v339 = vld [vmem:[%s1 + $0x900] sm:$0xff]
  %v340 = vld [vmem:[%s1 + $0x908] sm:$0xff]
  %v341 = vld [vmem:[%s1 + $0x910] sm:$0xff]
  %v342 = vld [vmem:[%s1 + $0x918] sm:$0xff]
  %v343 = vld [vmem:[%s1 + $0x920] sm:$0xff]
  %v344 = vld [vmem:[%s1 + $0x928] sm:$0xff]
  %v345 = vld [vmem:[%s1 + $0x930] sm:$0xff]
  %v346 = vld [vmem:[%s1 + $0x938] sm:$0xff]
  %v347 = vld [vmem:[%s1 + $0x940] sm:$0xff]
  %v348 = vld [vmem:[%s1 + $0x948] sm:$0xff]
  %v349 = vld [vmem:[%s1 + $0x950] sm:$0xff]
  %v350 = vld [vmem:[%s1 + $0x958] sm:$0xff]
  %v351 = vld [vmem:[%s1 + $0x960] sm:$0xff]
  %v352 = vld [vmem:[%s1 + $0x968] sm:$0xff]
  %v353 = vld [vmem:[%s1 + $0x970] sm:$0xff]
  %v354 = vld [vmem:[%s1 + $0x978] sm:$0xff]
  %v355 = vld [vmem:[%s1 + $0x980] sm:$0xff]
  %v356 = vld [vmem:[%s1 + $0x988] sm:$0xff]
  %v357 = vld [vmem:[%s1 + $0x990] sm:$0xff]
  %v358 = vld [vmem:[%s1 + $0x998] sm:$0xff]
  %v359 = vld [vmem:[%s1 + $0x9a0] sm:$0xff]
  %v360 = vld [vmem:[%s1 + $0x9a8] sm:$0xff]
  %v361 = vld [vmem:[%s1 + $0x9b0] sm:$0xff]
  %v362 = vld [vmem:[%s1 + $0x9b8] sm:$0xff]
  %v363 = vld [vmem:[%s1 + $0x9c0] sm:$0xff]
  %v364 = vld [vmem:[%s1 + $0x9c8] sm:$0xff]
  %v365 = vld [vmem:[%s1 + $0x9d0] sm:$0xff]
  %v366 = vld [vmem:[%s1 + $0x9d8] sm:$0xff]
  %v367 = vld [vmem:[%s1 + $0x9e0] sm:$0xff]
  %v368 = vld [vmem:[%s1 + $0x9e8] sm:$0xff]
  %v369 = vld [vmem:[%s1 + $0x9f0] sm:$0xff]
  %v370 = vld [vmem:[%s1 + $0x9f8] sm:$0xff]
  %v371 = vld [vmem:[%s1 + $0xa00] sm:$0xff]
  %v372 = vld [vmem:[%s1 + $0xa08] sm:$0xff]
  %v373 = vld [vmem:[%s1 + $0xa10] sm:$0xff]
  %v374 = vld [vmem:[%s1 + $0xa18] sm:$0xff]
  %v375 = vld [vmem:[%s1 + $0xa20] sm:$0xff]
  %v376 = vld [vmem:[%s1 + $0xa28] sm:$0xff]
  %v377 = vld [vmem:[%s1 + $0xa30] sm:$0xff]
  %v378 = vld [vmem:[%s1 + $0xa38] sm:$0xff]
  %v379 = vld [vmem:[%s1 + $0xa40] sm:$0xff]
  %v380 = vld [vmem:[%s1 + $0xa48] sm:$0xff]
  %v381 = vld [vmem:[%s1 + $0xa50] sm:$0xff]
  %v382 = vld [vmem:[%s1 + $0xa58] sm:$0xff]
  %v383 = vld [vmem:[%s1 + $0xa60] sm:$0xff]
  %v384 = vld [vmem:[%s1 + $0xa68] sm:$0xff]
  %v385 = vld [vmem:[%s1 + $0xa70] sm:$0xff]
  %v386 = vld [vmem:[%s1 + $0xa78] sm:$0xff]
  %v387 = vld [vmem:[%s1 + $0xa80] sm:$0xff]
  %v388 = vld [vmem:[%s1 + $0xa88] sm:$0xff]
  %v389 = vld [vmem:[%s1 + $0xa90] sm:$0xff]
  %v390 = vld [vmem:[%s1 + $0xa98] sm:$0xff]
  %v391 = vld [vmem:[%s1 + $0xaa0] sm:$0xff]
  %v392 = vld [vmem:[%s1 + $0xaa8] sm:$0xff]
  %v393 = vld [vmem:[%s1 + $0xab0] sm:$0xff]
  %v394 = vld [vmem:[%s1 + $0xab8] sm:$0xff]
  %v395 = vld [vmem:[%s1 + $0xac0] sm:$0xff]
  %v396 = vld [vmem:[%s1 + $0xac8] sm:$0xff]
  %v397 = vld [vmem:[%s1 + $0xad0] sm:$0xff]
  %v398 = vld [vmem:[%s1 + $0xad8] sm:$0xff]
  %v399 = vld [vmem:[%s1 + $0xae0] sm:$0xff]
  %v400 = vld [vmem:[%s1 + $0xae8] sm:$0xff]
  %v401 = vld [vmem:[%s1 + $0xaf0] sm:$0xff]
  %v402 = vld [vmem:[%s1 + $0xaf8] sm:$0xff]
  %v403 = vld [vmem:[%s1 + $0xb00] sm:$0xff]
  %v404 = vld [vmem:[%s1 + $0xb08] sm:$0xff]
  %v405 = vld [vmem:[%s1 + $0xb10] sm:$0xff]
  %v406 = vld [vmem:[%s1 + $0xb18] sm:$0xff]
  %v407 = vld [vmem:[%s1 + $0xb20] sm:$0xff]
  %v408 = vld [vmem:[%s1 + $0xb28] sm:$0xff]
  %v409 = vld [vmem:[%s1 + $0xb30] sm:$0xff]
  %v410 = vld [vmem:[%s1 + $0xb38] sm:$0xff]
  %v411 = vld [vmem:[%s1 + $0xb40] sm:$0xff]
  %v412 = vld [vmem:[%s1 + $0xb48] sm:$0xff]
  %v413 = vld [vmem:[%s1 + $0xb50] sm:$0xff]
  %v414 = vld [vmem:[%s1 + $0xb58] sm:$0xff]
  %v415 = vld [vmem:[%s1 + $0xb60] sm:$0xff]
  %v416 = vld [vmem:[%s1 + $0xb68] sm:$0xff]
  %v417 = vld [vmem:[%s1 + $0xb70] sm:$0xff]
  %v418 = vld [vmem:[%s1 + $0xb78] sm:$0xff]
  %v419 = vld [vmem:[%s1 + $0xb80] sm:$0xff]
  %v420 = vld [vmem:[%s1 + $0xb88] sm:$0xff]
  %v421 = vld [vmem:[%s1 + $0xb90] sm:$0xff]
  %v422 = vld [vmem:[%s1 + $0xb98] sm:$0xff]
  %v423 = vld [vmem:[%s1 + $0xba0] sm:$0xff]
  %v424 = vld [vmem:[%s1 + $0xba8] sm:$0xff]
  %v425 = vld [vmem:[%s1 + $0xbb0] sm:$0xff]
  %v426 = vld [vmem:[%s1 + $0xbb8] sm:$0xff]
  %v427 = vld [vmem:[%s1 + $0xbc0] sm:$0xff]
  %v428 = vld [vmem:[%s1 + $0xbc8] sm:$0xff]
  %v429 = vld [vmem:[%s1 + $0xbd0] sm:$0xff]
  %v430 = vld [vmem:[%s1 + $0xbd8] sm:$0xff]
  %v431 = vld [vmem:[%s1 + $0xbe0] sm:$0xff]
  %v432 = vld [vmem:[%s1 + $0xbe8] sm:$0xff]
  %v433 = vld [vmem:[%s1 + $0xbf0] sm:$0xff]
  %v434 = vld [vmem:[%s1 + $0xbf8] sm:$0xff]
  %v435 = vld [vmem:[%s1 + $0xc00] sm:$0xff]
  %v436 = vld [vmem:[%s1 + $0xc08] sm:$0xff]
  %v437 = vld [vmem:[%s1 + $0xc10] sm:$0xff]
  %v438 = vld [vmem:[%s1 + $0xc18] sm:$0xff]
  %v439 = vld [vmem:[%s1 + $0xc20] sm:$0xff]
  %v440 = vld [vmem:[%s1 + $0xc28] sm:$0xff]
  %v441 = vld [vmem:[%s1 + $0xc30] sm:$0xff]
  %v442 = vld [vmem:[%s1 + $0xc38] sm:$0xff]
  %v443 = vld [vmem:[%s1 + $0xc40] sm:$0xff]
  %v444 = vld [vmem:[%s1 + $0xc48] sm:$0xff]
  %v445 = vld [vmem:[%s1 + $0xc50] sm:$0xff]
  %v446 = vld [vmem:[%s1 + $0xc58] sm:$0xff]
  %v447 = vld [vmem:[%s1 + $0xc60] sm:$0xff]
  %v448 = vld [vmem:[%s1 + $0xc68] sm:$0xff]
  %v449 = vld [vmem:[%s1 + $0xc70] sm:$0xff]
  %v450 = vld [vmem:[%s1 + $0xc78] sm:$0xff]
  %v451 = vld [vmem:[%s2] sm:$0x1]
  %v453 = vlaneseq
  %v454 = vshrl.u32 %v453, 7
  %v455 = vsub.s32 0, %v454
  %v456 = vrot.slane %v451, %v455
  %458 = vmatprep.subr.mxu0 0.0
  %459 = vmatpush1.msra.mxu0 %v51
  %460 = vmatprep.subr.mxu0 0.0
  %461 = vmatpush1.msra.mxu0 %v52
  %462 = vmatprep.subr.mxu0 0.0
  %463 = vmatpush1.msra.mxu0 %v53
  %464 = vmatprep.subr.mxu0 0.0
  %465 = vmatpush1.msra.mxu0 %v54
  %466 = vmatprep.subr.mxu0 0.0
  %467 = vmatpush1.msra.mxu0 %v55
  %468 = vmatprep.subr.mxu0 0.0
  %469 = vmatpush1.msra.mxu0 %v56
  %470 = vmatprep.subr.mxu0 0.0
  %471 = vmatpush1.msra.mxu0 %v57
  %472 = vmatprep.subr.mxu0 0.0
  %473 = vmatpush1.msra.mxu0 %v58
  %474 = vmatprep.subr.mxu0 0.0
  %475 = vmatpush1.msra.mxu0 %v59
  %476 = vmatprep.subr.mxu0 0.0
  %477 = vmatpush1.msra.mxu0 %v60
  %478 = vmatprep.subr.mxu0 0.0
  %479 = vmatpush1.msra.mxu0 %v61
  %480 = vmatprep.subr.mxu0 0.0
  %481 = vmatpush1.msra.mxu0 %v62
  %482 = vmatprep.subr.mxu0 0.0
  %483 = vmatpush1.msra.mxu0 %v63
  %484 = vmatprep.subr.mxu0 0.0
  %485 = vmatpush1.msra.mxu0 %v64
  %486 = vmatprep.subr.mxu0 0.0
  %487 = vmatpush1.msra.mxu0 %v65
  %488 = vmatprep.subr.mxu0 0.0
  %489 = vmatpush1.msra.mxu0 %v66
  %490 = vmatprep.subr.mxu0 0.0
  %491 = vmatpush1.msra.mxu0 %v67
  %492 = vmatprep.subr.mxu0 0.0
  %493 = vmatpush1.msra.mxu0 %v68
  %494 = vmatprep.subr.mxu0 0.0
  %495 = vmatpush1.msra.mxu0 %v69
  %496 = vmatprep.subr.mxu0 0.0
  %497 = vmatpush1.msra.mxu0 %v70
  %498 = vmatprep.subr.mxu0 0.0
  %499 = vmatpush1.msra.mxu0 %v71
  %500 = vmatprep.subr.mxu0 0.0
  %501 = vmatpush1.msra.mxu0 %v72
  %502 = vmatprep.subr.mxu0 0.0
  %503 = vmatpush1.msra.mxu0 %v73
  %504 = vmatprep.subr.mxu0 0.0
  %505 = vmatpush1.msra.mxu0 %v74
  %506 = vmatprep.subr.mxu0 0.0
  %507 = vmatpush1.msra.mxu0 %v75
  %508 = vmatprep.subr.mxu0 0.0
  %509 = vmatpush1.msra.mxu0 %v76
  %510 = vmatprep.subr.mxu0 0.0
  %511 = vmatpush1.msra.mxu0 %v77
  %512 = vmatprep.subr.mxu0 0.0
  %513 = vmatpush1.msra.mxu0 %v78
  %514 = vmatprep.subr.mxu0 0.0
  %515 = vmatpush1.msra.mxu0 %v79
  %516 = vmatprep.subr.mxu0 0.0
  %517 = vmatpush1.msra.mxu0 %v80
  %518 = vmatprep.subr.mxu0 0.0
  %519 = vmatpush1.msra.mxu0 %v81
  %520 = vmatprep.subr.mxu0 0.0
  %521 = vmatpush1.msra.mxu0 %v82
  %522 = vmatprep.mubr.f32.mxu0 %v27
  %523 = vmatmul.mubr.f32.gmra.mrb[0].mxu0 %v26
  %v524 = vpop.f32.mrb[0].mxu0
  %v525 = vadd.f32 %v456, %v524
  %v526 = vpop.f32.mrb[0].mxu0
  %527 = vdwg.mxu0
  %528 = vmatprep.subr.mxu0 0.0
  %529 = vmatpush1.msra.mxu0 %v83
  %530 = vmatprep.subr.mxu0 0.0
  %531 = vmatpush1.msra.mxu0 %v84
  %532 = vmatprep.subr.mxu0 0.0
  %533 = vmatpush1.msra.mxu0 %v85
  %534 = vmatprep.subr.mxu0 0.0
  %535 = vmatpush1.msra.mxu0 %v86
  %536 = vmatprep.subr.mxu0 0.0
  %537 = vmatpush1.msra.mxu0 %v87
  %538 = vmatprep.subr.mxu0 0.0
  %539 = vmatpush1.msra.mxu0 %v88
  %540 = vmatprep.subr.mxu0 0.0
  %541 = vmatpush1.msra.mxu0 %v89
  %542 = vmatprep.subr.mxu0 0.0
  %543 = vmatpush1.msra.mxu0 %v90
  %544 = vmatprep.subr.mxu0 0.0
  %545 = vmatpush1.msra.mxu0 %v91
  %546 = vmatprep.subr.mxu0 0.0
  %547 = vmatpush1.msra.mxu0 %v92
  %548 = vmatprep.subr.mxu0 0.0
  %549 = vmatpush1.msra.mxu0 %v93
  %550 = vmatprep.subr.mxu0 0.0
  %551 = vmatpush1.msra.mxu0 %v94
  %552 = vmatprep.subr.mxu0 0.0
  %553 = vmatpush1.msra.mxu0 %v95
  %554 = vmatprep.subr.mxu0 0.0
  %555 = vmatpush1.msra.mxu0 %v96
  %556 = vmatprep.subr.mxu0 0.0
  %557 = vmatpush1.msra.mxu0 %v97
  %558 = vmatprep.subr.mxu0 0.0
  %559 = vmatpush1.msra.mxu0 %v98
  %560 = vmatprep.subr.mxu0 0.0
  %561 = vmatpush1.msra.mxu0 %v99
  %562 = vmatprep.subr.mxu0 0.0
  %563 = vmatpush1.msra.mxu0 %v100
  %564 = vmatprep.subr.mxu0 0.0
  %565 = vmatpush1.msra.mxu0 %v101
  %566 = vmatprep.subr.mxu0 0.0
  %567 = vmatpush1.msra.mxu0 %v102
  %568 = vmatprep.subr.mxu0 0.0
  %569 = vmatpush1.msra.mxu0 %v103
  %570 = vmatprep.subr.mxu0 0.0
  %571 = vmatpush1.msra.mxu0 %v104
  %572 = vmatprep.subr.mxu0 0.0
  %573 = vmatpush1.msra.mxu0 %v105
  %574 = vmatprep.subr.mxu0 0.0
  %575 = vmatpush1.msra.mxu0 %v106
  %576 = vmatprep.subr.mxu0 0.0
  %577 = vmatpush1.msra.mxu0 %v107
  %578 = vmatprep.subr.mxu0 0.0
  %579 = vmatpush1.msra.mxu0 %v108
  %580 = vmatprep.subr.mxu0 0.0
  %581 = vmatpush1.msra.mxu0 %v109
  %582 = vmatprep.subr.mxu0 0.0
  %583 = vmatpush1.msra.mxu0 %v110
  %584 = vmatprep.subr.mxu0 0.0
  %585 = vmatpush1.msra.mxu0 %v111
  %586 = vmatprep.subr.mxu0 0.0
  %587 = vmatpush1.msra.mxu0 %v112
  %588 = vmatprep.subr.mxu0 0.0
  %589 = vmatpush1.msra.mxu0 %v113
  %590 = vmatprep.subr.mxu0 0.0
  %591 = vmatpush1.msra.mxu0 %v114
  %592 = vmatprep.mubr.f32.mxu0 %v29
  %593 = vmatmul.mubr.f32.gmra.mrb[0].mxu0 %v28
  %v594 = vpop.f32.mrb[0].mxu0
  %v595 = vadd.f32 %v525, %v594
  %v596 = vpop.f32.mrb[0].mxu0
  %597 = vdwg.mxu0
  %598 = vmatprep.subr.mxu0 0.0
  %599 = vmatpush1.msra.mxu0 %v115
  %600 = vmatprep.subr.mxu0 0.0
  %601 = vmatpush1.msra.mxu0 %v116
  %602 = vmatprep.subr.mxu0 0.0
  %603 = vmatpush1.msra.mxu0 %v117
  %604 = vmatprep.subr.mxu0 0.0
  %605 = vmatpush1.msra.mxu0 %v118
  %606 = vmatprep.subr.mxu0 0.0
  %607 = vmatpush1.msra.mxu0 %v119
  %608 = vmatprep.subr.mxu0 0.0
  %609 = vmatpush1.msra.mxu0 %v120
  %610 = vmatprep.subr.mxu0 0.0
  %611 = vmatpush1.msra.mxu0 %v121
  %612 = vmatprep.subr.mxu0 0.0
  %613 = vmatpush1.msra.mxu0 %v122
  %614 = vmatprep.subr.mxu0 0.0
  %615 = vmatpush1.msra.mxu0 %v123
  %616 = vmatprep.subr.mxu0 0.0
  %617 = vmatpush1.msra.mxu0 %v124
  %618 = vmatprep.subr.mxu0 0.0
  %619 = vmatpush1.msra.mxu0 %v125
  %620 = vmatprep.subr.mxu0 0.0
  %621 = vmatpush1.msra.mxu0 %v126
  %622 = vmatprep.subr.mxu0 0.0
  %623 = vmatpush1.msra.mxu0 %v127
  %624 = vmatprep.subr.mxu0 0.0
  %625 = vmatpush1.msra.mxu0 %v128
  %626 = vmatprep.subr.mxu0 0.0
  %627 = vmatpush1.msra.mxu0 %v129
  %628 = vmatprep.subr.mxu0 0.0
  %629 = vmatpush1.msra.mxu0 %v130
  %630 = vmatprep.subr.mxu0 0.0
  %631 = vmatpush1.msra.mxu0 %v131
  %632 = vmatprep.subr.mxu0 0.0
  %633 = vmatpush1.msra.mxu0 %v132
  %634 = vmatprep.subr.mxu0 0.0
  %635 = vmatpush1.msra.mxu0 %v133
  %636 = vmatprep.subr.mxu0 0.0
  %637 = vmatpush1.msra.mxu0 %v134
  %638 = vmatprep.subr.mxu0 0.0
  %639 = vmatpush1.msra.mxu0 %v135
  %640 = vmatprep.subr.mxu0 0.0
  %641 = vmatpush1.msra.mxu0 %v136
  %642 = vmatprep.subr.mxu0 0.0
  %643 = vmatpush1.msra.mxu0 %v137
  %644 = vmatprep.subr.mxu0 0.0
  %645 = vmatpush1.msra.mxu0 %v138
  %646 = vmatprep.subr.mxu0 0.0
  %647 = vmatpush1.msra.mxu0 %v139
  %648 = vmatprep.subr.mxu0 0.0
  %649 = vmatpush1.msra.mxu0 %v140
  %650 = vmatprep.subr.mxu0 0.0
  %651 = vmatpush1.msra.mxu0 %v141
  %652 = vmatprep.subr.mxu0 0.0
  %653 = vmatpush1.msra.mxu0 %v142
  %654 = vmatprep.subr.mxu0 0.0
  %655 = vmatpush1.msra.mxu0 %v143
  %656 = vmatprep.subr.mxu0 0.0
  %657 = vmatpush1.msra.mxu0 %v144
  %658 = vmatprep.subr.mxu0 0.0
  %659 = vmatpush1.msra.mxu0 %v145
  %660 = vmatprep.subr.mxu0 0.0
  %661 = vmatpush1.msra.mxu0 %v146
  %662 = vmatprep.mubr.f32.mxu0 %v31
  %663 = vmatmul.mubr.f32.gmra.mrb[0].mxu0 %v30
  %v664 = vpop.f32.mrb[0].mxu0
  %v665 = vadd.f32 %v595, %v664
  %v666 = vpop.f32.mrb[0].mxu0
  %667 = vdwg.mxu0
  %668 = vmatprep.subr.mxu0 0.0
  %669 = vmatpush1.msra.mxu0 %v147
  %670 = vmatprep.subr.mxu0 0.0
  %671 = vmatpush1.msra.mxu0 %v148
  %672 = vmatprep.subr.mxu0 0.0
  %673 = vmatpush1.msra.mxu0 %v149
  %674 = vmatprep.subr.mxu0 0.0
  %675 = vmatpush1.msra.mxu0 %v150
  %676 = vmatprep.subr.mxu0 0.0
  %677 = vmatpush1.msra.mxu0 %v151
  %678 = vmatprep.subr.mxu0 0.0
  %679 = vmatpush1.msra.mxu0 %v152
  %680 = vmatprep.subr.mxu0 0.0
  %681 = vmatpush1.msra.mxu0 %v153
  %682 = vmatprep.subr.mxu0 0.0
  %683 = vmatpush1.msra.mxu0 %v154
  %684 = vmatprep.subr.mxu0 0.0
  %685 = vmatpush1.msra.mxu0 %v155
  %686 = vmatprep.subr.mxu0 0.0
  %687 = vmatpush1.msra.mxu0 %v156
  %688 = vmatprep.subr.mxu0 0.0
  %689 = vmatpush1.msra.mxu0 %v157
  %690 = vmatprep.subr.mxu0 0.0
  %691 = vmatpush1.msra.mxu0 %v158
  %692 = vmatprep.subr.mxu0 0.0
  %693 = vmatpush1.msra.mxu0 %v159
  %694 = vmatprep.subr.mxu0 0.0
  %695 = vmatpush1.msra.mxu0 %v160
  %696 = vmatprep.subr.mxu0 0.0
  %697 = vmatpush1.msra.mxu0 %v161
  %698 = vmatprep.subr.mxu0 0.0
  %699 = vmatpush1.msra.mxu0 %v162
  %700 = vmatprep.subr.mxu0 0.0
  %701 = vmatpush1.msra.mxu0 %v163
  %702 = vmatprep.subr.mxu0 0.0
  %703 = vmatpush1.msra.mxu0 %v164
  %704 = vmatprep.subr.mxu0 0.0
  %705 = vmatpush1.msra.mxu0 %v165
  %706 = vmatprep.subr.mxu0 0.0
  %707 = vmatpush1.msra.mxu0 %v166
  %708 = vmatprep.subr.mxu0 0.0
  %709 = vmatpush1.msra.mxu0 %v167
  %710 = vmatprep.subr.mxu0 0.0
  %711 = vmatpush1.msra.mxu0 %v168
  %712 = vmatprep.subr.mxu0 0.0
  %713 = vmatpush1.msra.mxu0 %v169
  %714 = vmatprep.subr.mxu0 0.0
  %715 = vmatpush1.msra.mxu0 %v170
  %716 = vmatprep.subr.mxu0 0.0
  %717 = vmatpush1.msra.mxu0 %v171
  %718 = vmatprep.subr.mxu0 0.0
  %719 = vmatpush1.msra.mxu0 %v172
  %720 = vmatprep.subr.mxu0 0.0
  %721 = vmatpush1.msra.mxu0 %v173
  %722 = vmatprep.subr.mxu0 0.0
  %723 = vmatpush1.msra.mxu0 %v174
  %724 = vmatprep.subr.mxu0 0.0
  %725 = vmatpush1.msra.mxu0 %v175
  %726 = vmatprep.subr.mxu0 0.0
  %727 = vmatpush1.msra.mxu0 %v176
  %728 = vmatprep.subr.mxu0 0.0
  %729 = vmatpush1.msra.mxu0 %v177
  %730 = vmatprep.subr.mxu0 0.0
  %731 = vmatpush1.msra.mxu0 %v178
  %732 = vmatprep.mubr.f32.mxu0 %v33
  %733 = vmatmul.mubr.f32.gmra.mrb[0].mxu0 %v32
  %v734 = vpop.f32.mrb[0].mxu0
  %v735 = vadd.f32 %v665, %v734
  %v736 = vpop.f32.mrb[0].mxu0
  %737 = vdwg.mxu0
  %738 = vmatprep.subr.mxu0 0.0
  %739 = vmatpush1.msra.mxu0 %v179
  %740 = vmatprep.subr.mxu0 0.0
  %741 = vmatpush1.msra.mxu0 %v180
  %742 = vmatprep.subr.mxu0 0.0
  %743 = vmatpush1.msra.mxu0 %v181
  %744 = vmatprep.subr.mxu0 0.0
  %745 = vmatpush1.msra.mxu0 %v182
  %746 = vmatprep.subr.mxu0 0.0
  %747 = vmatpush1.msra.mxu0 %v183
  %748 = vmatprep.subr.mxu0 0.0
  %749 = vmatpush1.msra.mxu0 %v184
  %750 = vmatprep.subr.mxu0 0.0
  %751 = vmatpush1.msra.mxu0 %v185
  %752 = vmatprep.subr.mxu0 0.0
  %753 = vmatpush1.msra.mxu0 %v186
  %754 = vmatprep.subr.mxu0 0.0
  %755 = vmatpush1.msra.mxu0 %v187
  %756 = vmatprep.subr.mxu0 0.0
  %757 = vmatpush1.msra.mxu0 %v188
  %758 = vmatprep.subr.mxu0 0.0
  %759 = vmatpush1.msra.mxu0 %v189
  %760 = vmatprep.subr.mxu0 0.0
  %761 = vmatpush1.msra.mxu0 %v190
  %762 = vmatprep.subr.mxu0 0.0
  %763 = vmatpush1.msra.mxu0 %v191
  %764 = vmatprep.subr.mxu0 0.0
  %765 = vmatpush1.msra.mxu0 %v192
  %766 = vmatprep.subr.mxu0 0.0
  %767 = vmatpush1.msra.mxu0 %v193
  %768 = vmatprep.subr.mxu0 0.0
  %769 = vmatpush1.msra.mxu0 %v194
  %770 = vmatprep.subr.mxu0 0.0
  %771 = vmatpush1.msra.mxu0 %v195
  %772 = vmatprep.subr.mxu0 0.0
  %773 = vmatpush1.msra.mxu0 %v196
  %774 = vmatprep.subr.mxu0 0.0
  %775 = vmatpush1.msra.mxu0 %v197
  %776 = vmatprep.subr.mxu0 0.0
  %777 = vmatpush1.msra.mxu0 %v198
  %778 = vmatprep.subr.mxu0 0.0
  %779 = vmatpush1.msra.mxu0 %v199
  %780 = vmatprep.subr.mxu0 0.0
  %781 = vmatpush1.msra.mxu0 %v200
  %782 = vmatprep.subr.mxu0 0.0
  %783 = vmatpush1.msra.mxu0 %v201
  %784 = vmatprep.subr.mxu0 0.0
  %785 = vmatpush1.msra.mxu0 %v202
  %786 = vmatprep.subr.mxu0 0.0
  %787 = vmatpush1.msra.mxu0 %v203
  %788 = vmatprep.subr.mxu0 0.0
  %789 = vmatpush1.msra.mxu0 %v204
  %790 = vmatprep.subr.mxu0 0.0
  %791 = vmatpush1.msra.mxu0 %v205
  %792 = vmatprep.subr.mxu0 0.0
  %793 = vmatpush1.msra.mxu0 %v206
  %794 = vmatprep.subr.mxu0 0.0
  %795 = vmatpush1.msra.mxu0 %v207
  %796 = vmatprep.subr.mxu0 0.0
  %797 = vmatpush1.msra.mxu0 %v208
  %798 = vmatprep.subr.mxu0 0.0
  %799 = vmatpush1.msra.mxu0 %v209
  %800 = vmatprep.subr.mxu0 0.0
  %801 = vmatpush1.msra.mxu0 %v210
  %802 = vmatprep.mubr.f32.mxu0 %v35
  %803 = vmatmul.mubr.f32.gmra.mrb[0].mxu0 %v34
  %v804 = vpop.f32.mrb[0].mxu0
  %v805 = vadd.f32 %v735, %v804
  %v806 = vpop.f32.mrb[0].mxu0
  %807 = vdwg.mxu0
  %808 = vmatprep.subr.mxu0 0.0
  %809 = vmatpush1.msra.mxu0 %v211
  %810 = vmatprep.subr.mxu0 0.0
  %811 = vmatpush1.msra.mxu0 %v212
  %812 = vmatprep.subr.mxu0 0.0
  %813 = vmatpush1.msra.mxu0 %v213
  %814 = vmatprep.subr.mxu0 0.0
  %815 = vmatpush1.msra.mxu0 %v214
  %816 = vmatprep.subr.mxu0 0.0
  %817 = vmatpush1.msra.mxu0 %v215
  %818 = vmatprep.subr.mxu0 0.0
  %819 = vmatpush1.msra.mxu0 %v216
  %820 = vmatprep.subr.mxu0 0.0
  %821 = vmatpush1.msra.mxu0 %v217
  %822 = vmatprep.subr.mxu0 0.0
  %823 = vmatpush1.msra.mxu0 %v218
  %824 = vmatprep.subr.mxu0 0.0
  %825 = vmatpush1.msra.mxu0 %v219
  %826 = vmatprep.subr.mxu0 0.0
  %827 = vmatpush1.msra.mxu0 %v220
  %828 = vmatprep.subr.mxu0 0.0
  %829 = vmatpush1.msra.mxu0 %v221
  %830 = vmatprep.subr.mxu0 0.0
  %831 = vmatpush1.msra.mxu0 %v222
  %832 = vmatprep.subr.mxu0 0.0
  %833 = vmatpush1.msra.mxu0 %v223
  %834 = vmatprep.subr.mxu0 0.0
  %835 = vmatpush1.msra.mxu0 %v224
  %836 = vmatprep.subr.mxu0 0.0
  %837 = vmatpush1.msra.mxu0 %v225
  %838 = vmatprep.subr.mxu0 0.0
  %839 = vmatpush1.msra.mxu0 %v226
  %840 = vmatprep.subr.mxu0 0.0
  %841 = vmatpush1.msra.mxu0 %v227
  %842 = vmatprep.subr.mxu0 0.0
  %843 = vmatpush1.msra.mxu0 %v228
  %844 = vmatprep.subr.mxu0 0.0
  %845 = vmatpush1.msra.mxu0 %v229
  %846 = vmatprep.subr.mxu0 0.0
  %847 = vmatpush1.msra.mxu0 %v230
  %848 = vmatprep.subr.mxu0 0.0
  %849 = vmatpush1.msra.mxu0 %v231
  %850 = vmatprep.subr.mxu0 0.0
  %851 = vmatpush1.msra.mxu0 %v232
  %852 = vmatprep.subr.mxu0 0.0
  %853 = vmatpush1.msra.mxu0 %v233
  %854 = vmatprep.subr.mxu0 0.0
  %855 = vmatpush1.msra.mxu0 %v234
  %856 = vmatprep.subr.mxu0 0.0
  %857 = vmatpush1.msra.mxu0 %v235
  %858 = vmatprep.subr.mxu0 0.0
  %859 = vmatpush1.msra.mxu0 %v236
  %860 = vmatprep.subr.mxu0 0.0
  %861 = vmatpush1.msra.mxu0 %v237
  %862 = vmatprep.subr.mxu0 0.0
  %863 = vmatpush1.msra.mxu0 %v238
  %864 = vmatprep.subr.mxu0 0.0
  %865 = vmatpush1.msra.mxu0 %v239
  %866 = vmatprep.subr.mxu0 0.0
  %867 = vmatpush1.msra.mxu0 %v240
  %868 = vmatprep.subr.mxu0 0.0
  %869 = vmatpush1.msra.mxu0 %v241
  %870 = vmatprep.subr.mxu0 0.0
  %871 = vmatpush1.msra.mxu0 %v242
  %872 = vmatprep.mubr.f32.mxu0 %v37
  %873 = vmatmul.mubr.f32.gmra.mrb[0].mxu0 %v36
  %v874 = vpop.f32.mrb[0].mxu0
  %v875 = vadd.f32 %v805, %v874
  %v876 = vpop.f32.mrb[0].mxu0
  %877 = vdwg.mxu0
  %878 = vmatprep.subr.mxu0 0.0
  %879 = vmatpush1.msra.mxu0 %v243
  %880 = vmatprep.subr.mxu0 0.0
  %881 = vmatpush1.msra.mxu0 %v244
  %882 = vmatprep.subr.mxu0 0.0
  %883 = vmatpush1.msra.mxu0 %v245
  %884 = vmatprep.subr.mxu0 0.0
  %885 = vmatpush1.msra.mxu0 %v246
  %886 = vmatprep.subr.mxu0 0.0
  %887 = vmatpush1.msra.mxu0 %v247
  %888 = vmatprep.subr.mxu0 0.0
  %889 = vmatpush1.msra.mxu0 %v248
  %890 = vmatprep.subr.mxu0 0.0
  %891 = vmatpush1.msra.mxu0 %v249
  %892 = vmatprep.subr.mxu0 0.0
  %893 = vmatpush1.msra.mxu0 %v250
  %894 = vmatprep.subr.mxu0 0.0
  %895 = vmatpush1.msra.mxu0 %v251
  %896 = vmatprep.subr.mxu0 0.0
  %897 = vmatpush1.msra.mxu0 %v252
  %898 = vmatprep.subr.mxu0 0.0
  %899 = vmatpush1.msra.mxu0 %v253
  %900 = vmatprep.subr.mxu0 0.0
  %901 = vmatpush1.msra.mxu0 %v254
  %902 = vmatprep.subr.mxu0 0.0
  %903 = vmatpush1.msra.mxu0 %v255
  %904 = vmatprep.subr.mxu0 0.0
  %905 = vmatpush1.msra.mxu0 %v256
  %906 = vmatprep.subr.mxu0 0.0
  %907 = vmatpush1.msra.mxu0 %v257
  %908 = vmatprep.subr.mxu0 0.0
  %909 = vmatpush1.msra.mxu0 %v258
  %910 = vmatprep.subr.mxu0 0.0
  %911 = vmatpush1.msra.mxu0 %v259
  %912 = vmatprep.subr.mxu0 0.0
  %913 = vmatpush1.msra.mxu0 %v260
  %914 = vmatprep.subr.mxu0 0.0
  %915 = vmatpush1.msra.mxu0 %v261
  %916 = vmatprep.subr.mxu0 0.0
  %917 = vmatpush1.msra.mxu0 %v262
  %918 = vmatprep.subr.mxu0 0.0
  %919 = vmatpush1.msra.mxu0 %v263
  %920 = vmatprep.subr.mxu0 0.0
  %921 = vmatpush1.msra.mxu0 %v264
  %922 = vmatprep.subr.mxu0 0.0
  %923 = vmatpush1.msra.mxu0 %v265
  %924 = vmatprep.subr.mxu0 0.0
  %925 = vmatpush1.msra.mxu0 %v266
  %926 = vmatprep.subr.mxu0 0.0
  %927 = vmatpush1.msra.mxu0 %v267
  %928 = vmatprep.subr.mxu0 0.0
  %929 = vmatpush1.msra.mxu0 %v268
  %930 = vmatprep.subr.mxu0 0.0
  %931 = vmatpush1.msra.mxu0 %v269
  %932 = vmatprep.subr.mxu0 0.0
  %933 = vmatpush1.msra.mxu0 %v270
  %934 = vmatprep.subr.mxu0 0.0
  %935 = vmatpush1.msra.mxu0 %v271
  %936 = vmatprep.subr.mxu0 0.0
  %937 = vmatpush1.msra.mxu0 %v272
  %938 = vmatprep.subr.mxu0 0.0
  %939 = vmatpush1.msra.mxu0 %v273
  %940 = vmatprep.subr.mxu0 0.0
  %941 = vmatpush1.msra.mxu0 %v274
  %942 = vmatprep.mubr.f32.mxu0 %v39
  %943 = vmatmul.mubr.f32.gmra.mrb[0].mxu0 %v38
  %v944 = vpop.f32.mrb[0].mxu0
  %v945 = vadd.f32 %v875, %v944
  %v946 = vpop.f32.mrb[0].mxu0
  %947 = vdwg.mxu0
  %948 = vmatprep.subr.mxu0 0.0
  %949 = vmatpush1.msra.mxu0 %v275
  %950 = vmatprep.subr.mxu0 0.0
  %951 = vmatpush1.msra.mxu0 %v276
  %952 = vmatprep.subr.mxu0 0.0
  %953 = vmatpush1.msra.mxu0 %v277
  %954 = vmatprep.subr.mxu0 0.0
  %955 = vmatpush1.msra.mxu0 %v278
  %956 = vmatprep.subr.mxu0 0.0
  %957 = vmatpush1.msra.mxu0 %v279
  %958 = vmatprep.subr.mxu0 0.0
  %959 = vmatpush1.msra.mxu0 %v280
  %960 = vmatprep.subr.mxu0 0.0
  %961 = vmatpush1.msra.mxu0 %v281
  %962 = vmatprep.subr.mxu0 0.0
  %963 = vmatpush1.msra.mxu0 %v282
  %964 = vmatprep.subr.mxu0 0.0
  %965 = vmatpush1.msra.mxu0 %v283
  %966 = vmatprep.subr.mxu0 0.0
  %967 = vmatpush1.msra.mxu0 %v284
  %968 = vmatprep.subr.mxu0 0.0
  %969 = vmatpush1.msra.mxu0 %v285
  %970 = vmatprep.subr.mxu0 0.0
  %971 = vmatpush1.msra.mxu0 %v286
  %972 = vmatprep.subr.mxu0 0.0
  %973 = vmatpush1.msra.mxu0 %v287
  %974 = vmatprep.subr.mxu0 0.0
  %975 = vmatpush1.msra.mxu0 %v288
  %976 = vmatprep.subr.mxu0 0.0
  %977 = vmatpush1.msra.mxu0 %v289
  %978 = vmatprep.subr.mxu0 0.0
  %979 = vmatpush1.msra.mxu0 %v290
  %980 = vmatprep.subr.mxu0 0.0
  %981 = vmatpush1.msra.mxu0 %v291
  %982 = vmatprep.subr.mxu0 0.0
  %983 = vmatpush1.msra.mxu0 %v292
  %984 = vmatprep.subr.mxu0 0.0
  %985 = vmatpush1.msra.mxu0 %v293
  %986 = vmatprep.subr.mxu0 0.0
  %987 = vmatpush1.msra.mxu0 %v294
  %988 = vmatprep.subr.mxu0 0.0
  %989 = vmatpush1.msra.mxu0 %v295
  %990 = vmatprep.subr.mxu0 0.0
  %991 = vmatpush1.msra.mxu0 %v296
  %992 = vmatprep.subr.mxu0 0.0
  %993 = vmatpush1.msra.mxu0 %v297
  %994 = vmatprep.subr.mxu0 0.0
  %995 = vmatpush1.msra.mxu0 %v298
  %996 = vmatprep.subr.mxu0 0.0
  %997 = vmatpush1.msra.mxu0 %v299
  %998 = vmatprep.subr.mxu0 0.0
  %999 = vmatpush1.msra.mxu0 %v300
  %1000 = vmatprep.subr.mxu0 0.0
  %1001 = vmatpush1.msra.mxu0 %v301
  %1002 = vmatprep.subr.mxu0 0.0
  %1003 = vmatpush1.msra.mxu0 %v302
  %1004 = vmatprep.subr.mxu0 0.0
  %1005 = vmatpush1.msra.mxu0 %v303
  %1006 = vmatprep.subr.mxu0 0.0
  %1007 = vmatpush1.msra.mxu0 %v304
  %1008 = vmatprep.subr.mxu0 0.0
  %1009 = vmatpush1.msra.mxu0 %v305
  %1010 = vmatprep.subr.mxu0 0.0
  %1011 = vmatpush1.msra.mxu0 %v306
  %1012 = vmatprep.mubr.f32.mxu0 %v41
  %1013 = vmatmul.mubr.f32.gmra.mrb[0].mxu0 %v40
  %v1014 = vpop.f32.mrb[0].mxu0
  %v1015 = vadd.f32 %v945, %v1014
  %v1016 = vpop.f32.mrb[0].mxu0
  %1017 = vdwg.mxu0
  %1018 = vmatprep.subr.mxu0 0.0
  %1019 = vmatpush1.msra.mxu0 %v307
  %1020 = vmatprep.subr.mxu0 0.0
  %1021 = vmatpush1.msra.mxu0 %v308
  %1022 = vmatprep.subr.mxu0 0.0
  %1023 = vmatpush1.msra.mxu0 %v309
  %1024 = vmatprep.subr.mxu0 0.0
  %1025 = vmatpush1.msra.mxu0 %v310
  %1026 = vmatprep.subr.mxu0 0.0
  %1027 = vmatpush1.msra.mxu0 %v311
  %1028 = vmatprep.subr.mxu0 0.0
  %1029 = vmatpush1.msra.mxu0 %v312
  %1030 = vmatprep.subr.mxu0 0.0
  %1031 = vmatpush1.msra.mxu0 %v313
  %1032 = vmatprep.subr.mxu0 0.0
  %1033 = vmatpush1.msra.mxu0 %v314
  %1034 = vmatprep.subr.mxu0 0.0
  %1035 = vmatpush1.msra.mxu0 %v315
  %1036 = vmatprep.subr.mxu0 0.0
  %1037 = vmatpush1.msra.mxu0 %v316
  %1038 = vmatprep.subr.mxu0 0.0
  %1039 = vmatpush1.msra.mxu0 %v317
  %1040 = vmatprep.subr.mxu0 0.0
  %1041 = vmatpush1.msra.mxu0 %v318
  %1042 = vmatprep.subr.mxu0 0.0
  %1043 = vmatpush1.msra.mxu0 %v319
  %1044 = vmatprep.subr.mxu0 0.0
  %1045 = vmatpush1.msra.mxu0 %v320
  %1046 = vmatprep.subr.mxu0 0.0
  %1047 = vmatpush1.msra.mxu0 %v321
  %1048 = vmatprep.subr.mxu0 0.0
  %1049 = vmatpush1.msra.mxu0 %v322
  %1050 = vmatprep.subr.mxu0 0.0
  %1051 = vmatpush1.msra.mxu0 %v323
  %1052 = vmatprep.subr.mxu0 0.0
  %1053 = vmatpush1.msra.mxu0 %v324
  %1054 = vmatprep.subr.mxu0 0.0
  %1055 = vmatpush1.msra.mxu0 %v325
  %1056 = vmatprep.subr.mxu0 0.0
  %1057 = vmatpush1.msra.mxu0 %v326
  %1058 = vmatprep.subr.mxu0 0.0
  %1059 = vmatpush1.msra.mxu0 %v327
  %1060 = vmatprep.subr.mxu0 0.0
  %1061 = vmatpush1.msra.mxu0 %v328
  %1062 = vmatprep.subr.mxu0 0.0
  %1063 = vmatpush1.msra.mxu0 %v329
  %1064 = vmatprep.subr.mxu0 0.0
  %1065 = vmatpush1.msra.mxu0 %v330
  %1066 = vmatprep.subr.mxu0 0.0
  %1067 = vmatpush1.msra.mxu0 %v331
  %1068 = vmatprep.subr.mxu0 0.0
  %1069 = vmatpush1.msra.mxu0 %v332
  %1070 = vmatprep.subr.mxu0 0.0
  %1071 = vmatpush1.msra.mxu0 %v333
  %1072 = vmatprep.subr.mxu0 0.0
  %1073 = vmatpush1.msra.mxu0 %v334
  %1074 = vmatprep.subr.mxu0 0.0
  %1075 = vmatpush1.msra.mxu0 %v335
  %1076 = vmatprep.subr.mxu0 0.0
  %1077 = vmatpush1.msra.mxu0 %v336
  %1078 = vmatprep.subr.mxu0 0.0
  %1079 = vmatpush1.msra.mxu0 %v337
  %1080 = vmatprep.subr.mxu0 0.0
  %1081 = vmatpush1.msra.mxu0 %v338
  %1082 = vmatprep.mubr.f32.mxu0 %v43
  %1083 = vmatmul.mubr.f32.gmra.mrb[0].mxu0 %v42
  %v1084 = vpop.f32.mrb[0].mxu0
  %v1085 = vadd.f32 %v1015, %v1084
  %v1086 = vpop.f32.mrb[0].mxu0
  %1087 = vdwg.mxu0
  %1088 = vmatprep.subr.mxu0 0.0
  %1089 = vmatpush1.msra.mxu0 %v339
  %1090 = vmatprep.subr.mxu0 0.0
  %1091 = vmatpush1.msra.mxu0 %v340
  %1092 = vmatprep.subr.mxu0 0.0
  %1093 = vmatpush1.msra.mxu0 %v341
  %1094 = vmatprep.subr.mxu0 0.0
  %1095 = vmatpush1.msra.mxu0 %v342
  %1096 = vmatprep.subr.mxu0 0.0
  %1097 = vmatpush1.msra.mxu0 %v343
  %1098 = vmatprep.subr.mxu0 0.0
  %1099 = vmatpush1.msra.mxu0 %v344
  %1100 = vmatprep.subr.mxu0 0.0
  %1101 = vmatpush1.msra.mxu0 %v345
  %1102 = vmatprep.subr.mxu0 0.0
  %1103 = vmatpush1.msra.mxu0 %v346
  %1104 = vmatprep.subr.mxu0 0.0
  %1105 = vmatpush1.msra.mxu0 %v347
  %1106 = vmatprep.subr.mxu0 0.0
  %1107 = vmatpush1.msra.mxu0 %v348
  %1108 = vmatprep.subr.mxu0 0.0
  %1109 = vmatpush1.msra.mxu0 %v349
  %1110 = vmatprep.subr.mxu0 0.0
  %1111 = vmatpush1.msra.mxu0 %v350
  %1112 = vmatprep.subr.mxu0 0.0
  %1113 = vmatpush1.msra.mxu0 %v351
  %1114 = vmatprep.subr.mxu0 0.0
  %1115 = vmatpush1.msra.mxu0 %v352
  %1116 = vmatprep.subr.mxu0 0.0
  %1117 = vmatpush1.msra.mxu0 %v353
  %1118 = vmatprep.subr.mxu0 0.0
  %1119 = vmatpush1.msra.mxu0 %v354
  %1120 = vmatprep.subr.mxu0 0.0
  %1121 = vmatpush1.msra.mxu0 %v355
  %1122 = vmatprep.subr.mxu0 0.0
  %1123 = vmatpush1.msra.mxu0 %v356
  %1124 = vmatprep.subr.mxu0 0.0
  %1125 = vmatpush1.msra.mxu0 %v357
  %1126 = vmatprep.subr.mxu0 0.0
  %1127 = vmatpush1.msra.mxu0 %v358
  %1128 = vmatprep.subr.mxu0 0.0
  %1129 = vmatpush1.msra.mxu0 %v359
  %1130 = vmatprep.subr.mxu0 0.0
  %1131 = vmatpush1.msra.mxu0 %v360
  %1132 = vmatprep.subr.mxu0 0.0
  %1133 = vmatpush1.msra.mxu0 %v361
  %1134 = vmatprep.subr.mxu0 0.0
  %1135 = vmatpush1.msra.mxu0 %v362
  %1136 = vmatprep.subr.mxu0 0.0
  %1137 = vmatpush1.msra.mxu0 %v363
  %1138 = vmatprep.subr.mxu0 0.0
  %1139 = vmatpush1.msra.mxu0 %v364
  %1140 = vmatprep.subr.mxu0 0.0
  %1141 = vmatpush1.msra.mxu0 %v365
  %1142 = vmatprep.subr.mxu0 0.0
  %1143 = vmatpush1.msra.mxu0 %v366
  %1144 = vmatprep.subr.mxu0 0.0
  %1145 = vmatpush1.msra.mxu0 %v367
  %1146 = vmatprep.subr.mxu0 0.0
  %1147 = vmatpush1.msra.mxu0 %v368
  %1148 = vmatprep.subr.mxu0 0.0
  %1149 = vmatpush1.msra.mxu0 %v369
  %1150 = vmatprep.subr.mxu0 0.0
  %1151 = vmatpush1.msra.mxu0 %v370
  %1152 = vmatprep.mubr.f32.mxu0 %v45
  %1153 = vmatmul.mubr.f32.gmra.mrb[0].mxu0 %v44
  %v1154 = vpop.f32.mrb[0].mxu0
  %v1155 = vadd.f32 %v1085, %v1154
  %v1156 = vpop.f32.mrb[0].mxu0
  %1157 = vdwg.mxu0
  %1158 = vmatprep.subr.mxu0 0.0
  %1159 = vmatpush1.msra.mxu0 %v371
  %1160 = vmatprep.subr.mxu0 0.0
  %1161 = vmatpush1.msra.mxu0 %v372
  %1162 = vmatprep.subr.mxu0 0.0
  %1163 = vmatpush1.msra.mxu0 %v373
  %1164 = vmatprep.subr.mxu0 0.0
  %1165 = vmatpush1.msra.mxu0 %v374
  %1166 = vmatprep.subr.mxu0 0.0
  %1167 = vmatpush1.msra.mxu0 %v375
  %1168 = vmatprep.subr.mxu0 0.0
  %1169 = vmatpush1.msra.mxu0 %v376
  %1170 = vmatprep.subr.mxu0 0.0
  %1171 = vmatpush1.msra.mxu0 %v377
  %1172 = vmatprep.subr.mxu0 0.0
  %1173 = vmatpush1.msra.mxu0 %v378
  %1174 = vmatprep.subr.mxu0 0.0
  %1175 = vmatpush1.msra.mxu0 %v379
  %1176 = vmatprep.subr.mxu0 0.0
  %1177 = vmatpush1.msra.mxu0 %v380
  %1178 = vmatprep.subr.mxu0 0.0
  %1179 = vmatpush1.msra.mxu0 %v381
  %1180 = vmatprep.subr.mxu0 0.0
  %1181 = vmatpush1.msra.mxu0 %v382
  %1182 = vmatprep.subr.mxu0 0.0
  %1183 = vmatpush1.msra.mxu0 %v383
  %1184 = vmatprep.subr.mxu0 0.0
  %1185 = vmatpush1.msra.mxu0 %v384
  %1186 = vmatprep.subr.mxu0 0.0
  %1187 = vmatpush1.msra.mxu0 %v385
  %1188 = vmatprep.subr.mxu0 0.0
  %1189 = vmatpush1.msra.mxu0 %v386
  %1190 = vmatprep.subr.mxu0 0.0
  %1191 = vmatpush1.msra.mxu0 %v387
  %1192 = vmatprep.subr.mxu0 0.0
  %1193 = vmatpush1.msra.mxu0 %v388
  %1194 = vmatprep.subr.mxu0 0.0
  %1195 = vmatpush1.msra.mxu0 %v389
  %1196 = vmatprep.subr.mxu0 0.0
  %1197 = vmatpush1.msra.mxu0 %v390
  %1198 = vmatprep.subr.mxu0 0.0
  %1199 = vmatpush1.msra.mxu0 %v391
  %1200 = vmatprep.subr.mxu0 0.0
  %1201 = vmatpush1.msra.mxu0 %v392
  %1202 = vmatprep.subr.mxu0 0.0
  %1203 = vmatpush1.msra.mxu0 %v393
  %1204 = vmatprep.subr.mxu0 0.0
  %1205 = vmatpush1.msra.mxu0 %v394
  %1206 = vmatprep.subr.mxu0 0.0
  %1207 = vmatpush1.msra.mxu0 %v395
  %1208 = vmatprep.subr.mxu0 0.0
  %1209 = vmatpush1.msra.mxu0 %v396
  %1210 = vmatprep.subr.mxu0 0.0
  %1211 = vmatpush1.msra.mxu0 %v397
  %1212 = vmatprep.subr.mxu0 0.0
  %1213 = vmatpush1.msra.mxu0 %v398
  %1214 = vmatprep.subr.mxu0 0.0
  %1215 = vmatpush1.msra.mxu0 %v399
  %1216 = vmatprep.subr.mxu0 0.0
  %1217 = vmatpush1.msra.mxu0 %v400
  %1218 = vmatprep.subr.mxu0 0.0
  %1219 = vmatpush1.msra.mxu0 %v401
  %1220 = vmatprep.subr.mxu0 0.0
  %1221 = vmatpush1.msra.mxu0 %v402
  %1222 = vmatprep.mubr.f32.mxu0 %v47
  %1223 = vmatmul.mubr.f32.gmra.mrb[0].mxu0 %v46
  %v1224 = vpop.f32.mrb[0].mxu0
  %v1225 = vadd.f32 %v1155, %v1224
  %v1226 = vpop.f32.mrb[0].mxu0
  %1227 = vdwg.mxu0
  %1228 = vmatprep.subr.mxu0 0.0
  %1229 = vmatpush1.msra.mxu0 %v403
  %1230 = vmatprep.subr.mxu0 0.0
  %1231 = vmatpush1.msra.mxu0 %v404
  %1232 = vmatprep.subr.mxu0 0.0
  %1233 = vmatpush1.msra.mxu0 %v405
  %1234 = vmatprep.subr.mxu0 0.0
  %1235 = vmatpush1.msra.mxu0 %v406
  %1236 = vmatprep.subr.mxu0 0.0
  %1237 = vmatpush1.msra.mxu0 %v407
  %1238 = vmatprep.subr.mxu0 0.0
  %1239 = vmatpush1.msra.mxu0 %v408
  %1240 = vmatprep.subr.mxu0 0.0
  %1241 = vmatpush1.msra.mxu0 %v409
  %1242 = vmatprep.subr.mxu0 0.0
  %1243 = vmatpush1.msra.mxu0 %v410
  %1244 = vmatprep.subr.mxu0 0.0
  %1245 = vmatpush1.msra.mxu0 %v411
  %1246 = vmatprep.subr.mxu0 0.0
  %1247 = vmatpush1.msra.mxu0 %v412
  %1248 = vmatprep.subr.mxu0 0.0
  %1249 = vmatpush1.msra.mxu0 %v413
  %1250 = vmatprep.subr.mxu0 0.0
  %1251 = vmatpush1.msra.mxu0 %v414
  %1252 = vmatprep.subr.mxu0 0.0
  %1253 = vmatpush1.msra.mxu0 %v415
  %1254 = vmatprep.subr.mxu0 0.0
  %1255 = vmatpush1.msra.mxu0 %v416
  %1256 = vmatprep.subr.mxu0 0.0
  %1257 = vmatpush1.msra.mxu0 %v417
  %1258 = vmatprep.subr.mxu0 0.0
  %1259 = vmatpush1.msra.mxu0 %v418
  %1260 = vmatprep.subr.mxu0 0.0
  %1261 = vmatpush1.msra.mxu0 %v419
  %1262 = vmatprep.subr.mxu0 0.0
  %1263 = vmatpush1.msra.mxu0 %v420
  %1264 = vmatprep.subr.mxu0 0.0
  %1265 = vmatpush1.msra.mxu0 %v421
  %1266 = vmatprep.subr.mxu0 0.0
  %1267 = vmatpush1.msra.mxu0 %v422
  %1268 = vmatprep.subr.mxu0 0.0
  %1269 = vmatpush1.msra.mxu0 %v423
  %1270 = vmatprep.subr.mxu0 0.0
  %1271 = vmatpush1.msra.mxu0 %v424
  %1272 = vmatprep.subr.mxu0 0.0
  %1273 = vmatpush1.msra.mxu0 %v425
  %1274 = vmatprep.subr.mxu0 0.0
  %1275 = vmatpush1.msra.mxu0 %v426
  %1276 = vmatprep.subr.mxu0 0.0
  %1277 = vmatpush1.msra.mxu0 %v427
  %1278 = vmatprep.subr.mxu0 0.0
  %1279 = vmatpush1.msra.mxu0 %v428
  %1280 = vmatprep.subr.mxu0 0.0
  %1281 = vmatpush1.msra.mxu0 %v429
  %1282 = vmatprep.subr.mxu0 0.0
  %1283 = vmatpush1.msra.mxu0 %v430
  %1284 = vmatprep.subr.mxu0 0.0
  %1285 = vmatpush1.msra.mxu0 %v431
  %1286 = vmatprep.subr.mxu0 0.0
  %1287 = vmatpush1.msra.mxu0 %v432
  %1288 = vmatprep.subr.mxu0 0.0
  %1289 = vmatpush1.msra.mxu0 %v433
  %1290 = vmatprep.subr.mxu0 0.0
  %1291 = vmatpush1.msra.mxu0 %v434
  %1292 = vmatprep.mubr.f32.mxu0 %v49
  %1293 = vmatmul.mubr.f32.gmra.mrb[0].mxu0 %v48
  %v1294 = vpop.f32.mrb[0].mxu0
  %v1295 = vadd.f32 %v1225, %v1294
  %v1296 = vpop.f32.mrb[0].mxu0
  %1297 = vdwg.mxu0
  %1298 = vmatprep.subr.mxu0 0.0
  %1299 = vmatpush1.msra.mxu0 %v435
  %1300 = vmatprep.subr.mxu0 0.0
  %1301 = vmatpush1.msra.mxu0 %v436
  %1302 = vmatprep.subr.mxu0 0.0
  %1303 = vmatpush1.msra.mxu0 %v437
  %1304 = vmatprep.subr.mxu0 0.0
  %1305 = vmatpush1.msra.mxu0 %v438
  %1306 = vmatprep.subr.mxu0 0.0
  %1307 = vmatpush1.msra.mxu0 %v439
  %1308 = vmatprep.subr.mxu0 0.0
  %1309 = vmatpush1.msra.mxu0 %v440
  %1310 = vmatprep.subr.mxu0 0.0
  %1311 = vmatpush1.msra.mxu0 %v441
  %1312 = vmatprep.subr.mxu0 0.0
  %1313 = vmatpush1.msra.mxu0 %v442
  %1314 = vmatprep.subr.mxu0 0.0
  %1315 = vmatpush1.msra.mxu0 %v443
  %1316 = vmatprep.subr.mxu0 0.0
  %1317 = vmatpush1.msra.mxu0 %v444
  %1318 = vmatprep.subr.mxu0 0.0
  %1319 = vmatpush1.msra.mxu0 %v445
  %1320 = vmatprep.subr.mxu0 0.0
  %1321 = vmatpush1.msra.mxu0 %v446
  %1322 = vmatprep.subr.mxu0 0.0
  %1323 = vmatpush1.msra.mxu0 %v447
  %1324 = vmatprep.subr.mxu0 0.0
  %1325 = vmatpush1.msra.mxu0 %v448
  %1326 = vmatprep.subr.mxu0 0.0
  %1327 = vmatpush1.msra.mxu0 %v449
  %1328 = vmatprep.subr.mxu0 0.0
  %1329 = vmatpush1.msra.mxu0 %v450
  %1330 = vmatprep.subr.mxu0 0.0
  %1331 = vmatpush1.msra.mxu0 0.0
  %1332 = vmatprep.subr.mxu0 0.0
  %1333 = vmatpush1.msra.mxu0 0.0
  %1334 = vmatprep.subr.mxu0 0.0
  %1335 = vmatpush1.msra.mxu0 0.0
  %1336 = vmatprep.subr.mxu0 0.0
  %1337 = vmatpush1.msra.mxu0 0.0
  %1338 = vmatprep.subr.mxu0 0.0
  %1339 = vmatpush1.msra.mxu0 0.0
  %1340 = vmatprep.subr.mxu0 0.0
  %1341 = vmatpush1.msra.mxu0 0.0
  %1342 = vmatprep.subr.mxu0 0.0
  %1343 = vmatpush1.msra.mxu0 0.0
  %1344 = vmatprep.subr.mxu0 0.0
  %1345 = vmatpush1.msra.mxu0 0.0
  %1346 = vmatprep.subr.mxu0 0.0
  %1347 = vmatpush1.msra.mxu0 0.0
  %1348 = vmatprep.subr.mxu0 0.0
  %1349 = vmatpush1.msra.mxu0 0.0
  %1350 = vmatprep.subr.mxu0 0.0
  %1351 = vmatpush1.msra.mxu0 0.0
  %1352 = vmatprep.subr.mxu0 0.0
  %1353 = vmatpush1.msra.mxu0 0.0
  %1354 = vmatprep.subr.mxu0 0.0
  %1355 = vmatpush1.msra.mxu0 0.0
  %1356 = vmatprep.subr.mxu0 0.0
  %1357 = vmatpush1.msra.mxu0 0.0
  %1358 = vmatprep.subr.mxu0 0.0
  %1359 = vmatpush1.msra.mxu0 0.0
  %1360 = vmatprep.subr.mxu0 0.0
  %1361 = vmatpush1.msra.mxu0 0.0
  %1362 = vmatprep.mubr.f32.mxu0 0.0
  %1363 = vmatmul.mubr.f32.gmra.mrb[0].mxu0 %v50
  %v1364 = vpop.f32.mrb[0].mxu0
  %v1365 = vadd.f32 %v1295, %v1364
  %v1366 = vpop.f32.mrb[0].mxu0
  %1367 = vdwg.mxu0
  %v1368 = vmax.f32 %v1365, 0.0
  %v1369 = vld [vmem:[%s3] sm:$0xff]
  %v1370 = vld [vmem:[%s3 + $0x8] sm:$0xff]
  %v1371 = vld [vmem:[%s3 + $0x10] sm:$0xff]
  %v1372 = vld [vmem:[%s3 + $0x18] sm:$0xff]
  %v1373 = vld [vmem:[%s3 + $0x20] sm:$0xff]
  %v1374 = vld [vmem:[%s3 + $0x28] sm:$0xff]
  %v1375 = vld [vmem:[%s3 + $0x30] sm:$0xff]
  %v1376 = vld [vmem:[%s3 + $0x38] sm:$0xff]
  %v1377 = vld [vmem:[%s3 + $0x40] sm:$0xff]
  %v1378 = vld [vmem:[%s3 + $0x48] sm:$0xff]
  %v1379 = vld [vmem:[%s3 + $0x50] sm:$0xff]
  %v1380 = vld [vmem:[%s3 + $0x58] sm:$0xff]
  %v1381 = vld [vmem:[%s3 + $0x60] sm:$0xff]
  %v1382 = vld [vmem:[%s3 + $0x68] sm:$0xff]
  %v1383 = vld [vmem:[%s3 + $0x70] sm:$0xff]
  %v1384 = vld [vmem:[%s3 + $0x78] sm:$0xff]
  %v1385 = vld [vmem:[%s4] sm:$0x1]
  %v1387 = vlaneseq
  %v1388 = vshrl.u32 %v1387, 7
  %v1389 = vsub.s32 0, %v1388
  %v1390 = vrot.slane %v1385, %v1389
  %1392 = vmatprep.subr.mxu0 0.0
  %1393 = vmatpush1.msra.mxu0 %v1369
  %1394 = vmatprep.subr.mxu0 0.0
  %1395 = vmatpush1.msra.mxu0 %v1370
  %1396 = vmatprep.subr.mxu0 0.0
  %1397 = vmatpush1.msra.mxu0 %v1371
  %1398 = vmatprep.subr.mxu0 0.0
  %1399 = vmatpush1.msra.mxu0 %v1372
  %1400 = vmatprep.subr.mxu0 0.0
  %1401 = vmatpush1.msra.mxu0 %v1373
  %1402 = vmatprep.subr.mxu0 0.0
  %1403 = vmatpush1.msra.mxu0 %v1374
  %1404 = vmatprep.subr.mxu0 0.0
  %1405 = vmatpush1.msra.mxu0 %v1375
  %1406 = vmatprep.subr.mxu0 0.0
  %1407 = vmatpush1.msra.mxu0 %v1376
  %1408 = vmatprep.subr.mxu0 0.0
  %1409 = vmatpush1.msra.mxu0 %v1377
  %1410 = vmatprep.subr.mxu0 0.0
  %1411 = vmatpush1.msra.mxu0 %v1378
  %1412 = vmatprep.subr.mxu0 0.0
  %1413 = vmatpush1.msra.mxu0 %v1379
  %1414 = vmatprep.subr.mxu0 0.0
  %1415 = vmatpush1.msra.mxu0 %v1380
  %1416 = vmatprep.subr.mxu0 0.0
  %1417 = vmatpush1.msra.mxu0 %v1381
  %1418 = vmatprep.subr.mxu0 0.0
  %1419 = vmatpush1.msra.mxu0 %v1382
  %1420 = vmatprep.subr.mxu0 0.0
  %1421 = vmatpush1.msra.mxu0 %v1383
  %1422 = vmatprep.subr.mxu0 0.0
  %1423 = vmatpush1.msra.mxu0 %v1384
  %1424 = vmatprep.subr.mxu0 0.0
  %1425 = vmatpush1.msra.mxu0 0.0
  %1426 = vmatprep.subr.mxu0 0.0
  %1427 = vmatpush1.msra.mxu0 0.0
  %1428 = vmatprep.subr.mxu0 0.0
  %1429 = vmatpush1.msra.mxu0 0.0
  %1430 = vmatprep.subr.mxu0 0.0
  %1431 = vmatpush1.msra.mxu0 0.0
  %1432 = vmatprep.subr.mxu0 0.0
  %1433 = vmatpush1.msra.mxu0 0.0
  %1434 = vmatprep.subr.mxu0 0.0
  %1435 = vmatpush1.msra.mxu0 0.0
  %1436 = vmatprep.subr.mxu0 0.0
  %1437 = vmatpush1.msra.mxu0 0.0
  %1438 = vmatprep.subr.mxu0 0.0
  %1439 = vmatpush1.msra.mxu0 0.0
  %1440 = vmatprep.subr.mxu0 0.0
  %1441 = vmatpush1.msra.mxu0 0.0
  %1442 = vmatprep.subr.mxu0 0.0
  %1443 = vmatpush1.msra.mxu0 0.0
  %1444 = vmatprep.subr.mxu0 0.0
  %1445 = vmatpush1.msra.mxu0 0.0
  %1446 = vmatprep.subr.mxu0 0.0
  %1447 = vmatpush1.msra.mxu0 0.0
  %1448 = vmatprep.subr.mxu0 0.0
  %1449 = vmatpush1.msra.mxu0 0.0
  %1450 = vmatprep.subr.mxu0 0.0
  %1451 = vmatpush1.msra.mxu0 0.0
  %1452 = vmatprep.subr.mxu0 0.0
  %1453 = vmatpush1.msra.mxu0 0.0
  %1454 = vmatprep.subr.mxu0 0.0
  %1455 = vmatpush1.msra.mxu0 0.0
  %1456 = vmatprep.mubr.f32.mxu0 0.0
  %1457 = vmatmul.mubr.f32.gmra.mrb[0].mxu0 %v1368
  %v1458 = vpop.f32.mrb[0].mxu0
  %v1459 = vadd.f32 %v1390, %v1458
  %v1460 = vpop.f32.mrb[0].mxu0
  %1461 = vdwg.mxu0
  %v1462 = vmax.f32 %v1459, 0.0
  %v1463 = vld [vmem:[%s5] sm:$0xff]
  %v1464 = vld [vmem:[%s5 + $0x8] sm:$0xff]
  %v1465 = vld [vmem:[%s5 + $0x10] sm:$0xff]
  %v1466 = vld [vmem:[%s5 + $0x18] sm:$0xff]
  %v1467 = vld [vmem:[%s5 + $0x20] sm:$0xff]
  %v1468 = vld [vmem:[%s5 + $0x28] sm:$0xff]
  %v1469 = vld [vmem:[%s5 + $0x30] sm:$0xff]
  %v1470 = vld [vmem:[%s5 + $0x38] sm:$0xff]
  %v1471 = vld [vmem:[%s5 + $0x40] sm:$0xff]
  %v1472 = vld [vmem:[%s5 + $0x48] sm:$0xff]
  %v1473 = vld [vmem:[%s5 + $0x50] sm:$0xff]
  %v1474 = vld [vmem:[%s5 + $0x58] sm:$0xff]
  %v1475 = vld [vmem:[%s5 + $0x60] sm:$0xff]
  %v1476 = vld [vmem:[%s5 + $0x68] sm:$0xff]
  %v1477 = vld [vmem:[%s5 + $0x70] sm:$0xff]
  %v1478 = vld [vmem:[%s5 + $0x78] sm:$0xff]
  %v1479 = vld [vmem:[%s6] sm:$0x1]
  %v1481 = vlaneseq
  %v1482 = vshrl.u32 %v1481, 7
  %v1483 = vsub.s32 0, %v1482
  %v1484 = vrot.slane %v1479, %v1483
  %1486 = vmatprep.subr.mxu0 0.0
  %1487 = vmatpush1.msra.mxu0 %v1463
  %1488 = vmatprep.subr.mxu0 0.0
  %1489 = vmatpush1.msra.mxu0 %v1464
  %1490 = vmatprep.subr.mxu0 0.0
  %1491 = vmatpush1.msra.mxu0 %v1465
  %1492 = vmatprep.subr.mxu0 0.0
  %1493 = vmatpush1.msra.mxu0 %v1466
  %1494 = vmatprep.subr.mxu0 0.0
  %1495 = vmatpush1.msra.mxu0 %v1467
  %1496 = vmatprep.subr.mxu0 0.0
  %1497 = vmatpush1.msra.mxu0 %v1468
  %1498 = vmatprep.subr.mxu0 0.0
  %1499 = vmatpush1.msra.mxu0 %v1469
  %1500 = vmatprep.subr.mxu0 0.0
  %1501 = vmatpush1.msra.mxu0 %v1470
  %1502 = vmatprep.subr.mxu0 0.0
  %1503 = vmatpush1.msra.mxu0 %v1471
  %1504 = vmatprep.subr.mxu0 0.0
  %1505 = vmatpush1.msra.mxu0 %v1472
  %1506 = vmatprep.subr.mxu0 0.0
  %1507 = vmatpush1.msra.mxu0 %v1473
  %1508 = vmatprep.subr.mxu0 0.0
  %1509 = vmatpush1.msra.mxu0 %v1474
  %1510 = vmatprep.subr.mxu0 0.0
  %1511 = vmatpush1.msra.mxu0 %v1475
  %1512 = vmatprep.subr.mxu0 0.0
  %1513 = vmatpush1.msra.mxu0 %v1476
  %1514 = vmatprep.subr.mxu0 0.0
  %1515 = vmatpush1.msra.mxu0 %v1477
  %1516 = vmatprep.subr.mxu0 0.0
  %1517 = vmatpush1.msra.mxu0 %v1478
  %1518 = vmatprep.subr.mxu0 0.0
  %1519 = vmatpush1.msra.mxu0 0.0
  %1520 = vmatprep.subr.mxu0 0.0
  %1521 = vmatpush1.msra.mxu0 0.0
  %1522 = vmatprep.subr.mxu0 0.0
  %1523 = vmatpush1.msra.mxu0 0.0
  %1524 = vmatprep.subr.mxu0 0.0
  %1525 = vmatpush1.msra.mxu0 0.0
  %1526 = vmatprep.subr.mxu0 0.0
  %1527 = vmatpush1.msra.mxu0 0.0
  %1528 = vmatprep.subr.mxu0 0.0
  %1529 = vmatpush1.msra.mxu0 0.0
  %1530 = vmatprep.subr.mxu0 0.0
  %1531 = vmatpush1.msra.mxu0 0.0
  %1532 = vmatprep.subr.mxu0 0.0
  %1533 = vmatpush1.msra.mxu0 0.0
  %1534 = vmatprep.subr.mxu0 0.0
  %1535 = vmatpush1.msra.mxu0 0.0
  %1536 = vmatprep.subr.mxu0 0.0
  %1537 = vmatpush1.msra.mxu0 0.0
  %1538 = vmatprep.subr.mxu0 0.0
  %1539 = vmatpush1.msra.mxu0 0.0
  %1540 = vmatprep.subr.mxu0 0.0
  %1541 = vmatpush1.msra.mxu0 0.0
  %1542 = vmatprep.subr.mxu0 0.0
  %1543 = vmatpush1.msra.mxu0 0.0
  %1544 = vmatprep.subr.mxu0 0.0
  %1545 = vmatpush1.msra.mxu0 0.0
  %1546 = vmatprep.subr.mxu0 0.0
  %1547 = vmatpush1.msra.mxu0 0.0
  %1548 = vmatprep.subr.mxu0 0.0
  %1549 = vmatpush1.msra.mxu0 0.0
  %1550 = vmatprep.mubr.f32.mxu0 0.0
  %1551 = vmatmul.mubr.f32.gmra.mrb[0].mxu0 %v1462
  %v1552 = vpop.f32.mrb[0].mxu0
  %v1553 = vadd.f32 %v1484, %v1552
  %v1554 = vpop.f32.mrb[0].mxu0
  %1555 = vdwg.mxu0
  %1556 = vst [vmem:[%s7] sm:$0xff] %v1553
  // Predicated region
  $region30: #{cnn_old_forward.5} parent=0 // pred_check
    _
  $region31: #{cnn_old_forward.5} parent=0 // pred_check_branch
    %1558 = sbr.rel (0) target = $region33
  $region32: #{cnn_old_forward.5} parent=0 // pred_region
    _
  $region33: #{cnn_old_forward.5} parent=0 // pred_fallthru
    _
  // Predicated region
  $region34: #{cnn_old_forward.5} parent=0 // pred_check
    _
  $region35: #{cnn_old_forward.5} parent=0 // pred_check_branch
    %1560 = sbr.rel (0) target = $region37
  $region36: #{cnn_old_forward.5} parent=0 // pred_region
    _
  $region37: #{cnn_old_forward.5} parent=0 // pred_fallthru
    _

</llo_original>
